<compile_context>
chip_gen: v7x
topology: tpu7x:2x2x1
jax: 0.10.0
libtpu: 0.0.40
codegen_flags: <defaults>
</compile_context>

<pallas_src>
import functools

import jax
import jax.numpy as jnp
from jax.experimental import pallas as pl
from jax.experimental.pallas import tpu as pltpu


# ---------------------------------------------------------------------------
# Fused bottleneck-Block kernel
# ---------------------------------------------------------------------------
def _block_kernel(*refs, H, W, Wo, TH, stride, dilation, has_skip):
    if has_skip:
        (x_ref, w1_ref, b1_ref, w2_ref, b2_ref, w3_ref, b3_ref,
         ws_ref, bs_ref, o_ref, h1pad_ref) = refs
    else:
        (x_ref, w1_ref, b1_ref, w2_ref, b2_ref, w3_ref, b3_ref,
         o_ref, h1pad_ref) = refs
        ws_ref = bs_ref = None

    r = pl.program_id(1)
    pad = dilation
    cin = x_ref.shape[-1]
    cmid = w1_ref.shape[-1]
    cout = w3_ref.shape[-1]
    cdt = x_ref.dtype  # compute/storage dtype for activations (f32 or bf16)

    # -- conv1 (1x1) + bn1 + relu for the whole image, once per image, written
    #    into a zero-padded VMEM scratch (no HBM round-trip, no jnp.pad pass).
    @pl.when(r == 0)
    def _():
        h1pad_ref[...] = jnp.zeros_like(h1pad_ref)
        hc_step = max(1, min(H, 512 // max(1, W)))
        for h0 in range(0, H, hc_step):
            hc = min(hc_step, H - h0)
            rows = x_ref[h0:h0 + hc]                              # (hc, W, cin)
            acc1 = jnp.dot(rows.reshape(hc * W, cin), w1_ref[...],
                           preferred_element_type=jnp.float32)
            h1 = jnp.maximum(acc1 + b1_ref[...], 0.0)
            h1pad_ref[pad + h0:pad + h0 + hc, pad:pad + W, :] = (
                h1.reshape(hc, W, cmid).astype(h1pad_ref.dtype))

    # -- conv2 (3x3, stride/dilation, padding=dilation) + bn2 + relu for this
    #    row tile of output.  Accumulator is only (TH*Wo, cmid).
    span_h = (TH - 1) * stride + 1
    span_w = (Wo - 1) * stride + 1
    row0 = r * (TH * stride)          # padded-row index of the first tap row
    acc = jnp.zeros((TH * Wo, cmid), jnp.float32)
    for kh in range(3):
        slab = h1pad_ref[pl.ds(row0 + kh * dilation, span_h), :, :]
        for kw in range(3):
            tap = jax.lax.slice(
                slab, (0, kw * dilation, 0),
                (span_h, kw * dilation + span_w, cmid),
                (stride, stride, 1))                              # (TH, Wo, cmid)
            acc = acc + jnp.dot(tap.reshape(TH * Wo, cmid), w2_ref[kh, kw],
                                preferred_element_type=jnp.float32)
    h2 = jnp.maximum(acc + b2_ref[...], 0.0)                      # (TH*Wo, cmid)

    # -- conv3 (1x1) + bn3.
    h3 = jnp.dot(h2.astype(cdt), w3_ref[...],
                 preferred_element_type=jnp.float32) + b3_ref[...]

    # -- skip branch, read directly from the resident x block (no extra pass).
    if has_skip:
        xr = x_ref[pl.ds(row0, span_h)]                           # (span_h, W, cin)
        xs = jax.lax.slice(xr, (0, 0, 0), (span_h, span_w, cin),
                           (stride, stride, 1))                   # (TH, Wo, cin)
        res = jnp.dot(xs.reshape(TH * Wo, cin), ws_ref[...],
                      preferred_element_type=jnp.float32) + bs_ref[...]
    else:
        # stride == 1 and cin == cout in this case.
        res = x_ref[pl.ds(r * TH, TH)].reshape(TH * Wo, cout).astype(jnp.float32)

    out = jnp.maximum(h3 + res, 0.0)
    o_ref[...] = out.reshape(TH, Wo, cout).astype(o_ref.dtype)


def _largest_divisor_leq(n, cap):
    cap = max(1, min(n, cap))
    for t in range(cap, 0, -1):
        if n % t == 0:
            return t
    return 1


def block_forward(x, p, stride, dilation):
    """One fused bottleneck Block: relu(bn3(conv3(relu(bn2(conv2(relu(bn1(conv1(x)))))))) + skip(x))."""
    N, H, W, cin = x.shape
    cmid = p['w1'].shape[1]
    cout = p['w3'].shape[1]
    pad = dilation
    Ho = (H + 2 * pad - 2 * dilation - 1) // stride + 1
    Wo = (W + 2 * pad - 2 * dilation - 1) // stride + 1
    TH = _largest_divisor_leq(Ho, max(1, 128 // max(1, Wo)))  # ~128 px per tile
    R = Ho // TH
    cdt = x.dtype
    has_skip = p['has_skip']

    # Fold BN scale into the conv weights at trace time (bias-only epilogue).
    w1 = (p['w1'] * p['s1'][None, :]).astype(cdt)
    w2 = (p['w2'] * p['s2'][None, None, None, :]).astype(cdt)
    w3 = (p['w3'] * p['s3'][None, :]).astype(cdt)
    b1 = p['b1'].reshape(1, cmid).astype(jnp.float32)
    b2 = p['b2'].reshape(1, cmid).astype(jnp.float32)
    b3 = p['b3'].reshape(1, cout).astype(jnp.float32)

    inputs = [x, w1, b1, w2, b2, w3, b3]
    in_specs = [
        pl.BlockSpec((None, H, W, cin), lambda n, r: (n, 0, 0, 0)),   # whole image, resident across r
        pl.BlockSpec((cin, cmid), lambda n, r: (0, 0)),
        pl.BlockSpec((1, cmid), lambda n, r: (0, 0)),
        pl.BlockSpec((3, 3, cmid, cmid), lambda n, r: (0, 0, 0, 0)),
        pl.BlockSpec((1, cmid), lambda n, r: (0, 0)),
        pl.BlockSpec((cmid, cout), lambda n, r: (0, 0)),
        pl.BlockSpec((1, cout), lambda n, r: (0, 0)),
    ]
    if has_skip:
        ws = (p['ws'] * p['ss'][None, :]).astype(cdt)
        bs = p['bs'].reshape(1, cout).astype(jnp.float32)
        inputs += [ws, bs]
        in_specs += [
            pl.BlockSpec((cin, cout), lambda n, r: (0, 0)),
            pl.BlockSpec((1, cout), lambda n, r: (0, 0)),
        ]

    kernel = functools.partial(
        _block_kernel, H=H, W=W, Wo=Wo, TH=TH,
        stride=stride, dilation=dilation, has_skip=has_skip)

    return pl.pallas_call(
        kernel,
        out_shape=jax.ShapeDtypeStruct((N, Ho, Wo, cout), cdt),
        grid=(N, R),
        in_specs=in_specs,
        out_specs=pl.BlockSpec((None, TH, Wo, cout), lambda n, r: (n, r, 0, 0)),
        scratch_shapes=[pltpu.VMEM((H + 2 * pad, W + 2 * pad, cmid), cdt)],
        compiler_params=pltpu.CompilerParams(
            dimension_semantics=("parallel", "arbitrary"),
            vmem_limit_bytes=48 * 1024 * 1024),
    )(*inputs)


def block_group_forward(x, params, stride, dilation):
    for i, p in enumerate(params):
        s = stride if i == 0 else 1
        x = block_forward(x, p, s, dilation)
    return x


# ---------------------------------------------------------------------------
# Parameters (deterministic, synthetic) and BN folding
# ---------------------------------------------------------------------------
def fold_bn(gamma, beta, mean, var, eps=1e-5):
    scale = gamma / jnp.sqrt(var + eps)
    bias = beta - mean * scale
    return scale, bias


def init_block_params(key, cin, cmid, stride):
    cout = cmid * 4  # Block.CHANNEL_EXPANSION
    keys = jax.random.split(key, 8)

    def conv_w(k, fan_in, shape):
        return jax.random.normal(k, shape, jnp.float32) * (2.0 / fan_in) ** 0.5

    def bn(k, c):
        k1, k2, k3, k4 = jax.random.split(k, 4)
        gamma = 1.0 + 0.1 * jax.random.normal(k1, (c,), jnp.float32)
        beta = 0.1 * jax.random.normal(k2, (c,), jnp.float32)
        mean = 0.1 * jax.random.normal(k3, (c,), jnp.float32)
        var = 1.0 + 0.5 * jax.random.uniform(k4, (c,), jnp.float32)
        return fold_bn(gamma, beta, mean, var)

    p = {}
    p['w1'] = conv_w(keys[0], cin, (cin, cmid))                 # 1x1
    p['s1'], p['b1'] = bn(keys[1], cmid)
    p['w2'] = conv_w(keys[2], cmid * 9, (3, 3, cmid, cmid))     # 3x3 (HWIO)
    p['s2'], p['b2'] = bn(keys[3], cmid)
    p['w3'] = conv_w(keys[4], cmid, (cmid, cout))               # 1x1
    p['s3'], p['b3'] = bn(keys[5], cout)
    p['has_skip'] = (stride != 1 or cin != cout)
    if p['has_skip']:
        p['ws'] = conv_w(keys[6], cin, (cin, cout))
        p['ss'], p['bs'] = bn(keys[7], cout)
    return p


# ---------------------------------------------------------------------------
# Pure-JAX reference
# ---------------------------------------------------------------------------
def _conv_nhwc(x, w, stride=1, padding='VALID', dilation=1):
    return jax.lax.conv_general_dilated(
        x, w, window_strides=(stride, stride), padding=padding,
        rhs_dilation=(dilation, dilation),
        dimension_numbers=('NHWC', 'HWIO', 'NHWC'))


def block_forward_ref(x, p, stride, dilation):
    cin, cmid = p['w1'].shape
    h = _conv_nhwc(x, p['w1'].reshape(1, 1, cin, cmid))
    h = jnp.maximum(h * p['s1'] + p['b1'], 0.0)
    pad = dilation
    h = _conv_nhwc(h, p['w2'], stride=stride,
                   padding=[(pad, pad), (pad, pad)], dilation=dilation)
    h = jnp.maximum(h * p['s2'] + p['b2'], 0.0)
    cout = p['w3'].shape[1]
    h = _conv_nhwc(h, p['w3'].reshape(1, 1, cmid, cout))
    h = h * p['s3'] + p['b3']
    if p['has_skip']:
        r = _conv_nhwc(x, p['ws'].reshape(1, 1, cin, cout), stride=stride)
        r = r * p['ss'] + p['bs']
    else:
        r = x
    return jnp.maximum(h + r, 0.0)


def block_group_forward_ref(x, params, stride, dilation):
    for i, p in enumerate(params):
        s = stride if i == 0 else 1
        x = block_forward_ref(x, p, s, dilation)
    return x


# ---------------------------------------------------------------------------
if __name__ == "__main__":
    # BlockGroup(input_channels=4, output_channels=4, layers=2, stride=1, dilation=1)
    N, CIN, H, W = 2, 4, 16, 16
    CMID, LAYERS, STRIDE, DILATION = 4, 2, 1, 1

    key = jax.random.PRNGKey(0)
    k_x, k_p, k_p2 = jax.random.split(key, 3)
    x_nchw = jax.random.normal(k_x, (N, CIN, H, W), jnp.float32)   # PyTorch NCHW input
    x = jnp.transpose(x_nchw, (0, 2, 3, 1))                        # NHWC inside

    params = []
    pkeys = jax.random.split(k_p, LAYERS)
    cin = CIN
    for i in range(LAYERS):
        params.append(init_block_params(pkeys[i], cin, CMID,
                                        stride=(STRIDE if i == 0 else 1)))
        cin = CMID * 4

    out = jax.block_until_ready(block_group_forward(x, params, STRIDE, DILATION))
    ref = jax.block_until_ready(block_group_forward_ref(x, params, STRIDE, DILATION))
    assert out.shape == ref.shape, (out.shape, ref.shape)
    assert jnp.all(jnp.isfinite(out))
    assert jnp.allclose(out, ref, rtol=2e-2, atol=2e-2), \
        float(jnp.max(jnp.abs(out - ref)))

    # Extra coverage: dilation=2 (padding=2) single-block group with a skip branch.
    params_d2 = [init_block_params(k_p2, CIN, CMID, stride=1)]
    out2 = jax.block_until_ready(block_group_forward(x, params_d2, 1, 2))
    ref2 = jax.block_until_ready(block_group_forward_ref(x, params_d2, 1, 2))
    assert out2.shape == ref2.shape, (out2.shape, ref2.shape)
    assert jnp.allclose(out2, ref2, rtol=2e-2, atol=2e-2), \
        float(jnp.max(jnp.abs(out2 - ref2)))

    print("KERNEL_OK")
</pallas_src>

<mosaic_0001>
module attributes {stable_mosaic.version = 11 : i64} {
  func.func @_block_kernel(%arg0: i32, %arg1: i32, %arg2: memref<1x16x16x4xf32, #tpu.memory_space<vmem>>, %arg3: memref<4x4xf32, #tpu.memory_space<vmem>>, %arg4: memref<1x4xf32, #tpu.memory_space<vmem>>, %arg5: memref<3x3x4x4xf32, #tpu.memory_space<vmem>>, %arg6: memref<1x4xf32, #tpu.memory_space<vmem>>, %arg7: memref<4x16xf32, #tpu.memory_space<vmem>>, %arg8: memref<1x16xf32, #tpu.memory_space<vmem>>, %arg9: memref<4x16xf32, #tpu.memory_space<vmem>>, %arg10: memref<1x16xf32, #tpu.memory_space<vmem>>, %arg11: memref<1x8x16x16xf32, #tpu.memory_space<vmem>>, %arg12: memref<18x18x4xf32, #tpu.memory_space<vmem>>) attributes {dimension_semantics = [#tpu.dimension_semantics<parallel>, #tpu.dimension_semantics<arbitrary>], iteration_bounds = array<i64: 2, 2>, scalar_prefetch = 0 : i64, scratch_operands = 1 : i64, tpu.core_type = #tpu.core_type<tc>, window_params = [{transform_indices = @transform_0, window_bounds = array<i64: 1, 16, 16, 4>}, {pipeline_mode = #tpu.pipeline_mode<synchronous>, transform_indices = @transform_1, window_bounds = array<i64: 4, 4>}, {pipeline_mode = #tpu.pipeline_mode<synchronous>, transform_indices = @transform_2, window_bounds = array<i64: 1, 4>}, {pipeline_mode = #tpu.pipeline_mode<synchronous>, transform_indices = @transform_3, window_bounds = array<i64: 3, 3, 4, 4>}, {pipeline_mode = #tpu.pipeline_mode<synchronous>, transform_indices = @transform_4, window_bounds = array<i64: 1, 4>}, {pipeline_mode = #tpu.pipeline_mode<synchronous>, transform_indices = @transform_5, window_bounds = array<i64: 4, 16>}, {pipeline_mode = #tpu.pipeline_mode<synchronous>, transform_indices = @transform_6, window_bounds = array<i64: 1, 16>}, {pipeline_mode = #tpu.pipeline_mode<synchronous>, transform_indices = @transform_7, window_bounds = array<i64: 4, 16>}, {pipeline_mode = #tpu.pipeline_mode<synchronous>, transform_indices = @transform_8, window_bounds = array<i64: 1, 16>}, {transform_indices = @transform_9, window_bounds = array<i64: 1, 8, 16, 16>}]} {
    %c0_i32 = arith.constant 0 : i32
    %0 = arith.cmpi eq, %arg1, %c0_i32 : i32
    %1 = arith.extui %0 : i1 to i32
    %c0_i32_0 = arith.constant 0 : i32
    %2 = arith.cmpi ne, %1, %c0_i32_0 : i32
    scf.if %2 {
      %cst_71 = arith.constant 0.000000e+00 : f32
      %95 = vector.broadcast %cst_71 : f32 to vector<18x18x4xf32>
      %c0_72 = arith.constant 0 : index
      %c0_73 = arith.constant 0 : index
      %c0_74 = arith.constant 0 : index
      %96 = vector.load %arg12[%c0_72, %c0_73, %c0_74] : memref<18x18x4xf32, #tpu.memory_space<vmem>>, vector<18x18x4xf32>
      tpu.vector_store %arg12[%c0_72, %c0_73, %c0_74], %95 {strides = array<i32>} : memref<18x18x4xf32, #tpu.memory_space<vmem>>, vector<18x18x4xf32>,
      %c0_75 = arith.constant 0 : index
      %c0_76 = arith.constant 0 : index
      %c0_77 = arith.constant 0 : index
      %c0_78 = arith.constant 0 : index
      %97 = vector.load %arg2[%c0_75, %c0_76, %c0_77, %c0_78] : memref<1x16x16x4xf32, #tpu.memory_space<vmem>>, vector<1x16x16x4xf32>
      %98 = vector.shape_cast %97 : vector<1x16x16x4xf32> to vector<16x16x4xf32>
      %99 = vector.shape_cast %98 : vector<16x16x4xf32> to vector<256x4xf32>
      %c0_79 = arith.constant 0 : index
      %c0_80 = arith.constant 0 : index
      %100 = vector.load %arg3[%c0_79, %c0_80] : memref<4x4xf32, #tpu.memory_space<vmem>>, vector<4x4xf32>
      %cst_81 = arith.constant dense<0.000000e+00> : vector<256x4xf32>
      %101 = tpu.matmul %99, %100, %cst_81 {dimension_numbers = #tpu.dot_dimension_numbers<[1], [0], [0], [1], [0, 0, 1, 1], [], []>} : vector<256x4xf32>, vector<4x4xf32>, vector<256x4xf32> -> vector<256x4xf32>
      %c0_82 = arith.constant 0 : index
      %c0_83 = arith.constant 0 : index
      %102 = vector.load %arg4[%c0_82, %c0_83] : memref<1x4xf32, #tpu.memory_space<vmem>>, vector<1x4xf32>
      %103 = vector.broadcast %102 : vector<1x4xf32> to vector<256x4xf32>
      %104 = arith.addf %101, %103 : vector<256x4xf32>
      %cst_84 = arith.constant 0.000000e+00 : f32
      %105 = vector.broadcast %cst_84 : f32 to vector<256x4xf32>
      %106 = arith.maximumf %104, %105 : vector<256x4xf32>
      %107 = vector.shape_cast %106 : vector<256x4xf32> to vector<16x16x4xf32>
      %c1_85 = arith.constant 1 : index
      %c1_86 = arith.constant 1 : index
      %c0_87 = arith.constant 0 : index
      %108 = vector.load %arg12[%c1_85, %c1_86, %c0_87] : memref<18x18x4xf32, #tpu.memory_space<vmem>>, vector<16x16x4xf32>
      tpu.vector_store %arg12[%c1_85, %c1_86, %c0_87], %107 {strides = array<i32>} : memref<18x18x4xf32, #tpu.memory_space<vmem>>, vector<16x16x4xf32>,
    } else {
    }
    %c8_i32 = arith.constant 8 : i32
    %3 = arith.muli %arg1, %c8_i32 : i32
    %cst = arith.constant 0.000000e+00 : f32
    %4 = vector.broadcast %cst : f32 to vector<128x4xf32>
    %c0_i32_1 = arith.constant 0 : i32
    %5 = arith.addi %3, %c0_i32_1 : i32
    %6 = arith.index_cast %5 : i32 to index
    %c0 = arith.constant 0 : index
    %c0_2 = arith.constant 0 : index
    %7 = vector.load %arg12[%6, %c0, %c0_2] : memref<18x18x4xf32, #tpu.memory_space<vmem>>, vector<8x18x4xf32>
    %8 = vector.extract_strided_slice %7 {offsets = [0, 0, 0], sizes = [8, 16, 4], strides = [1, 1, 1]} : vector<8x18x4xf32> to vector<8x16x4xf32>
    %9 = vector.shape_cast %8 : vector<8x16x4xf32> to vector<128x4xf32>
    %c0_3 = arith.constant 0 : index
    %c0_4 = arith.constant 0 : index
    %c0_5 = arith.constant 0 : index
    %c0_6 = arith.constant 0 : index
    %10 = vector.load %arg5[%c0_3, %c0_4, %c0_5, %c0_6] : memref<3x3x4x4xf32, #tpu.memory_space<vmem>>, vector<1x1x4x4xf32>
    %11 = vector.shape_cast %10 : vector<1x1x4x4xf32> to vector<4x4xf32>
    %cst_7 = arith.constant dense<0.000000e+00> : vector<128x4xf32>
    %12 = tpu.matmul %9, %11, %cst_7 {dimension_numbers = #tpu.dot_dimension_numbers<[1], [0], [0], [1], [0, 0, 1, 1], [], []>} : vector<128x4xf32>, vector<4x4xf32>, vector<128x4xf32> -> vector<128x4xf32>
    %13 = arith.addf %4, %12 : vector<128x4xf32>
    %14 = vector.extract_strided_slice %7 {offsets = [0, 1, 0], sizes = [8, 16, 4], strides = [1, 1, 1]} : vector<8x18x4xf32> to vector<8x16x4xf32>
    %15 = vector.shape_cast %14 : vector<8x16x4xf32> to vector<128x4xf32>
    %c0_8 = arith.constant 0 : index
    %c1 = arith.constant 1 : index
    %c0_9 = arith.constant 0 : index
    %c0_10 = arith.constant 0 : index
    %16 = vector.load %arg5[%c0_8, %c1, %c0_9, %c0_10] : memref<3x3x4x4xf32, #tpu.memory_space<vmem>>, vector<1x1x4x4xf32>
    %17 = vector.shape_cast %16 : vector<1x1x4x4xf32> to vector<4x4xf32>
    %cst_11 = arith.constant dense<0.000000e+00> : vector<128x4xf32>
    %18 = tpu.matmul %15, %17, %cst_11 {dimension_numbers = #tpu.dot_dimension_numbers<[1], [0], [0], [1], [0, 0, 1, 1], [], []>} : vector<128x4xf32>, vector<4x4xf32>, vector<128x4xf32> -> vector<128x4xf32>
    %19 = arith.addf %13, %18 : vector<128x4xf32>
    %20 = vector.extract_strided_slice %7 {offsets = [0, 2, 0], sizes = [8, 16, 4], strides = [1, 1, 1]} : vector<8x18x4xf32> to vector<8x16x4xf32>
    %21 = vector.shape_cast %20 : vector<8x16x4xf32> to vector<128x4xf32>
    %c0_12 = arith.constant 0 : index
    %c2 = arith.constant 2 : index
    %c0_13 = arith.constant 0 : index
    %c0_14 = arith.constant 0 : index
    %22 = vector.load %arg5[%c0_12, %c2, %c0_13, %c0_14] : memref<3x3x4x4xf32, #tpu.memory_space<vmem>>, vector<1x1x4x4xf32>
    %23 = vector.shape_cast %22 : vector<1x1x4x4xf32> to vector<4x4xf32>
    %cst_15 = arith.constant dense<0.000000e+00> : vector<128x4xf32>
    %24 = tpu.matmul %21, %23, %cst_15 {dimension_numbers = #tpu.dot_dimension_numbers<[1], [0], [0], [1], [0, 0, 1, 1], [], []>} : vector<128x4xf32>, vector<4x4xf32>, vector<128x4xf32> -> vector<128x4xf32>
    %25 = arith.addf %19, %24 : vector<128x4xf32>
    %c1_i32 = arith.constant 1 : i32
    %26 = arith.addi %3, %c1_i32 : i32
    %27 = arith.index_cast %26 : i32 to index
    %c0_16 = arith.constant 0 : index
    %c0_17 = arith.constant 0 : index
    %28 = vector.load %arg12[%27, %c0_16, %c0_17] : memref<18x18x4xf32, #tpu.memory_space<vmem>>, vector<8x18x4xf32>
    %29 = vector.extract_strided_slice %28 {offsets = [0, 0, 0], sizes = [8, 16, 4], strides = [1, 1, 1]} : vector<8x18x4xf32> to vector<8x16x4xf32>
    %30 = vector.shape_cast %29 : vector<8x16x4xf32> to vector<128x4xf32>
    %c1_18 = arith.constant 1 : index
    %c0_19 = arith.constant 0 : index
    %c0_20 = arith.constant 0 : index
    %c0_21 = arith.constant 0 : index
    %31 = vector.load %arg5[%c1_18, %c0_19, %c0_20, %c0_21] : memref<3x3x4x4xf32, #tpu.memory_space<vmem>>, vector<1x1x4x4xf32>
    %32 = vector.shape_cast %31 : vector<1x1x4x4xf32> to vector<4x4xf32>
    %cst_22 = arith.constant dense<0.000000e+00> : vector<128x4xf32>
    %33 = tpu.matmul %30, %32, %cst_22 {dimension_numbers = #tpu.dot_dimension_numbers<[1], [0], [0], [1], [0, 0, 1, 1], [], []>} : vector<128x4xf32>, vector<4x4xf32>, vector<128x4xf32> -> vector<128x4xf32>
    %34 = arith.addf %25, %33 : vector<128x4xf32>
    %35 = vector.extract_strided_slice %28 {offsets = [0, 1, 0], sizes = [8, 16, 4], strides = [1, 1, 1]} : vector<8x18x4xf32> to vector<8x16x4xf32>
    %36 = vector.shape_cast %35 : vector<8x16x4xf32> to vector<128x4xf32>
    %c1_23 = arith.constant 1 : index
    %c1_24 = arith.constant 1 : index
    %c0_25 = arith.constant 0 : index
    %c0_26 = arith.constant 0 : index
    %37 = vector.load %arg5[%c1_23, %c1_24, %c0_25, %c0_26] : memref<3x3x4x4xf32, #tpu.memory_space<vmem>>, vector<1x1x4x4xf32>
    %38 = vector.shape_cast %37 : vector<1x1x4x4xf32> to vector<4x4xf32>
    %cst_27 = arith.constant dense<0.000000e+00> : vector<128x4xf32>
    %39 = tpu.matmul %36, %38, %cst_27 {dimension_numbers = #tpu.dot_dimension_numbers<[1], [0], [0], [1], [0, 0, 1, 1], [], []>} : vector<128x4xf32>, vector<4x4xf32>, vector<128x4xf32> -> vector<128x4xf32>
    %40 = arith.addf %34, %39 : vector<128x4xf32>
    %41 = vector.extract_strided_slice %28 {offsets = [0, 2, 0], sizes = [8, 16, 4], strides = [1, 1, 1]} : vector<8x18x4xf32> to vector<8x16x4xf32>
    %42 = vector.shape_cast %41 : vector<8x16x4xf32> to vector<128x4xf32>
    %c1_28 = arith.constant 1 : index
    %c2_29 = arith.constant 2 : index
    %c0_30 = arith.constant 0 : index
    %c0_31 = arith.constant 0 : index
    %43 = vector.load %arg5[%c1_28, %c2_29, %c0_30, %c0_31] : memref<3x3x4x4xf32, #tpu.memory_space<vmem>>, vector<1x1x4x4xf32>
    %44 = vector.shape_cast %43 : vector<1x1x4x4xf32> to vector<4x4xf32>
    %cst_32 = arith.constant dense<0.000000e+00> : vector<128x4xf32>
    %45 = tpu.matmul %42, %44, %cst_32 {dimension_numbers = #tpu.dot_dimension_numbers<[1], [0], [0], [1], [0, 0, 1, 1], [], []>} : vector<128x4xf32>, vector<4x4xf32>, vector<128x4xf32> -> vector<128x4xf32>
    %46 = arith.addf %40, %45 : vector<128x4xf32>
    %c2_i32 = arith.constant 2 : i32
    %47 = arith.addi %3, %c2_i32 : i32
    %48 = arith.index_cast %47 : i32 to index
    %c0_33 = arith.constant 0 : index
    %c0_34 = arith.constant 0 : index
    %49 = vector.load %arg12[%48, %c0_33, %c0_34] : memref<18x18x4xf32, #tpu.memory_space<vmem>>, vector<8x18x4xf32>
    %50 = vector.extract_strided_slice %49 {offsets = [0, 0, 0], sizes = [8, 16, 4], strides = [1, 1, 1]} : vector<8x18x4xf32> to vector<8x16x4xf32>
    %51 = vector.shape_cast %50 : vector<8x16x4xf32> to vector<128x4xf32>
    %c2_35 = arith.constant 2 : index
    %c0_36 = arith.constant 0 : index
    %c0_37 = arith.constant 0 : index
    %c0_38 = arith.constant 0 : index
    %52 = vector.load %arg5[%c2_35, %c0_36, %c0_37, %c0_38] : memref<3x3x4x4xf32, #tpu.memory_space<vmem>>, vector<1x1x4x4xf32>
    %53 = vector.shape_cast %52 : vector<1x1x4x4xf32> to vector<4x4xf32>
    %cst_39 = arith.constant dense<0.000000e+00> : vector<128x4xf32>
    %54 = tpu.matmul %51, %53, %cst_39 {dimension_numbers = #tpu.dot_dimension_numbers<[1], [0], [0], [1], [0, 0, 1, 1], [], []>} : vector<128x4xf32>, vector<4x4xf32>, vector<128x4xf32> -> vector<128x4xf32>
    %55 = arith.addf %46, %54 : vector<128x4xf32>
    %56 = vector.extract_strided_slice %49 {offsets = [0, 1, 0], sizes = [8, 16, 4], strides = [1, 1, 1]} : vector<8x18x4xf32> to vector<8x16x4xf32>
    %57 = vector.shape_cast %56 : vector<8x16x4xf32> to vector<128x4xf32>
    %c2_40 = arith.constant 2 : index
    %c1_41 = arith.constant 1 : index
    %c0_42 = arith.constant 0 : index
    %c0_43 = arith.constant 0 : index
    %58 = vector.load %arg5[%c2_40, %c1_41, %c0_42, %c0_43] : memref<3x3x4x4xf32, #tpu.memory_space<vmem>>, vector<1x1x4x4xf32>
    %59 = vector.shape_cast %58 : vector<1x1x4x4xf32> to vector<4x4xf32>
    %cst_44 = arith.constant dense<0.000000e+00> : vector<128x4xf32>
    %60 = tpu.matmul %57, %59, %cst_44 {dimension_numbers = #tpu.dot_dimension_numbers<[1], [0], [0], [1], [0, 0, 1, 1], [], []>} : vector<128x4xf32>, vector<4x4xf32>, vector<128x4xf32> -> vector<128x4xf32>
    %61 = arith.addf %55, %60 : vector<128x4xf32>
    %62 = vector.extract_strided_slice %49 {offsets = [0, 2, 0], sizes = [8, 16, 4], strides = [1, 1, 1]} : vector<8x18x4xf32> to vector<8x16x4xf32>
    %63 = vector.shape_cast %62 : vector<8x16x4xf32> to vector<128x4xf32>
    %c2_45 = arith.constant 2 : index
    %c2_46 = arith.constant 2 : index
    %c0_47 = arith.constant 0 : index
    %c0_48 = arith.constant 0 : index
    %64 = vector.load %arg5[%c2_45, %c2_46, %c0_47, %c0_48] : memref<3x3x4x4xf32, #tpu.memory_space<vmem>>, vector<1x1x4x4xf32>
    %65 = vector.shape_cast %64 : vector<1x1x4x4xf32> to vector<4x4xf32>
    %cst_49 = arith.constant dense<0.000000e+00> : vector<128x4xf32>
    %66 = tpu.matmul %63, %65, %cst_49 {dimension_numbers = #tpu.dot_dimension_numbers<[1], [0], [0], [1], [0, 0, 1, 1], [], []>} : vector<128x4xf32>, vector<4x4xf32>, vector<128x4xf32> -> vector<128x4xf32>
    %67 = arith.addf %61, %66 : vector<128x4xf32>
    %c0_50 = arith.constant 0 : index
    %c0_51 = arith.constant 0 : index
    %68 = vector.load %arg6[%c0_50, %c0_51] : memref<1x4xf32, #tpu.memory_space<vmem>>, vector<1x4xf32>
    %69 = vector.broadcast %68 : vector<1x4xf32> to vector<128x4xf32>
    %70 = arith.addf %67, %69 : vector<128x4xf32>
    %cst_52 = arith.constant 0.000000e+00 : f32
    %71 = vector.broadcast %cst_52 : f32 to vector<128x4xf32>
    %72 = arith.maximumf %70, %71 : vector<128x4xf32>
    %c0_53 = arith.constant 0 : index
    %c0_54 = arith.constant 0 : index
    %73 = vector.load %arg7[%c0_53, %c0_54] : memref<4x16xf32, #tpu.memory_space<vmem>>, vector<4x16xf32>
    %cst_55 = arith.constant dense<0.000000e+00> : vector<128x16xf32>
    %74 = tpu.matmul %72, %73, %cst_55 {dimension_numbers = #tpu.dot_dimension_numbers<[1], [0], [0], [1], [0, 0, 1, 1], [], []>} : vector<128x4xf32>, vector<4x16xf32>, vector<128x16xf32> -> vector<128x16xf32>
    %c0_56 = arith.constant 0 : index
    %c0_57 = arith.constant 0 : index
    %75 = vector.load %arg8[%c0_56, %c0_57] : memref<1x16xf32, #tpu.memory_space<vmem>>, vector<1x16xf32>
    %76 = vector.broadcast %75 : vector<1x16xf32> to vector<128x16xf32>
    %77 = arith.addf %74, %76 : vector<128x16xf32>
    %c0_58 = arith.constant 0 : index
    %78 = arith.index_cast %3 : i32 to index
    %c0_59 = arith.constant 0 : index
    %c0_60 = arith.constant 0 : index
    %79 = vector.load %arg2[%c0_58, %78, %c0_59, %c0_60] : memref<1x16x16x4xf32, #tpu.memory_space<vmem>>, vector<1x8x16x4xf32>
    %80 = vector.shape_cast %79 : vector<1x8x16x4xf32> to vector<8x16x4xf32>
    %81 = vector.extract_strided_slice %80 {offsets = [0, 0, 0], sizes = [8, 16, 4], strides = [1, 1, 1]} : vector<8x16x4xf32> to vector<8x16x4xf32>
    %82 = vector.shape_cast %81 : vector<8x16x4xf32> to vector<128x4xf32>
    %c0_61 = arith.constant 0 : index
    %c0_62 = arith.constant 0 : index
    %83 = vector.load %arg9[%c0_61, %c0_62] : memref<4x16xf32, #tpu.memory_space<vmem>>, vector<4x16xf32>
    %cst_63 = arith.constant dense<0.000000e+00> : vector<128x16xf32>
    %84 = tpu.matmul %82, %83, %cst_63 {dimension_numbers = #tpu.dot_dimension_numbers<[1], [0], [0], [1], [0, 0, 1, 1], [], []>} : vector<128x4xf32>, vector<4x16xf32>, vector<128x16xf32> -> vector<128x16xf32>
    %c0_64 = arith.constant 0 : index
    %c0_65 = arith.constant 0 : index
    %85 = vector.load %arg10[%c0_64, %c0_65] : memref<1x16xf32, #tpu.memory_space<vmem>>, vector<1x16xf32>
    %86 = vector.broadcast %85 : vector<1x16xf32> to vector<128x16xf32>
    %87 = arith.addf %84, %86 : vector<128x16xf32>
    %88 = arith.addf %77, %87 : vector<128x16xf32>
    %cst_66 = arith.constant 0.000000e+00 : f32
    %89 = vector.broadcast %cst_66 : f32 to vector<128x16xf32>
    %90 = arith.maximumf %88, %89 : vector<128x16xf32>
    %91 = vector.shape_cast %90 : vector<128x16xf32> to vector<8x16x16xf32>
    %c0_67 = arith.constant 0 : index
    %c0_68 = arith.constant 0 : index
    %c0_69 = arith.constant 0 : index
    %c0_70 = arith.constant 0 : index
    %92 = vector.load %arg11[%c0_67, %c0_68, %c0_69, %c0_70] : memref<1x8x16x16xf32, #tpu.memory_space<vmem>>, vector<1x8x16x16xf32>
    %93 = vector.shape_cast %92 : vector<1x8x16x16xf32> to vector<8x16x16xf32>
    %94 = vector.shape_cast %91 : vector<8x16x16xf32> to vector<1x8x16x16xf32>
    tpu.vector_store %arg11[%c0_67, %c0_68, %c0_69, %c0_70], %94 {strides = array<i32>} : memref<1x8x16x16xf32, #tpu.memory_space<vmem>>, vector<1x8x16x16xf32>,
    return
  }
  func.func @transform_0(%arg0: i32, %arg1: i32) -> (i32, i32, i32, i32) {
    %c0_i32 = arith.constant 0 : i32
    %c0_i32_0 = arith.constant 0 : i32
    %c0_i32_1 = arith.constant 0 : i32
    %c0_i32_2 = arith.constant 0 : i32
    return %arg0, %c0_i32, %c0_i32_0, %c0_i32_1 : i32, i32, i32, i32
  }
  func.func @transform_1(%arg0: i32, %arg1: i32) -> (i32, i32) {
    %c0_i32 = arith.constant 0 : i32
    %c0_i32_0 = arith.constant 0 : i32
    %c0_i32_1 = arith.constant 0 : i32
    return %c0_i32, %c0_i32_0 : i32, i32
  }
  func.func @transform_2(%arg0: i32, %arg1: i32) -> (i32, i32) {
    %c0_i32 = arith.constant 0 : i32
    %c0_i32_0 = arith.constant 0 : i32
    %c0_i32_1 = arith.constant 0 : i32
    return %c0_i32, %c0_i32_0 : i32, i32
  }
  func.func @transform_3(%arg0: i32, %arg1: i32) -> (i32, i32, i32, i32) {
    %c0_i32 = arith.constant 0 : i32
    %c0_i32_0 = arith.constant 0 : i32
    %c0_i32_1 = arith.constant 0 : i32
    %c0_i32_2 = arith.constant 0 : i32
    %c0_i32_3 = arith.constant 0 : i32
    return %c0_i32, %c0_i32_0, %c0_i32_1, %c0_i32_2 : i32, i32, i32, i32
  }
  func.func @transform_4(%arg0: i32, %arg1: i32) -> (i32, i32) {
    %c0_i32 = arith.constant 0 : i32
    %c0_i32_0 = arith.constant 0 : i32
    %c0_i32_1 = arith.constant 0 : i32
    return %c0_i32, %c0_i32_0 : i32, i32
  }
  func.func @transform_5(%arg0: i32, %arg1: i32) -> (i32, i32) {
    %c0_i32 = arith.constant 0 : i32
    %c0_i32_0 = arith.constant 0 : i32
    %c0_i32_1 = arith.constant 0 : i32
    return %c0_i32, %c0_i32_0 : i32, i32
  }
  func.func @transform_6(%arg0: i32, %arg1: i32) -> (i32, i32) {
    %c0_i32 = arith.constant 0 : i32
    %c0_i32_0 = arith.constant 0 : i32
    %c0_i32_1 = arith.constant 0 : i32
    return %c0_i32, %c0_i32_0 : i32, i32
  }
  func.func @transform_7(%arg0: i32, %arg1: i32) -> (i32, i32) {
    %c0_i32 = arith.constant 0 : i32
    %c0_i32_0 = arith.constant 0 : i32
    %c0_i32_1 = arith.constant 0 : i32
    return %c0_i32, %c0_i32_0 : i32, i32
  }
  func.func @transform_8(%arg0: i32, %arg1: i32) -> (i32, i32) {
    %c0_i32 = arith.constant 0 : i32
    %c0_i32_0 = arith.constant 0 : i32
    %c0_i32_1 = arith.constant 0 : i32
    return %c0_i32, %c0_i32_0 : i32, i32
  }
  func.func @transform_9(%arg0: i32, %arg1: i32) -> (i32, i32, i32, i32) {
    %c0_i32 = arith.constant 0 : i32
    %c0_i32_0 = arith.constant 0 : i32
    %c0_i32_1 = arith.constant 0 : i32
    return %arg0, %arg1, %c0_i32, %c0_i32_0 : i32, i32, i32, i32
  }
}

</mosaic_0001>

<llo_original>
// kernel: tpu_custom_call.1
$region0: #{tpu_custom_call.1}
  #allocation0 [shape = 'u32[]', space=smem, size = 0x4, offset = 0x4, fixed_abs, tag = 'smem constant byte address 0x4 - core index']
  #allocation1 [shape = 'u32[144,128]{1,0:T(1,128)}', space=vmem, size = 0x12000, scoped, tag = 'internal scratch']
  #allocation2 [shape = 'f32[18,18,4]{2,1,0:T(8,128)}', space=vmem, size = 0x36000, scoped, tag = 'scratch operand']
  %s0 = inlined_call_operand.vmem [shape: f32[2,16,16,4], index: 0, kind: input, shape index: {}]
  %s1 = inlined_call_operand.vmem [shape: f32[4,4], index: 1, kind: input, shape index: {}]
  %s2 = inlined_call_operand.vmem [shape: f32[1,4], index: 2, kind: input, shape index: {}]
  %s3 = inlined_call_operand.vmem [shape: f32[3,3,4,4], index: 3, kind: input, shape index: {}]
  %s4 = inlined_call_operand.vmem [shape: f32[1,4], index: 4, kind: input, shape index: {}]
  %s5 = inlined_call_operand.vmem [shape: f32[4,16], index: 5, kind: input, shape index: {}]
  %s6 = inlined_call_operand.vmem [shape: f32[1,16], index: 6, kind: input, shape index: {}]
  %s7 = inlined_call_operand.vmem [shape: f32[4,16], index: 7, kind: input, shape index: {}]
  %s8 = inlined_call_operand.vmem [shape: f32[1,16], index: 8, kind: input, shape index: {}]
  %s9 = inlined_call_operand.hbm [shape: f32[2,16,16,16], index: 9, kind: output, shape index: {}]
  %s10 = sld [smem:[#allocation0]]
  $region73: #{tpu_custom_call.1} parent=0
    _
  %s12 = ssub.s32 1, %s10
  %s13 = scalar_select 0, %s12, %s10
  $region1: #{tpu_custom_call.1} parent=0
    #allocation3 [shape = 'u8[131072]{0}', space=vmem, size = 0x20000, scoped, tag = 'output window, operand 0']
    #allocation4 [shape = 's32[2]{0}', space=sflag, size = 0x8, scoped, tag = 'scoped memory for tpu_custom_call.1']
    %14 = vsyncpa [#allocation4], 0
    %s15 = scalar_lea.sflag [#allocation4], 1
    %16 = vsyncpa %s15, 0
    loop: start=0, step=1, limit=6
    $region2: #{tpu_custom_call.1} parent=1 // loop_pre_header
      _
    $region3: #{tpu_custom_call.1} parent=1 // loop_header
      %s18 = sphi 0, %s22
      %p19 = scmp.ge.s32.totalorder %s18, 6
      %s25 = sphi 0, %s37
      %s26 = sphi 0, %s33
      %s27 = sphi 0, %s25
      %s28 = sphi 0, %s26
      %s29 = sphi 0, %s27
      %s30 = sphi 0, %s28
      %s40 = sphi 0, %s42
      %s43 = sphi 0, %s40
      %s44 = sphi 0, %s43
      %s60 = sphi 0, %s44
      %s64 = sphi 0, %s64
      %s66 = sphi 0, %s64
      %s67 = sphi 0, %s66
      %s81 = sphi 0, %s67
      %s85 = sphi 0, %s85
      %s87 = sphi 0, %s85
      %s88 = sphi 0, %s87
      %s102 = sphi 0, %s88
      %s106 = sphi 0, %s106
      %s108 = sphi 0, %s106
      %s109 = sphi 0, %s108
      %s123 = sphi 0, %s109
      %s127 = sphi 0, %s127
      %s129 = sphi 0, %s127
      %s130 = sphi 0, %s129
      %s144 = sphi 0, %s130
      %s148 = sphi 0, %s148
      %s150 = sphi 0, %s148
      %s151 = sphi 0, %s150
      %s165 = sphi 0, %s151
      %s169 = sphi 0, %s169
      %s171 = sphi 0, %s169
      %s172 = sphi 0, %s171
      %s186 = sphi 0, %s172
      %s190 = sphi 0, %s190
      %s192 = sphi 0, %s190
      %s193 = sphi 0, %s192
      %s207 = sphi 0, %s193
      %s211 = sphi 0, %s211
      %s213 = sphi 0, %s211
      %s214 = sphi 0, %s213
      %s228 = sphi 0, %s214
      %s236 = sphi 0, %s238
      %s239 = sphi 0, %s236
      %s240 = sphi 0, %s239
      %s256 = sphi 0, %s240
    $region4: #{tpu_custom_call.1} parent=1 // loop_header_branch
      %21 = sbr.rel (%p19) target = $region8
    $region5: #{tpu_custom_call.1} parent=1 // loop_body
      %s23 = ssub.s32 %s18, 1
      %s24 = ssub.s32 %s18, 2
      %s31 = sadd.s32 1, %s26
      %p32 = scmp.ge.s32.totalorder %s31, 2
      %s33 = scalar_select %p32, 0, %s31
      %s34 = sadd.s32 1, %s25
      %s35 = scalar_select %p32, %s34, %s25
      %p36 = scmp.ge.s32.totalorder %s35, 2
      %s37 = scalar_select %p36, 0, %s35
      %s38 = ssub.s32 %s25, %s37
      %p39 = scmp.eq.s32.totalorder %s38, 0
      %s41 = sadd.s32 %s40, 1
      %s42 = scalar_select %p39, %s40, %s41
      %p45 = pneg %p39
      %p46 = scmp.eq.s32.totalorder %s18, 3
      %p47 = por %p45, %p46
      %p48 = scmp.ne.s32.totalorder %s40, %s43
      %p49 = scmp.eq.s32.totalorder %s18, 0
      %p50 = por %p48, %p49
      %p51 = scmp.ne.s32.totalorder %s40, %s43
      %p52 = scmp.eq.s32.totalorder %s23, 3
      %p53 = por %p51, %p52
      %p54 = scmp.ne.s32.totalorder %s43, %s44
      %p55 = scmp.eq.s32.totalorder %s23, 0
      %p56 = por %p54, %p55
      %p57 = scmp.ne.s32.totalorder %s43, %s44
      %p58 = scmp.eq.s32.totalorder %s24, 3
      %p59 = por %p57, %p58
      %p61 = scmp.ne.s32.totalorder %s44, %s60
      %p62 = scmp.eq.s32.totalorder %s24, 0
      %p63 = por %p61, %p62
      %s65 = sadd.s32 %s64, 1
      %p68 = scmp.eq.s32.totalorder %s18, 3
      %p69 = scmp.ne.s32.totalorder %s64, %s66
      %p70 = scmp.eq.s32.totalorder %s18, 0
      %p71 = por %p69, %p70
      %p72 = scmp.ne.s32.totalorder %s64, %s66
      %p73 = scmp.eq.s32.totalorder %s23, 3
      %p74 = por %p72, %p73
      %p75 = scmp.ne.s32.totalorder %s66, %s67
      %p76 = scmp.eq.s32.totalorder %s23, 0
      %p77 = por %p75, %p76
      %p78 = scmp.ne.s32.totalorder %s66, %s67
      %p79 = scmp.eq.s32.totalorder %s24, 3
      %p80 = por %p78, %p79
      %p82 = scmp.ne.s32.totalorder %s67, %s81
      %p83 = scmp.eq.s32.totalorder %s24, 0
      %p84 = por %p82, %p83
      %s86 = sadd.s32 %s85, 1
      %p89 = scmp.eq.s32.totalorder %s18, 3
      %p90 = scmp.ne.s32.totalorder %s85, %s87
      %p91 = scmp.eq.s32.totalorder %s18, 0
      %p92 = por %p90, %p91
      %p93 = scmp.ne.s32.totalorder %s85, %s87
      %p94 = scmp.eq.s32.totalorder %s23, 3
      %p95 = por %p93, %p94
      %p96 = scmp.ne.s32.totalorder %s87, %s88
      %p97 = scmp.eq.s32.totalorder %s23, 0
      %p98 = por %p96, %p97
      %p99 = scmp.ne.s32.totalorder %s87, %s88
      %p100 = scmp.eq.s32.totalorder %s24, 3
      %p101 = por %p99, %p100
      %p103 = scmp.ne.s32.totalorder %s88, %s102
      %p104 = scmp.eq.s32.totalorder %s24, 0
      %p105 = por %p103, %p104
      %s107 = sadd.s32 %s106, 1
      %p110 = scmp.eq.s32.totalorder %s18, 3
      %p111 = scmp.ne.s32.totalorder %s106, %s108
      %p112 = scmp.eq.s32.totalorder %s18, 0
      %p113 = por %p111, %p112
      %p114 = scmp.ne.s32.totalorder %s106, %s108
      %p115 = scmp.eq.s32.totalorder %s23, 3
      %p116 = por %p114, %p115
      %p117 = scmp.ne.s32.totalorder %s108, %s109
      %p118 = scmp.eq.s32.totalorder %s23, 0
      %p119 = por %p117, %p118
      %p120 = scmp.ne.s32.totalorder %s108, %s109
      %p121 = scmp.eq.s32.totalorder %s24, 3
      %p122 = por %p120, %p121
      %p124 = scmp.ne.s32.totalorder %s109, %s123
      %p125 = scmp.eq.s32.totalorder %s24, 0
      %p126 = por %p124, %p125
      %s128 = sadd.s32 %s127, 1
      %p131 = scmp.eq.s32.totalorder %s18, 3
      %p132 = scmp.ne.s32.totalorder %s127, %s129
      %p133 = scmp.eq.s32.totalorder %s18, 0
      %p134 = por %p132, %p133
      %p135 = scmp.ne.s32.totalorder %s127, %s129
      %p136 = scmp.eq.s32.totalorder %s23, 3
      %p137 = por %p135, %p136
      %p138 = scmp.ne.s32.totalorder %s129, %s130
      %p139 = scmp.eq.s32.totalorder %s23, 0
      %p140 = por %p138, %p139
      %p141 = scmp.ne.s32.totalorder %s129, %s130
      %p142 = scmp.eq.s32.totalorder %s24, 3
      %p143 = por %p141, %p142
      %p145 = scmp.ne.s32.totalorder %s130, %s144
      %p146 = scmp.eq.s32.totalorder %s24, 0
      %p147 = por %p145, %p146
      %s149 = sadd.s32 %s148, 1
      %p152 = scmp.eq.s32.totalorder %s18, 3
      %p153 = scmp.ne.s32.totalorder %s148, %s150
      %p154 = scmp.eq.s32.totalorder %s18, 0
      %p155 = por %p153, %p154
      %p156 = scmp.ne.s32.totalorder %s148, %s150
      %p157 = scmp.eq.s32.totalorder %s23, 3
      %p158 = por %p156, %p157
      %p159 = scmp.ne.s32.totalorder %s150, %s151
      %p160 = scmp.eq.s32.totalorder %s23, 0
      %p161 = por %p159, %p160
      %p162 = scmp.ne.s32.totalorder %s150, %s151
      %p163 = scmp.eq.s32.totalorder %s24, 3
      %p164 = por %p162, %p163
      %p166 = scmp.ne.s32.totalorder %s151, %s165
      %p167 = scmp.eq.s32.totalorder %s24, 0
      %p168 = por %p166, %p167
      %s170 = sadd.s32 %s169, 1
      %p173 = scmp.eq.s32.totalorder %s18, 3
      %p174 = scmp.ne.s32.totalorder %s169, %s171
      %p175 = scmp.eq.s32.totalorder %s18, 0
      %p176 = por %p174, %p175
      %p177 = scmp.ne.s32.totalorder %s169, %s171
      %p178 = scmp.eq.s32.totalorder %s23, 3
      %p179 = por %p177, %p178
      %p180 = scmp.ne.s32.totalorder %s171, %s172
      %p181 = scmp.eq.s32.totalorder %s23, 0
      %p182 = por %p180, %p181
      %p183 = scmp.ne.s32.totalorder %s171, %s172
      %p184 = scmp.eq.s32.totalorder %s24, 3
      %p185 = por %p183, %p184
      %p187 = scmp.ne.s32.totalorder %s172, %s186
      %p188 = scmp.eq.s32.totalorder %s24, 0
      %p189 = por %p187, %p188
      %s191 = sadd.s32 %s190, 1
      %p194 = scmp.eq.s32.totalorder %s18, 3
      %p195 = scmp.ne.s32.totalorder %s190, %s192
      %p196 = scmp.eq.s32.totalorder %s18, 0
      %p197 = por %p195, %p196
      %p198 = scmp.ne.s32.totalorder %s190, %s192
      %p199 = scmp.eq.s32.totalorder %s23, 3
      %p200 = por %p198, %p199
      %p201 = scmp.ne.s32.totalorder %s192, %s193
      %p202 = scmp.eq.s32.totalorder %s23, 0
      %p203 = por %p201, %p202
      %p204 = scmp.ne.s32.totalorder %s192, %s193
      %p205 = scmp.eq.s32.totalorder %s24, 3
      %p206 = por %p204, %p205
      %p208 = scmp.ne.s32.totalorder %s193, %s207
      %p209 = scmp.eq.s32.totalorder %s24, 0
      %p210 = por %p208, %p209
      %s212 = sadd.s32 %s211, 1
      %p215 = scmp.eq.s32.totalorder %s18, 3
      %p216 = scmp.ne.s32.totalorder %s211, %s213
      %p217 = scmp.eq.s32.totalorder %s18, 0
      %p218 = por %p216, %p217
      %p219 = scmp.ne.s32.totalorder %s211, %s213
      %p220 = scmp.eq.s32.totalorder %s23, 3
      %p221 = por %p219, %p220
      %p222 = scmp.ne.s32.totalorder %s213, %s214
      %p223 = scmp.eq.s32.totalorder %s23, 0
      %p224 = por %p222, %p223
      %p225 = scmp.ne.s32.totalorder %s213, %s214
      %p226 = scmp.eq.s32.totalorder %s24, 3
      %p227 = por %p225, %p226
      %p229 = scmp.ne.s32.totalorder %s214, %s228
      %p230 = scmp.eq.s32.totalorder %s24, 0
      %p231 = por %p229, %p230
      %s232 = ssub.s32 %s25, %s37
      %s233 = ssub.s32 %s26, %s33
      %s234 = sor.u32 %s232, %s233
      %p235 = scmp.eq.s32.totalorder %s234, 0
      %s237 = sadd.s32 %s236, 1
      %s238 = scalar_select %p235, %s236, %s237
      %p241 = pneg %p235
      %p242 = scmp.eq.s32.totalorder %s18, 3
      %p243 = por %p241, %p242
      %p244 = scmp.ne.s32.totalorder %s236, %s239
      %p245 = scmp.eq.s32.totalorder %s18, 0
      %p246 = por %p244, %p245
      %p247 = scmp.ne.s32.totalorder %s236, %s239
      %p248 = scmp.eq.s32.totalorder %s23, 3
      %p249 = por %p247, %p248
      %p250 = scmp.ne.s32.totalorder %s239, %s240
      %p251 = scmp.eq.s32.totalorder %s23, 0
      %p252 = por %p250, %p251
      %p253 = scmp.ne.s32.totalorder %s239, %s240
      %p254 = scmp.eq.s32.totalorder %s24, 3
      %p255 = por %p253, %p254
      %p257 = scmp.ne.s32.totalorder %s240, %s256
      %p258 = scmp.eq.s32.totalorder %s24, 0
      %p259 = por %p257, %p258
      %p260 = scmp.le.s32.totalorder 1, %s18
      %p261 = scmp.lt.s32.totalorder %s18, 5
      %p262 = pnand %p260, %p261
      %p263 = pneg %p262
      // Predicated region
      $region9: #{tpu_custom_call.1} parent=5 // pred_check
        _
      $region10: #{tpu_custom_call.1} parent=5 // pred_check_branch
        %265 = sbr.rel (%p262) target = $region12
      $region11: #{tpu_custom_call.1} parent=5 // pred_region
        %s266 = ssub.s32 %s18, 1
        // Predicated region
        $region13: #{tpu_custom_call.1} parent=11 // pred_check
          %p267 = pneg %p77
        $region14: #{tpu_custom_call.1} parent=11 // pred_check_branch
          %269 = sbr.rel (%p267) target = $region16
        $region15: #{tpu_custom_call.1} parent=11 // pred_region
          _
        $region16: #{tpu_custom_call.1} parent=11 // pred_fallthru
          _
        // Predicated region
        $region17: #{tpu_custom_call.1} parent=11 // pred_check
          %p270 = pneg %p98
        $region18: #{tpu_custom_call.1} parent=11 // pred_check_branch
          %272 = sbr.rel (%p270) target = $region20
        $region19: #{tpu_custom_call.1} parent=11 // pred_region
          _
        $region20: #{tpu_custom_call.1} parent=11 // pred_fallthru
          _
        // Predicated region
        $region21: #{tpu_custom_call.1} parent=11 // pred_check
          %p273 = pneg %p119
        $region22: #{tpu_custom_call.1} parent=11 // pred_check_branch
          %275 = sbr.rel (%p273) target = $region24
        $region23: #{tpu_custom_call.1} parent=11 // pred_region
          _
        $region24: #{tpu_custom_call.1} parent=11 // pred_fallthru
          _
        // Predicated region
        $region25: #{tpu_custom_call.1} parent=11 // pred_check
          %p276 = pneg %p140
        $region26: #{tpu_custom_call.1} parent=11 // pred_check_branch
          %278 = sbr.rel (%p276) target = $region28
        $region27: #{tpu_custom_call.1} parent=11 // pred_region
          _
        $region28: #{tpu_custom_call.1} parent=11 // pred_fallthru
          _
        // Predicated region
        $region29: #{tpu_custom_call.1} parent=11 // pred_check
          %p279 = pneg %p161
        $region30: #{tpu_custom_call.1} parent=11 // pred_check_branch
          %281 = sbr.rel (%p279) target = $region32
        $region31: #{tpu_custom_call.1} parent=11 // pred_region
          _
        $region32: #{tpu_custom_call.1} parent=11 // pred_fallthru
          _
        // Predicated region
        $region33: #{tpu_custom_call.1} parent=11 // pred_check
          %p282 = pneg %p182
        $region34: #{tpu_custom_call.1} parent=11 // pred_check_branch
          %284 = sbr.rel (%p282) target = $region36
        $region35: #{tpu_custom_call.1} parent=11 // pred_region
          _
        $region36: #{tpu_custom_call.1} parent=11 // pred_fallthru
          _
        // Predicated region
        $region37: #{tpu_custom_call.1} parent=11 // pred_check
          %p285 = pneg %p203
        $region38: #{tpu_custom_call.1} parent=11 // pred_check_branch
          %287 = sbr.rel (%p285) target = $region40
        $region39: #{tpu_custom_call.1} parent=11 // pred_region
          _
        $region40: #{tpu_custom_call.1} parent=11 // pred_fallthru
          _
        // Predicated region
        $region41: #{tpu_custom_call.1} parent=11 // pred_check
          %p288 = pneg %p224
        $region42: #{tpu_custom_call.1} parent=11 // pred_check_branch
          %290 = sbr.rel (%p288) target = $region44
        $region43: #{tpu_custom_call.1} parent=11 // pred_region
          _
        $region44: #{tpu_custom_call.1} parent=11 // pred_fallthru
          _
      $region12: #{tpu_custom_call.1} parent=5 // pred_fallthru
        _
      %p291 = scmp.lt.s32.totalorder %s18, 4
      // Predicated region
      $region45: #{tpu_custom_call.1} parent=5 // pred_check
        %p292 = pneg %p291
      $region46: #{tpu_custom_call.1} parent=5 // pred_check_branch
        %294 = sbr.rel (%p292) target = $region48
      $region47: #{tpu_custom_call.1} parent=5 // pred_region
        // Predicated region
        $region49: #{tpu_custom_call.1} parent=47 // pred_check
          %p295 = pneg %p50
        $region50: #{tpu_custom_call.1} parent=47 // pred_check_branch
          %297 = sbr.rel (%p295) target = $region52
        $region51: #{tpu_custom_call.1} parent=47 // pred_region
          %p298 = scmp.lt.s32.totalorder %s25, 1
          %s299 = scalar_select %p298, %s25, 1
          %s300 = smul.addr %s299, 32
          %s301 = smul.addr %s300, 8
          %s302 = scalar_lea.vmem %s0, %s301
        $region52: #{tpu_custom_call.1} parent=47 // pred_fallthru
          _
      $region48: #{tpu_custom_call.1} parent=5 // pred_fallthru
        _
      %p303 = scmp.le.s32.totalorder 1, %s18
      %p304 = scmp.lt.s32.totalorder %s18, 5
      %p305 = pnand %p303, %p304
      %p306 = pneg %p305
      // Predicated region
      $region53: #{tpu_custom_call.1} parent=5 // pred_check
        _
      $region54: #{tpu_custom_call.1} parent=5 // pred_check_branch
        %308 = sbr.rel (%p305) target = $region56
      $region55: #{tpu_custom_call.1} parent=5 // pred_region
        %s309 = ssub.s32 %s18, 1
        %p310 = scmp.lt.s32.totalorder %s27, 1
        %s311 = scalar_select %p310, %s27, 1
        %s312 = smul.addr %s311, 32
        %s313 = smul.addr %s312, 8
        %s314 = scalar_lea.vmem %s0, %s313
        %p315 = pneg %p56
        %p316 = pneg %p53
        %p317 = pneg %p77
        %p318 = pneg %p74
        %p319 = pneg %p98
        %p320 = pneg %p95
        %p321 = pneg %p119
        %p322 = pneg %p116
        %p323 = pneg %p140
        %p324 = pneg %p137
        %p325 = pneg %p161
        %p326 = pneg %p158
        %p327 = pneg %p182
        %p328 = pneg %p179
        %p329 = pneg %p203
        %p330 = pneg %p200
        %p331 = pneg %p224
        %p332 = pneg %p221
        %p333 = pneg %p252
        %p334 = pneg %p249
        %s335 = sand.u32 %s239, 1
        %s336 = scalar_lea.sflag [#allocation4], %s335
        %s337 = sand.u32 %s239, 1
        %s338 = smul.addr %s337, 128
        %s339 = scalar_lea.vmem [#allocation3], %s338
        %p340 = scmp.lt.s32.totalorder %s27, 1
        %s341 = scalar_select %p340, %s27, 1
        %s342 = smul.addr %s341, 32
        %s343 = smul.addr %s342, 8
        %s344 = scalar_lea.vmem %s0, %s343
        %s345 = smul.u32 8, %s28
        %p346 = scmp.eq.s32.totalorder %s28, 0
        // Predicated region
        $region57: #{tpu_custom_call.1} parent=55 // pred_check
          %p347 = pneg %p346
        $region58: #{tpu_custom_call.1} parent=55 // pred_check_branch
          %349 = sbr.rel (%p347) target = $region60
        $region59: #{tpu_custom_call.1} parent=55 // pred_region
          %vm350 = vcmask 31744
          %351 = vst.msk [vmem:[#allocation2] sm:$0xff] %vm350, 0.0
          %352 = vst.msk [vmem:[#allocation2 + $0x8] sm:$0xff] %vm350, 0.0
          %vm353 = vcmask 25600
          %354 = vst.msk [vmem:[#allocation2 + $0x10] sm:$0x3] %vm353, 0.0
          %355 = vst.msk [vmem:[#allocation2 + $0x18] sm:$0xff] %vm350, 0.0
          %356 = vst.msk [vmem:[#allocation2 + $0x20] sm:$0xff] %vm350, 0.0
          %357 = vst.msk [vmem:[#allocation2 + $0x28] sm:$0x3] %vm353, 0.0
          %358 = vst.msk [vmem:[#allocation2 + $0x30] sm:$0xff] %vm350, 0.0
          %359 = vst.msk [vmem:[#allocation2 + $0x38] sm:$0xff] %vm350, 0.0
          %360 = vst.msk [vmem:[#allocation2 + $0x40] sm:$0x3] %vm353, 0.0
          %361 = vst.msk [vmem:[#allocation2 + $0x48] sm:$0xff] %vm350, 0.0
          %362 = vst.msk [vmem:[#allocation2 + $0x50] sm:$0xff] %vm350, 0.0
          %363 = vst.msk [vmem:[#allocation2 + $0x58] sm:$0x3] %vm353, 0.0
          %364 = vst.msk [vmem:[#allocation2 + $0x60] sm:$0xff] %vm350, 0.0
          %365 = vst.msk [vmem:[#allocation2 + $0x68] sm:$0xff] %vm350, 0.0
          %366 = vst.msk [vmem:[#allocation2 + $0x70] sm:$0x3] %vm353, 0.0
          %367 = vst.msk [vmem:[#allocation2 + $0x78] sm:$0xff] %vm350, 0.0
          %368 = vst.msk [vmem:[#allocation2 + $0x80] sm:$0xff] %vm350, 0.0
          %369 = vst.msk [vmem:[#allocation2 + $0x88] sm:$0x3] %vm353, 0.0
          %370 = vst.msk [vmem:[#allocation2 + $0x90] sm:$0xff] %vm350, 0.0
          %371 = vst.msk [vmem:[#allocation2 + $0x98] sm:$0xff] %vm350, 0.0
          %372 = vst.msk [vmem:[#allocation2 + $0xa0] sm:$0x3] %vm353, 0.0
          %373 = vst.msk [vmem:[#allocation2 + $0xa8] sm:$0xff] %vm350, 0.0
          %374 = vst.msk [vmem:[#allocation2 + $0xb0] sm:$0xff] %vm350, 0.0
          %375 = vst.msk [vmem:[#allocation2 + $0xb8] sm:$0x3] %vm353, 0.0
          %376 = vst.msk [vmem:[#allocation2 + $0xc0] sm:$0xff] %vm350, 0.0
          %377 = vst.msk [vmem:[#allocation2 + $0xc8] sm:$0xff] %vm350, 0.0
          %378 = vst.msk [vmem:[#allocation2 + $0xd0] sm:$0x3] %vm353, 0.0
          %379 = vst.msk [vmem:[#allocation2 + $0xd8] sm:$0xff] %vm350, 0.0
          %380 = vst.msk [vmem:[#allocation2 + $0xe0] sm:$0xff] %vm350, 0.0
          %381 = vst.msk [vmem:[#allocation2 + $0xe8] sm:$0x3] %vm353, 0.0
          %382 = vst.msk [vmem:[#allocation2 + $0xf0] sm:$0xff] %vm350, 0.0
          %383 = vst.msk [vmem:[#allocation2 + $0xf8] sm:$0xff] %vm350, 0.0
          %384 = vst.msk [vmem:[#allocation2 + $0x100] sm:$0x3] %vm353, 0.0
          %385 = vst.msk [vmem:[#allocation2 + $0x108] sm:$0xff] %vm350, 0.0
          %386 = vst.msk [vmem:[#allocation2 + $0x110] sm:$0xff] %vm350, 0.0
          %387 = vst.msk [vmem:[#allocation2 + $0x118] sm:$0x3] %vm353, 0.0
          %388 = vst.msk [vmem:[#allocation2 + $0x120] sm:$0xff] %vm350, 0.0
          %389 = vst.msk [vmem:[#allocation2 + $0x128] sm:$0xff] %vm350, 0.0
          %390 = vst.msk [vmem:[#allocation2 + $0x130] sm:$0x3] %vm353, 0.0
          %391 = vst.msk [vmem:[#allocation2 + $0x138] sm:$0xff] %vm350, 0.0
          %392 = vst.msk [vmem:[#allocation2 + $0x140] sm:$0xff] %vm350, 0.0
          %393 = vst.msk [vmem:[#allocation2 + $0x148] sm:$0x3] %vm353, 0.0
          %394 = vst.msk [vmem:[#allocation2 + $0x150] sm:$0xff] %vm350, 0.0
          %395 = vst.msk [vmem:[#allocation2 + $0x158] sm:$0xff] %vm350, 0.0
          %396 = vst.msk [vmem:[#allocation2 + $0x160] sm:$0x3] %vm353, 0.0
          %397 = vst.msk [vmem:[#allocation2 + $0x168] sm:$0xff] %vm350, 0.0
          %398 = vst.msk [vmem:[#allocation2 + $0x170] sm:$0xff] %vm350, 0.0
          %399 = vst.msk [vmem:[#allocation2 + $0x178] sm:$0x3] %vm353, 0.0
          %400 = vst.msk [vmem:[#allocation2 + $0x180] sm:$0xff] %vm350, 0.0
          %401 = vst.msk [vmem:[#allocation2 + $0x188] sm:$0xff] %vm350, 0.0
          %402 = vst.msk [vmem:[#allocation2 + $0x190] sm:$0x3] %vm353, 0.0
          %403 = vst.msk [vmem:[#allocation2 + $0x198] sm:$0xff] %vm350, 0.0
          %404 = vst.msk [vmem:[#allocation2 + $0x1a0] sm:$0xff] %vm350, 0.0
          %405 = vst.msk [vmem:[#allocation2 + $0x1a8] sm:$0x3] %vm353, 0.0
          %v406 = vld [vmem:[%s344] sm:$0xff]
          %v407 = vld [vmem:[%s344 + $0x8] sm:$0xff]
          %v408 = vld [vmem:[%s344 + $0x10] sm:$0xff]
          %v409 = vld [vmem:[%s344 + $0x18] sm:$0xff]
          %v410 = vld [vmem:[%s344 + $0x20] sm:$0xff]
          %v411 = vld [vmem:[%s344 + $0x28] sm:$0xff]
          %v412 = vld [vmem:[%s344 + $0x30] sm:$0xff]
          %v413 = vld [vmem:[%s344 + $0x38] sm:$0xff]
          %v414 = vld [vmem:[%s344 + $0x40] sm:$0xff]
          %v415 = vld [vmem:[%s344 + $0x48] sm:$0xff]
          %v416 = vld [vmem:[%s344 + $0x50] sm:$0xff]
          %v417 = vld [vmem:[%s344 + $0x58] sm:$0xff]
          %v418 = vld [vmem:[%s344 + $0x60] sm:$0xff]
          %v419 = vld [vmem:[%s344 + $0x68] sm:$0xff]
          %v420 = vld [vmem:[%s344 + $0x70] sm:$0xff]
          %v421 = vld [vmem:[%s344 + $0x78] sm:$0xff]
          %v422 = vld [vmem:[%s344 + $0x80] sm:$0xff]
          %v423 = vld [vmem:[%s344 + $0x88] sm:$0xff]
          %v424 = vld [vmem:[%s344 + $0x90] sm:$0xff]
          %v425 = vld [vmem:[%s344 + $0x98] sm:$0xff]
          %v426 = vld [vmem:[%s344 + $0xa0] sm:$0xff]
          %v427 = vld [vmem:[%s344 + $0xa8] sm:$0xff]
          %v428 = vld [vmem:[%s344 + $0xb0] sm:$0xff]
          %v429 = vld [vmem:[%s344 + $0xb8] sm:$0xff]
          %v430 = vld [vmem:[%s344 + $0xc0] sm:$0xff]
          %v431 = vld [vmem:[%s344 + $0xc8] sm:$0xff]
          %v432 = vld [vmem:[%s344 + $0xd0] sm:$0xff]
          %v433 = vld [vmem:[%s344 + $0xd8] sm:$0xff]
          %v434 = vld [vmem:[%s344 + $0xe0] sm:$0xff]
          %v435 = vld [vmem:[%s344 + $0xe8] sm:$0xff]
          %v436 = vld [vmem:[%s344 + $0xf0] sm:$0xff]
          %v437 = vld [vmem:[%s344 + $0xf8] sm:$0xff]
          %v438 = vld [vmem:[%s1] sm:$0xf]
          %v439 = vld [vmem:[%s2] sm:$0x1]
          %v441 = vlaneseq
          %v442 = vshrl.u32 %v441, 7
          %v443 = vsub.s32 0, %v442
          %v444 = vrot.slane %v439, %v443
          %v447 = vsel %vm350, %v406, 0
          %v450 = vsel %vm350, %v407, 0
          %v453 = vsel %vm350, %v408, 0
          %v456 = vsel %vm350, %v409, 0
          %v459 = vsel %vm350, %v410, 0
          %v462 = vsel %vm350, %v411, 0
          %v465 = vsel %vm350, %v412, 0
          %v468 = vsel %vm350, %v413, 0
          %v471 = vsel %vm350, %v414, 0
          %v474 = vsel %vm350, %v415, 0
          %v477 = vsel %vm350, %v416, 0
          %v480 = vsel %vm350, %v417, 0
          %v483 = vsel %vm350, %v418, 0
          %v486 = vsel %vm350, %v419, 0
          %v489 = vsel %vm350, %v420, 0
          %v492 = vsel %vm350, %v421, 0
          %v495 = vsel %vm350, %v422, 0
          %v498 = vsel %vm350, %v423, 0
          %v501 = vsel %vm350, %v424, 0
          %v504 = vsel %vm350, %v425, 0
          %v507 = vsel %vm350, %v426, 0
          %v510 = vsel %vm350, %v427, 0
          %v513 = vsel %vm350, %v428, 0
          %v516 = vsel %vm350, %v429, 0
          %v519 = vsel %vm350, %v430, 0
          %v522 = vsel %vm350, %v431, 0
          %v525 = vsel %vm350, %v432, 0
          %v528 = vsel %vm350, %v433, 0
          %v531 = vsel %vm350, %v434, 0
          %v534 = vsel %vm350, %v435, 0
          %v537 = vsel %vm350, %v436, 0
          %v540 = vsel %vm350, %v437, 0
          %vm542 = vcmask 1043456
          %v544 = vsel %vm542, %v438, 0
          %546 = vmatprep.subr.mxu0 0.0
          %547 = vmatpush1.msra.mxu0 %v544
          %548 = vmatprep.subr.mxu0 0.0
          %549 = vmatpush1.msra.mxu0 0.0
          %550 = vmatprep.subr.mxu0 0.0
          %551 = vmatpush1.msra.mxu0 0.0
          %552 = vmatprep.subr.mxu0 0.0
          %553 = vmatpush1.msra.mxu0 0.0
          %554 = vmatprep.subr.mxu0 0.0
          %555 = vmatpush1.msra.mxu0 0.0
          %556 = vmatprep.subr.mxu0 0.0
          %557 = vmatpush1.msra.mxu0 0.0
          %558 = vmatprep.subr.mxu0 0.0
          %559 = vmatpush1.msra.mxu0 0.0
          %560 = vmatprep.subr.mxu0 0.0
          %561 = vmatpush1.msra.mxu0 0.0
          %562 = vmatprep.subr.mxu0 0.0
          %563 = vmatpush1.msra.mxu0 0.0
          %564 = vmatprep.subr.mxu0 0.0
          %565 = vmatpush1.msra.mxu0 0.0
          %566 = vmatprep.subr.mxu0 0.0
          %567 = vmatpush1.msra.mxu0 0.0
          %568 = vmatprep.subr.mxu0 0.0
          %569 = vmatpush1.msra.mxu0 0.0
          %570 = vmatprep.subr.mxu0 0.0
          %571 = vmatpush1.msra.mxu0 0.0
          %572 = vmatprep.subr.mxu0 0.0
          %573 = vmatpush1.msra.mxu0 0.0
          %574 = vmatprep.subr.mxu0 0.0
          %575 = vmatpush1.msra.mxu0 0.0
          %576 = vmatprep.subr.mxu0 0.0
          %577 = vmatpush1.msra.mxu0 0.0
          %578 = vmatprep.subr.mxu0 0.0
          %579 = vmatpush1.msra.mxu0 0.0
          %580 = vmatprep.subr.mxu0 0.0
          %581 = vmatpush1.msra.mxu0 0.0
          %582 = vmatprep.subr.mxu0 0.0
          %583 = vmatpush1.msra.mxu0 0.0
          %584 = vmatprep.subr.mxu0 0.0
          %585 = vmatpush1.msra.mxu0 0.0
          %586 = vmatprep.subr.mxu0 0.0
          %587 = vmatpush1.msra.mxu0 0.0
          %588 = vmatprep.subr.mxu0 0.0
          %589 = vmatpush1.msra.mxu0 0.0
          %590 = vmatprep.subr.mxu0 0.0
          %591 = vmatpush1.msra.mxu0 0.0
          %592 = vmatprep.subr.mxu0 0.0
          %593 = vmatpush1.msra.mxu0 0.0
          %594 = vmatprep.subr.mxu0 0.0
          %595 = vmatpush1.msra.mxu0 0.0
          %596 = vmatprep.subr.mxu0 0.0
          %597 = vmatpush1.msra.mxu0 0.0
          %598 = vmatprep.subr.mxu0 0.0
          %599 = vmatpush1.msra.mxu0 0.0
          %600 = vmatprep.subr.mxu0 0.0
          %601 = vmatpush1.msra.mxu0 0.0
          %602 = vmatprep.subr.mxu0 0.0
          %603 = vmatpush1.msra.mxu0 0.0
          %604 = vmatprep.subr.mxu0 0.0
          %605 = vmatpush1.msra.mxu0 0.0
          %606 = vmatprep.subr.mxu0 0.0
          %607 = vmatpush1.msra.mxu0 0.0
          %608 = vmatprep.subr.mxu0 0.0
          %609 = vmatpush1.msra.mxu0 0.0
          %610 = vmatprep.mubr.f32.mxu0 0.0
          %611 = vmatmul.mubr.f32.gmra.mrb[0].mxu0 %v447
          %v612 = vpop.f32.mrb[0].mxu0
          %v613 = vadd.f32 %v444, %v612
          %v614 = vpop.f32.mrb[0].mxu0
          %615 = vmatprep.mubr.f32.mxu0 0.0
          %616 = vmatmul.mubr.f32.gmra.mrb[0].mxu0 %v450
          %v617 = vpop.f32.mrb[0].mxu0
          %v618 = vadd.f32 %v444, %v617
          %v619 = vpop.f32.mrb[0].mxu0
          %620 = vmatprep.mubr.f32.mxu0 0.0
          %621 = vmatmul.mubr.f32.gmra.mrb[0].mxu0 %v453
          %v622 = vpop.f32.mrb[0].mxu0
          %v623 = vadd.f32 %v444, %v622
          %v624 = vpop.f32.mrb[0].mxu0
          %625 = vmatprep.mubr.f32.mxu0 0.0
          %626 = vmatmul.mubr.f32.gmra.mrb[0].mxu0 %v456
          %v627 = vpop.f32.mrb[0].mxu0
          %v628 = vadd.f32 %v444, %v627
          %v629 = vpop.f32.mrb[0].mxu0
          %630 = vmatprep.mubr.f32.mxu0 0.0
          %631 = vmatmul.mubr.f32.gmra.mrb[0].mxu0 %v459
          %v632 = vpop.f32.mrb[0].mxu0
          %v633 = vadd.f32 %v444, %v632
          %v634 = vpop.f32.mrb[0].mxu0
          %635 = vmatprep.mubr.f32.mxu0 0.0
          %636 = vmatmul.mubr.f32.gmra.mrb[0].mxu0 %v462
          %v637 = vpop.f32.mrb[0].mxu0
          %v638 = vadd.f32 %v444, %v637
          %v639 = vpop.f32.mrb[0].mxu0
          %640 = vmatprep.mubr.f32.mxu0 0.0
          %641 = vmatmul.mubr.f32.gmra.mrb[0].mxu0 %v465
          %v642 = vpop.f32.mrb[0].mxu0
          %v643 = vadd.f32 %v444, %v642
          %v644 = vpop.f32.mrb[0].mxu0
          %645 = vmatprep.mubr.f32.mxu0 0.0
          %646 = vmatmul.mubr.f32.gmra.mrb[0].mxu0 %v468
          %v647 = vpop.f32.mrb[0].mxu0
          %v648 = vadd.f32 %v444, %v647
          %v649 = vpop.f32.mrb[0].mxu0
          %650 = vmatprep.mubr.f32.mxu0 0.0
          %651 = vmatmul.mubr.f32.gmra.mrb[0].mxu0 %v471
          %v652 = vpop.f32.mrb[0].mxu0
          %v653 = vadd.f32 %v444, %v652
          %v654 = vpop.f32.mrb[0].mxu0
          %655 = vmatprep.mubr.f32.mxu0 0.0
          %656 = vmatmul.mubr.f32.gmra.mrb[0].mxu0 %v474
          %v657 = vpop.f32.mrb[0].mxu0
          %v658 = vadd.f32 %v444, %v657
          %v659 = vpop.f32.mrb[0].mxu0
          %660 = vmatprep.mubr.f32.mxu0 0.0
          %661 = vmatmul.mubr.f32.gmra.mrb[0].mxu0 %v477
          %v662 = vpop.f32.mrb[0].mxu0
          %v663 = vadd.f32 %v444, %v662
          %v664 = vpop.f32.mrb[0].mxu0
          %665 = vmatprep.mubr.f32.mxu0 0.0
          %666 = vmatmul.mubr.f32.gmra.mrb[0].mxu0 %v480
          %v667 = vpop.f32.mrb[0].mxu0
          %v668 = vadd.f32 %v444, %v667
          %v669 = vpop.f32.mrb[0].mxu0
          %670 = vmatprep.mubr.f32.mxu0 0.0
          %671 = vmatmul.mubr.f32.gmra.mrb[0].mxu0 %v483
          %v672 = vpop.f32.mrb[0].mxu0
          %v673 = vadd.f32 %v444, %v672
          %v674 = vpop.f32.mrb[0].mxu0
          %675 = vmatprep.mubr.f32.mxu0 0.0
          %676 = vmatmul.mubr.f32.gmra.mrb[0].mxu0 %v486
          %v677 = vpop.f32.mrb[0].mxu0
          %v678 = vadd.f32 %v444, %v677
          %v679 = vpop.f32.mrb[0].mxu0
          %680 = vmatprep.mubr.f32.mxu0 0.0
          %681 = vmatmul.mubr.f32.gmra.mrb[0].mxu0 %v489
          %v682 = vpop.f32.mrb[0].mxu0
          %v683 = vadd.f32 %v444, %v682
          %v684 = vpop.f32.mrb[0].mxu0
          %685 = vmatprep.mubr.f32.mxu0 0.0
          %686 = vmatmul.mubr.f32.gmra.mrb[0].mxu0 %v492
          %v687 = vpop.f32.mrb[0].mxu0
          %v688 = vadd.f32 %v444, %v687
          %v689 = vpop.f32.mrb[0].mxu0
          %690 = vmatprep.mubr.f32.mxu0 0.0
          %691 = vmatmul.mubr.f32.gmra.mrb[0].mxu0 %v495
          %v692 = vpop.f32.mrb[0].mxu0
          %v693 = vadd.f32 %v444, %v692
          %v694 = vpop.f32.mrb[0].mxu0
          %695 = vmatprep.mubr.f32.mxu0 0.0
          %696 = vmatmul.mubr.f32.gmra.mrb[0].mxu0 %v498
          %v697 = vpop.f32.mrb[0].mxu0
          %v698 = vadd.f32 %v444, %v697
          %v699 = vpop.f32.mrb[0].mxu0
          %700 = vmatprep.mubr.f32.mxu0 0.0
          %701 = vmatmul.mubr.f32.gmra.mrb[0].mxu0 %v501
          %v702 = vpop.f32.mrb[0].mxu0
          %v703 = vadd.f32 %v444, %v702
          %v704 = vpop.f32.mrb[0].mxu0
          %705 = vmatprep.mubr.f32.mxu0 0.0
          %706 = vmatmul.mubr.f32.gmra.mrb[0].mxu0 %v504
          %v707 = vpop.f32.mrb[0].mxu0
          %v708 = vadd.f32 %v444, %v707
          %v709 = vpop.f32.mrb[0].mxu0
          %710 = vmatprep.mubr.f32.mxu0 0.0
          %711 = vmatmul.mubr.f32.gmra.mrb[0].mxu0 %v507
          %v712 = vpop.f32.mrb[0].mxu0
          %v713 = vadd.f32 %v444, %v712
          %v714 = vpop.f32.mrb[0].mxu0
          %715 = vmatprep.mubr.f32.mxu0 0.0
          %716 = vmatmul.mubr.f32.gmra.mrb[0].mxu0 %v510
          %v717 = vpop.f32.mrb[0].mxu0
          %v718 = vadd.f32 %v444, %v717
          %v719 = vpop.f32.mrb[0].mxu0
          %720 = vmatprep.mubr.f32.mxu0 0.0
          %721 = vmatmul.mubr.f32.gmra.mrb[0].mxu0 %v513
          %v722 = vpop.f32.mrb[0].mxu0
          %v723 = vadd.f32 %v444, %v722
          %v724 = vpop.f32.mrb[0].mxu0
          %725 = vmatprep.mubr.f32.mxu0 0.0
          %726 = vmatmul.mubr.f32.gmra.mrb[0].mxu0 %v516
          %v727 = vpop.f32.mrb[0].mxu0
          %v728 = vadd.f32 %v444, %v727
          %v729 = vpop.f32.mrb[0].mxu0
          %730 = vmatprep.mubr.f32.mxu0 0.0
          %731 = vmatmul.mubr.f32.gmra.mrb[0].mxu0 %v519
          %v732 = vpop.f32.mrb[0].mxu0
          %v733 = vadd.f32 %v444, %v732
          %v734 = vpop.f32.mrb[0].mxu0
          %735 = vmatprep.mubr.f32.mxu0 0.0
          %736 = vmatmul.mubr.f32.gmra.mrb[0].mxu0 %v522
          %v737 = vpop.f32.mrb[0].mxu0
          %v738 = vadd.f32 %v444, %v737
          %v739 = vpop.f32.mrb[0].mxu0
          %740 = vmatprep.mubr.f32.mxu0 0.0
          %741 = vmatmul.mubr.f32.gmra.mrb[0].mxu0 %v525
          %v742 = vpop.f32.mrb[0].mxu0
          %v743 = vadd.f32 %v444, %v742
          %v744 = vpop.f32.mrb[0].mxu0
          %745 = vmatprep.mubr.f32.mxu0 0.0
          %746 = vmatmul.mubr.f32.gmra.mrb[0].mxu0 %v528
          %v747 = vpop.f32.mrb[0].mxu0
          %v748 = vadd.f32 %v444, %v747
          %v749 = vpop.f32.mrb[0].mxu0
          %750 = vmatprep.mubr.f32.mxu0 0.0
          %751 = vmatmul.mubr.f32.gmra.mrb[0].mxu0 %v531
          %v752 = vpop.f32.mrb[0].mxu0
          %v753 = vadd.f32 %v444, %v752
          %v754 = vpop.f32.mrb[0].mxu0
          %755 = vmatprep.mubr.f32.mxu0 0.0
          %756 = vmatmul.mubr.f32.gmra.mrb[0].mxu0 %v534
          %v757 = vpop.f32.mrb[0].mxu0
          %v758 = vadd.f32 %v444, %v757
          %v759 = vpop.f32.mrb[0].mxu0
          %760 = vmatprep.mubr.f32.mxu0 0.0
          %761 = vmatmul.mubr.f32.gmra.mrb[0].mxu0 %v537
          %v762 = vpop.f32.mrb[0].mxu0
          %v763 = vadd.f32 %v444, %v762
          %v764 = vpop.f32.mrb[0].mxu0
          %765 = vmatprep.mubr.f32.mxu0 0.0
          %766 = vmatmul.mubr.f32.gmra.mrb[0].mxu0 %v540
          %v767 = vpop.f32.mrb[0].mxu0
          %v768 = vadd.f32 %v444, %v767
          %v769 = vpop.f32.mrb[0].mxu0
          %770 = vdwg.mxu0
          %v771 = vmax.f32 %v613, 0.0
          %v772 = vmax.f32 %v618, 0.0
          %v773 = vmax.f32 %v623, 0.0
          %v774 = vmax.f32 %v628, 0.0
          %v775 = vmax.f32 %v633, 0.0
          %v776 = vmax.f32 %v638, 0.0
          %v777 = vmax.f32 %v643, 0.0
          %v778 = vmax.f32 %v648, 0.0
          %v779 = vmax.f32 %v653, 0.0
          %v780 = vmax.f32 %v658, 0.0
          %v781 = vmax.f32 %v663, 0.0
          %v782 = vmax.f32 %v668, 0.0
          %v783 = vmax.f32 %v673, 0.0
          %v784 = vmax.f32 %v678, 0.0
          %v785 = vmax.f32 %v683, 0.0
          %v786 = vmax.f32 %v688, 0.0
          %v787 = vmax.f32 %v693, 0.0
          %v788 = vmax.f32 %v698, 0.0
          %v789 = vmax.f32 %v703, 0.0
          %v790 = vmax.f32 %v708, 0.0
          %v791 = vmax.f32 %v713, 0.0
          %v792 = vmax.f32 %v718, 0.0
          %v793 = vmax.f32 %v723, 0.0
          %v794 = vmax.f32 %v728, 0.0
          %v795 = vmax.f32 %v733, 0.0
          %v796 = vmax.f32 %v738, 0.0
          %v797 = vmax.f32 %v743, 0.0
          %v798 = vmax.f32 %v748, 0.0
          %v799 = vmax.f32 %v753, 0.0
          %v800 = vmax.f32 %v758, 0.0
          %v801 = vmax.f32 %v763, 0.0
          %v802 = vmax.f32 %v768, 0.0
          %s803 = scalar_lea.vmem [#allocation2], 24
          %804 = vst.msk [vmem:[%s803 + $0x1] sm:$0xff] %vm350, %v771
          %805 = vst.msk [vmem:[%s803 + $0x9] sm:$0xff] %vm350, %v772
          %806 = vst.msk [vmem:[%s803 + $0x19] sm:$0xff] %vm350, %v773
          %807 = vst.msk [vmem:[%s803 + $0x21] sm:$0xff] %vm350, %v774
          %808 = vst.msk [vmem:[%s803 + $0x31] sm:$0xff] %vm350, %v775
          %809 = vst.msk [vmem:[%s803 + $0x39] sm:$0xff] %vm350, %v776
          %810 = vst.msk [vmem:[%s803 + $0x49] sm:$0xff] %vm350, %v777
          %811 = vst.msk [vmem:[%s803 + $0x51] sm:$0xff] %vm350, %v778
          %812 = vst.msk [vmem:[%s803 + $0x61] sm:$0xff] %vm350, %v779
          %813 = vst.msk [vmem:[%s803 + $0x69] sm:$0xff] %vm350, %v780
          %814 = vst.msk [vmem:[%s803 + $0x79] sm:$0xff] %vm350, %v781
          %815 = vst.msk [vmem:[%s803 + $0x81] sm:$0xff] %vm350, %v782
          %816 = vst.msk [vmem:[%s803 + $0x91] sm:$0xff] %vm350, %v783
          %817 = vst.msk [vmem:[%s803 + $0x99] sm:$0xff] %vm350, %v784
          %818 = vst.msk [vmem:[%s803 + $0xa9] sm:$0xff] %vm350, %v785
          %819 = vst.msk [vmem:[%s803 + $0xb1] sm:$0xff] %vm350, %v786
          %820 = vst.msk [vmem:[%s803 + $0xc1] sm:$0xff] %vm350, %v787
          %821 = vst.msk [vmem:[%s803 + $0xc9] sm:$0xff] %vm350, %v788
          %822 = vst.msk [vmem:[%s803 + $0xd9] sm:$0xff] %vm350, %v789
          %823 = vst.msk [vmem:[%s803 + $0xe1] sm:$0xff] %vm350, %v790
          %824 = vst.msk [vmem:[%s803 + $0xf1] sm:$0xff] %vm350, %v791
          %825 = vst.msk [vmem:[%s803 + $0xf9] sm:$0xff] %vm350, %v792
          %826 = vst.msk [vmem:[%s803 + $0x109] sm:$0xff] %vm350, %v793
          %827 = vst.msk [vmem:[%s803 + $0x111] sm:$0xff] %vm350, %v794
          %828 = vst.msk [vmem:[%s803 + $0x121] sm:$0xff] %vm350, %v795
          %829 = vst.msk [vmem:[%s803 + $0x129] sm:$0xff] %vm350, %v796
          %830 = vst.msk [vmem:[%s803 + $0x139] sm:$0xff] %vm350, %v797
          %831 = vst.msk [vmem:[%s803 + $0x141] sm:$0xff] %vm350, %v798
          %832 = vst.msk [vmem:[%s803 + $0x151] sm:$0xff] %vm350, %v799
          %833 = vst.msk [vmem:[%s803 + $0x159] sm:$0xff] %vm350, %v800
          %834 = vst.msk [vmem:[%s803 + $0x169] sm:$0xff] %vm350, %v801
          %835 = vst.msk [vmem:[%s803 + $0x171] sm:$0xff] %vm350, %v802
        $region60: #{tpu_custom_call.1} parent=55 // pred_fallthru
          _
        %s836 = smul.u32 %s28, 8
        %s837 = smul.u32 %s836, 24
        %s838 = scalar_lea.vmem [#allocation2], %s837
        %v839 = vld [vmem:[%s838] sm:$0xff]
        %v840 = vld [vmem:[%s838 + $0x8] sm:$0xff]
        %v841 = vld [vmem:[%s838 + $0x10] sm:$0x3]
        %v842 = vld [vmem:[%s838 + $0x18] sm:$0xff]
        %v843 = vld [vmem:[%s838 + $0x20] sm:$0xff]
        %v844 = vld [vmem:[%s838 + $0x28] sm:$0x3]
        %v845 = vld [vmem:[%s838 + $0x30] sm:$0xff]
        %v846 = vld [vmem:[%s838 + $0x38] sm:$0xff]
        %v847 = vld [vmem:[%s838 + $0x40] sm:$0x3]
        %v848 = vld [vmem:[%s838 + $0x48] sm:$0xff]
        %v849 = vld [vmem:[%s838 + $0x50] sm:$0xff]
        %v850 = vld [vmem:[%s838 + $0x58] sm:$0x3]
        %v851 = vld [vmem:[%s838 + $0x60] sm:$0xff]
        %v852 = vld [vmem:[%s838 + $0x68] sm:$0xff]
        %v853 = vld [vmem:[%s838 + $0x70] sm:$0x3]
        %v854 = vld [vmem:[%s838 + $0x78] sm:$0xff]
        %v855 = vld [vmem:[%s838 + $0x80] sm:$0xff]
        %v856 = vld [vmem:[%s838 + $0x88] sm:$0x3]
        %v857 = vld [vmem:[%s838 + $0x90] sm:$0xff]
        %v858 = vld [vmem:[%s838 + $0x98] sm:$0xff]
        %v859 = vld [vmem:[%s838 + $0xa0] sm:$0x3]
        %v860 = vld [vmem:[%s838 + $0xa8] sm:$0xff]
        %v861 = vld [vmem:[%s838 + $0xb0] sm:$0xff]
        %v862 = vld [vmem:[%s838 + $0xb8] sm:$0x3]
        %v863 = vld [vmem:[%s3] sm:$0xf]
        %vm888 = vcmask 1046528
        %v889 = vrot.slane %v839, 1
        %v890 = vrot.slane %v840, 1
        %v891 = vsel %vm888, %v889, %v890
        %v892 = vrot.slane %v841, 1
        %v893 = vsel %vm888, %v890, %v892
        %v894 = vrot.slane %v842, 1
        %v895 = vrot.slane %v843, 1
        %v896 = vsel %vm888, %v894, %v895
        %v897 = vrot.slane %v844, 1
        %v898 = vsel %vm888, %v895, %v897
        %v899 = vrot.slane %v845, 1
        %v900 = vrot.slane %v846, 1
        %v901 = vsel %vm888, %v899, %v900
        %v902 = vrot.slane %v847, 1
        %v903 = vsel %vm888, %v900, %v902
        %v904 = vrot.slane %v848, 1
        %v905 = vrot.slane %v849, 1
        %v906 = vsel %vm888, %v904, %v905
        %v907 = vrot.slane %v850, 1
        %v908 = vsel %vm888, %v905, %v907
        %v909 = vrot.slane %v851, 1
        %v910 = vrot.slane %v852, 1
        %v911 = vsel %vm888, %v909, %v910
        %v912 = vrot.slane %v853, 1
        %v913 = vsel %vm888, %v910, %v912
        %v914 = vrot.slane %v854, 1
        %v915 = vrot.slane %v855, 1
        %v916 = vsel %vm888, %v914, %v915
        %v917 = vrot.slane %v856, 1
        %v918 = vsel %vm888, %v915, %v917
        %v919 = vrot.slane %v857, 1
        %v920 = vrot.slane %v858, 1
        %v921 = vsel %vm888, %v919, %v920
        %v922 = vrot.slane %v859, 1
        %v923 = vsel %vm888, %v920, %v922
        %v924 = vrot.slane %v860, 1
        %v925 = vrot.slane %v861, 1
        %v926 = vsel %vm888, %v924, %v925
        %v927 = vrot.slane %v862, 1
        %v928 = vsel %vm888, %v925, %v927
        %s929 = scalar_lea.vmem %s3, 4
        %v930 = vld [vmem:[%s929] sm:$0xf]
        %vm931 = vcmask 31744
        %v932 = vsel %vm931, %v891, 0
        %v934 = vsel %vm931, %v893, 0
        %v936 = vsel %vm931, %v896, 0
        %v938 = vsel %vm931, %v898, 0
        %v940 = vsel %vm931, %v901, 0
        %v942 = vsel %vm931, %v903, 0
        %v944 = vsel %vm931, %v906, 0
        %v946 = vsel %vm931, %v908, 0
        %v948 = vsel %vm931, %v911, 0
        %v950 = vsel %vm931, %v913, 0
        %v952 = vsel %vm931, %v916, 0
        %v954 = vsel %vm931, %v918, 0
        %v956 = vsel %vm931, %v921, 0
        %v958 = vsel %vm931, %v923, 0
        %v960 = vsel %vm931, %v926, 0
        %v962 = vsel %vm931, %v928, 0
        %vm964 = vcmask 1043456
        %v966 = vsel %vm964, %v930, 0
        %968 = vmatprep.subr.mxu0 0.0
        %969 = vmatpush1.msra.mxu0 %v966
        %970 = vmatprep.subr.mxu0 0.0
        %971 = vmatpush1.msra.mxu0 0.0
        %972 = vmatprep.subr.mxu0 0.0
        %973 = vmatpush1.msra.mxu0 0.0
        %974 = vmatprep.subr.mxu0 0.0
        %975 = vmatpush1.msra.mxu0 0.0
        %976 = vmatprep.subr.mxu0 0.0
        %977 = vmatpush1.msra.mxu0 0.0
        %978 = vmatprep.subr.mxu0 0.0
        %979 = vmatpush1.msra.mxu0 0.0
        %980 = vmatprep.subr.mxu0 0.0
        %981 = vmatpush1.msra.mxu0 0.0
        %982 = vmatprep.subr.mxu0 0.0
        %983 = vmatpush1.msra.mxu0 0.0
        %984 = vmatprep.subr.mxu0 0.0
        %985 = vmatpush1.msra.mxu0 0.0
        %986 = vmatprep.subr.mxu0 0.0
        %987 = vmatpush1.msra.mxu0 0.0
        %988 = vmatprep.subr.mxu0 0.0
        %989 = vmatpush1.msra.mxu0 0.0
        %990 = vmatprep.subr.mxu0 0.0
        %991 = vmatpush1.msra.mxu0 0.0
        %992 = vmatprep.subr.mxu0 0.0
        %993 = vmatpush1.msra.mxu0 0.0
        %994 = vmatprep.subr.mxu0 0.0
        %995 = vmatpush1.msra.mxu0 0.0
        %996 = vmatprep.subr.mxu0 0.0
        %997 = vmatpush1.msra.mxu0 0.0
        %998 = vmatprep.subr.mxu0 0.0
        %999 = vmatpush1.msra.mxu0 0.0
        %1000 = vmatprep.subr.mxu0 0.0
        %1001 = vmatpush1.msra.mxu0 0.0
        %1002 = vmatprep.subr.mxu0 0.0
        %1003 = vmatpush1.msra.mxu0 0.0
        %1004 = vmatprep.subr.mxu0 0.0
        %1005 = vmatpush1.msra.mxu0 0.0
        %1006 = vmatprep.subr.mxu0 0.0
        %1007 = vmatpush1.msra.mxu0 0.0
        %1008 = vmatprep.subr.mxu0 0.0
        %1009 = vmatpush1.msra.mxu0 0.0
        %1010 = vmatprep.subr.mxu0 0.0
        %1011 = vmatpush1.msra.mxu0 0.0
        %1012 = vmatprep.subr.mxu0 0.0
        %1013 = vmatpush1.msra.mxu0 0.0
        %1014 = vmatprep.subr.mxu0 0.0
        %1015 = vmatpush1.msra.mxu0 0.0
        %1016 = vmatprep.subr.mxu0 0.0
        %1017 = vmatpush1.msra.mxu0 0.0
        %1018 = vmatprep.subr.mxu0 0.0
        %1019 = vmatpush1.msra.mxu0 0.0
        %1020 = vmatprep.subr.mxu0 0.0
        %1021 = vmatpush1.msra.mxu0 0.0
        %1022 = vmatprep.subr.mxu0 0.0
        %1023 = vmatpush1.msra.mxu0 0.0
        %1024 = vmatprep.subr.mxu0 0.0
        %1025 = vmatpush1.msra.mxu0 0.0
        %1026 = vmatprep.subr.mxu0 0.0
        %1027 = vmatpush1.msra.mxu0 0.0
        %1028 = vmatprep.subr.mxu0 0.0
        %1029 = vmatpush1.msra.mxu0 0.0
        %1030 = vmatprep.subr.mxu0 0.0
        %1031 = vmatpush1.msra.mxu0 0.0
        %1032 = vmatprep.mubr.f32.mxu0 0.0
        %1033 = vmatmul.mubr.f32.gmra.mrb[0].mxu0 %v932
        %v1034 = vpop.f32.mrb[0].mxu0
        %v1035 = vadd.f32 0.0, %v1034
        %v1036 = vpop.f32.mrb[0].mxu0
        %1037 = vmatprep.mubr.f32.mxu0 0.0
        %1038 = vmatmul.mubr.f32.gmra.mrb[0].mxu0 %v934
        %v1039 = vpop.f32.mrb[0].mxu0
        %v1040 = vadd.f32 0.0, %v1039
        %v1041 = vpop.f32.mrb[0].mxu0
        %1042 = vmatprep.mubr.f32.mxu0 0.0
        %1043 = vmatmul.mubr.f32.gmra.mrb[0].mxu0 %v936
        %v1044 = vpop.f32.mrb[0].mxu0
        %v1045 = vadd.f32 0.0, %v1044
        %v1046 = vpop.f32.mrb[0].mxu0
        %1047 = vmatprep.mubr.f32.mxu0 0.0
        %1048 = vmatmul.mubr.f32.gmra.mrb[0].mxu0 %v938
        %v1049 = vpop.f32.mrb[0].mxu0
        %v1050 = vadd.f32 0.0, %v1049
        %v1051 = vpop.f32.mrb[0].mxu0
        %1052 = vmatprep.mubr.f32.mxu0 0.0
        %1053 = vmatmul.mubr.f32.gmra.mrb[0].mxu0 %v940
        %v1054 = vpop.f32.mrb[0].mxu0
        %v1055 = vadd.f32 0.0, %v1054
        %v1056 = vpop.f32.mrb[0].mxu0
        %1057 = vmatprep.mubr.f32.mxu0 0.0
        %1058 = vmatmul.mubr.f32.gmra.mrb[0].mxu0 %v942
        %v1059 = vpop.f32.mrb[0].mxu0
        %v1060 = vadd.f32 0.0, %v1059
        %v1061 = vpop.f32.mrb[0].mxu0
        %1062 = vmatprep.mubr.f32.mxu0 0.0
        %1063 = vmatmul.mubr.f32.gmra.mrb[0].mxu0 %v944
        %v1064 = vpop.f32.mrb[0].mxu0
        %v1065 = vadd.f32 0.0, %v1064
        %v1066 = vpop.f32.mrb[0].mxu0
        %1067 = vmatprep.mubr.f32.mxu0 0.0
        %1068 = vmatmul.mubr.f32.gmra.mrb[0].mxu0 %v946
        %v1069 = vpop.f32.mrb[0].mxu0
        %v1070 = vadd.f32 0.0, %v1069
        %v1071 = vpop.f32.mrb[0].mxu0
        %1072 = vmatprep.mubr.f32.mxu0 0.0
        %1073 = vmatmul.mubr.f32.gmra.mrb[0].mxu0 %v948
        %v1074 = vpop.f32.mrb[0].mxu0
        %v1075 = vadd.f32 0.0, %v1074
        %v1076 = vpop.f32.mrb[0].mxu0
        %1077 = vmatprep.mubr.f32.mxu0 0.0
        %1078 = vmatmul.mubr.f32.gmra.mrb[0].mxu0 %v950
        %v1079 = vpop.f32.mrb[0].mxu0
        %v1080 = vadd.f32 0.0, %v1079
        %v1081 = vpop.f32.mrb[0].mxu0
        %1082 = vmatprep.mubr.f32.mxu0 0.0
        %1083 = vmatmul.mubr.f32.gmra.mrb[0].mxu0 %v952
        %v1084 = vpop.f32.mrb[0].mxu0
        %v1085 = vadd.f32 0.0, %v1084
        %v1086 = vpop.f32.mrb[0].mxu0
        %1087 = vmatprep.mubr.f32.mxu0 0.0
        %1088 = vmatmul.mubr.f32.gmra.mrb[0].mxu0 %v954
        %v1089 = vpop.f32.mrb[0].mxu0
        %v1090 = vadd.f32 0.0, %v1089
        %v1091 = vpop.f32.mrb[0].mxu0
        %1092 = vmatprep.mubr.f32.mxu0 0.0
        %1093 = vmatmul.mubr.f32.gmra.mrb[0].mxu0 %v956
        %v1094 = vpop.f32.mrb[0].mxu0
        %v1095 = vadd.f32 0.0, %v1094
        %v1096 = vpop.f32.mrb[0].mxu0
        %1097 = vmatprep.mubr.f32.mxu0 0.0
        %1098 = vmatmul.mubr.f32.gmra.mrb[0].mxu0 %v958
        %v1099 = vpop.f32.mrb[0].mxu0
        %v1100 = vadd.f32 0.0, %v1099
        %v1101 = vpop.f32.mrb[0].mxu0
        %1102 = vmatprep.mubr.f32.mxu0 0.0
        %1103 = vmatmul.mubr.f32.gmra.mrb[0].mxu0 %v960
        %v1104 = vpop.f32.mrb[0].mxu0
        %v1105 = vadd.f32 0.0, %v1104
        %v1106 = vpop.f32.mrb[0].mxu0
        %1107 = vmatprep.mubr.f32.mxu0 0.0
        %1108 = vmatmul.mubr.f32.gmra.mrb[0].mxu0 %v962
        %v1109 = vpop.f32.mrb[0].mxu0
        %v1110 = vadd.f32 0.0, %v1109
        %v1111 = vpop.f32.mrb[0].mxu0
        %1112 = vdwg.mxu0
        %v1113 = vsel %vm931, %v839, 0
        %v1115 = vsel %vm931, %v840, 0
        %v1117 = vsel %vm931, %v842, 0
        %v1119 = vsel %vm931, %v843, 0
        %v1121 = vsel %vm931, %v845, 0
        %v1123 = vsel %vm931, %v846, 0
        %v1125 = vsel %vm931, %v848, 0
        %v1127 = vsel %vm931, %v849, 0
        %v1129 = vsel %vm931, %v851, 0
        %v1131 = vsel %vm931, %v852, 0
        %v1133 = vsel %vm931, %v854, 0
        %v1135 = vsel %vm931, %v855, 0
        %v1137 = vsel %vm931, %v857, 0
        %v1139 = vsel %vm931, %v858, 0
        %v1141 = vsel %vm931, %v860, 0
        %v1143 = vsel %vm931, %v861, 0
        %v1146 = vsel %vm964, %v863, 0
        %1148 = vmatprep.subr.mxu0 0.0
        %1149 = vmatpush1.msra.mxu0 %v1146
        %1150 = vmatprep.subr.mxu0 0.0
        %1151 = vmatpush1.msra.mxu0 0.0
        %1152 = vmatprep.subr.mxu0 0.0
        %1153 = vmatpush1.msra.mxu0 0.0
        %1154 = vmatprep.subr.mxu0 0.0
        %1155 = vmatpush1.msra.mxu0 0.0
        %1156 = vmatprep.subr.mxu0 0.0
        %1157 = vmatpush1.msra.mxu0 0.0
        %1158 = vmatprep.subr.mxu0 0.0
        %1159 = vmatpush1.msra.mxu0 0.0
        %1160 = vmatprep.subr.mxu0 0.0
        %1161 = vmatpush1.msra.mxu0 0.0
        %1162 = vmatprep.subr.mxu0 0.0
        %1163 = vmatpush1.msra.mxu0 0.0
        %1164 = vmatprep.subr.mxu0 0.0
        %1165 = vmatpush1.msra.mxu0 0.0
        %1166 = vmatprep.subr.mxu0 0.0
        %1167 = vmatpush1.msra.mxu0 0.0
        %1168 = vmatprep.subr.mxu0 0.0
        %1169 = vmatpush1.msra.mxu0 0.0
        %1170 = vmatprep.subr.mxu0 0.0
        %1171 = vmatpush1.msra.mxu0 0.0
        %1172 = vmatprep.subr.mxu0 0.0
        %1173 = vmatpush1.msra.mxu0 0.0
        %1174 = vmatprep.subr.mxu0 0.0
        %1175 = vmatpush1.msra.mxu0 0.0
        %1176 = vmatprep.subr.mxu0 0.0
        %1177 = vmatpush1.msra.mxu0 0.0
        %1178 = vmatprep.subr.mxu0 0.0
        %1179 = vmatpush1.msra.mxu0 0.0
        %1180 = vmatprep.subr.mxu0 0.0
        %1181 = vmatpush1.msra.mxu0 0.0
        %1182 = vmatprep.subr.mxu0 0.0
        %1183 = vmatpush1.msra.mxu0 0.0
        %1184 = vmatprep.subr.mxu0 0.0
        %1185 = vmatpush1.msra.mxu0 0.0
        %1186 = vmatprep.subr.mxu0 0.0
        %1187 = vmatpush1.msra.mxu0 0.0
        %1188 = vmatprep.subr.mxu0 0.0
        %1189 = vmatpush1.msra.mxu0 0.0
        %1190 = vmatprep.subr.mxu0 0.0
        %1191 = vmatpush1.msra.mxu0 0.0
        %1192 = vmatprep.subr.mxu0 0.0
        %1193 = vmatpush1.msra.mxu0 0.0
        %1194 = vmatprep.subr.mxu0 0.0
        %1195 = vmatpush1.msra.mxu0 0.0
        %1196 = vmatprep.subr.mxu0 0.0
        %1197 = vmatpush1.msra.mxu0 0.0
        %1198 = vmatprep.subr.mxu0 0.0
        %1199 = vmatpush1.msra.mxu0 0.0
        %1200 = vmatprep.subr.mxu0 0.0
        %1201 = vmatpush1.msra.mxu0 0.0
        %1202 = vmatprep.subr.mxu0 0.0
        %1203 = vmatpush1.msra.mxu0 0.0
        %1204 = vmatprep.subr.mxu0 0.0
        %1205 = vmatpush1.msra.mxu0 0.0
        %1206 = vmatprep.subr.mxu0 0.0
        %1207 = vmatpush1.msra.mxu0 0.0
        %1208 = vmatprep.subr.mxu0 0.0
        %1209 = vmatpush1.msra.mxu0 0.0
        %1210 = vmatprep.subr.mxu0 0.0
        %1211 = vmatpush1.msra.mxu0 0.0
        %1212 = vmatprep.mubr.f32.mxu0 0.0
        %1213 = vmatmul.mubr.f32.gmra.mrb[0].mxu0 %v1113
        %v1214 = vpop.f32.mrb[0].mxu0
        %v1215 = vadd.f32 %v1035, %v1214
        %v1216 = vpop.f32.mrb[0].mxu0
        %1217 = vmatprep.mubr.f32.mxu0 0.0
        %1218 = vmatmul.mubr.f32.gmra.mrb[0].mxu0 %v1115
        %v1219 = vpop.f32.mrb[0].mxu0
        %v1220 = vadd.f32 %v1040, %v1219
        %v1221 = vpop.f32.mrb[0].mxu0
        %1222 = vmatprep.mubr.f32.mxu0 0.0
        %1223 = vmatmul.mubr.f32.gmra.mrb[0].mxu0 %v1117
        %v1224 = vpop.f32.mrb[0].mxu0
        %v1225 = vadd.f32 %v1045, %v1224
        %v1226 = vpop.f32.mrb[0].mxu0
        %1227 = vmatprep.mubr.f32.mxu0 0.0
        %1228 = vmatmul.mubr.f32.gmra.mrb[0].mxu0 %v1119
        %v1229 = vpop.f32.mrb[0].mxu0
        %v1230 = vadd.f32 %v1050, %v1229
        %v1231 = vpop.f32.mrb[0].mxu0
        %1232 = vmatprep.mubr.f32.mxu0 0.0
        %1233 = vmatmul.mubr.f32.gmra.mrb[0].mxu0 %v1121
        %v1234 = vpop.f32.mrb[0].mxu0
        %v1235 = vadd.f32 %v1055, %v1234
        %v1236 = vpop.f32.mrb[0].mxu0
        %1237 = vmatprep.mubr.f32.mxu0 0.0
        %1238 = vmatmul.mubr.f32.gmra.mrb[0].mxu0 %v1123
        %v1239 = vpop.f32.mrb[0].mxu0
        %v1240 = vadd.f32 %v1060, %v1239
        %v1241 = vpop.f32.mrb[0].mxu0
        %1242 = vmatprep.mubr.f32.mxu0 0.0
        %1243 = vmatmul.mubr.f32.gmra.mrb[0].mxu0 %v1125
        %v1244 = vpop.f32.mrb[0].mxu0
        %v1245 = vadd.f32 %v1065, %v1244
        %v1246 = vpop.f32.mrb[0].mxu0
        %1247 = vmatprep.mubr.f32.mxu0 0.0
        %1248 = vmatmul.mubr.f32.gmra.mrb[0].mxu0 %v1127
        %v1249 = vpop.f32.mrb[0].mxu0
        %v1250 = vadd.f32 %v1070, %v1249
        %v1251 = vpop.f32.mrb[0].mxu0
        %1252 = vmatprep.mubr.f32.mxu0 0.0
        %1253 = vmatmul.mubr.f32.gmra.mrb[0].mxu0 %v1129
        %v1254 = vpop.f32.mrb[0].mxu0
        %v1255 = vadd.f32 %v1075, %v1254
        %v1256 = vpop.f32.mrb[0].mxu0
        %1257 = vmatprep.mubr.f32.mxu0 0.0
        %1258 = vmatmul.mubr.f32.gmra.mrb[0].mxu0 %v1131
        %v1259 = vpop.f32.mrb[0].mxu0
        %v1260 = vadd.f32 %v1080, %v1259
        %v1261 = vpop.f32.mrb[0].mxu0
        %1262 = vmatprep.mubr.f32.mxu0 0.0
        %1263 = vmatmul.mubr.f32.gmra.mrb[0].mxu0 %v1133
        %v1264 = vpop.f32.mrb[0].mxu0
        %v1265 = vadd.f32 %v1085, %v1264
        %v1266 = vpop.f32.mrb[0].mxu0
        %1267 = vmatprep.mubr.f32.mxu0 0.0
        %1268 = vmatmul.mubr.f32.gmra.mrb[0].mxu0 %v1135
        %v1269 = vpop.f32.mrb[0].mxu0
        %v1270 = vadd.f32 %v1090, %v1269
        %v1271 = vpop.f32.mrb[0].mxu0
        %1272 = vmatprep.mubr.f32.mxu0 0.0
        %1273 = vmatmul.mubr.f32.gmra.mrb[0].mxu0 %v1137
        %v1274 = vpop.f32.mrb[0].mxu0
        %v1275 = vadd.f32 %v1095, %v1274
        %v1276 = vpop.f32.mrb[0].mxu0
        %1277 = vmatprep.mubr.f32.mxu0 0.0
        %1278 = vmatmul.mubr.f32.gmra.mrb[0].mxu0 %v1139
        %v1279 = vpop.f32.mrb[0].mxu0
        %v1280 = vadd.f32 %v1100, %v1279
        %v1281 = vpop.f32.mrb[0].mxu0
        %1282 = vmatprep.mubr.f32.mxu0 0.0
        %1283 = vmatmul.mubr.f32.gmra.mrb[0].mxu0 %v1141
        %v1284 = vpop.f32.mrb[0].mxu0
        %v1285 = vadd.f32 %v1105, %v1284
        %v1286 = vpop.f32.mrb[0].mxu0
        %1287 = vmatprep.mubr.f32.mxu0 0.0
        %1288 = vmatmul.mubr.f32.gmra.mrb[0].mxu0 %v1143
        %v1289 = vpop.f32.mrb[0].mxu0
        %v1290 = vadd.f32 %v1110, %v1289
        %v1291 = vpop.f32.mrb[0].mxu0
        %1292 = vdwg.mxu0
        %vm1293 = vcmask 1045504
        %v1294 = vrot.slane %v839, 2
        %v1295 = vrot.slane %v840, 2
        %v1296 = vsel %vm1293, %v1294, %v1295
        %v1297 = vrot.slane %v841, 2
        %v1298 = vsel %vm1293, %v1295, %v1297
        %v1299 = vrot.slane %v842, 2
        %v1300 = vrot.slane %v843, 2
        %v1301 = vsel %vm1293, %v1299, %v1300
        %v1302 = vrot.slane %v844, 2
        %v1303 = vsel %vm1293, %v1300, %v1302
        %v1304 = vrot.slane %v845, 2
        %v1305 = vrot.slane %v846, 2
        %v1306 = vsel %vm1293, %v1304, %v1305
        %v1307 = vrot.slane %v847, 2
        %v1308 = vsel %vm1293, %v1305, %v1307
        %v1309 = vrot.slane %v848, 2
        %v1310 = vrot.slane %v849, 2
        %v1311 = vsel %vm1293, %v1309, %v1310
        %v1312 = vrot.slane %v850, 2
        %v1313 = vsel %vm1293, %v1310, %v1312
        %v1314 = vrot.slane %v851, 2
        %v1315 = vrot.slane %v852, 2
        %v1316 = vsel %vm1293, %v1314, %v1315
        %v1317 = vrot.slane %v853, 2
        %v1318 = vsel %vm1293, %v1315, %v1317
        %v1319 = vrot.slane %v854, 2
        %v1320 = vrot.slane %v855, 2
        %v1321 = vsel %vm1293, %v1319, %v1320
        %v1322 = vrot.slane %v856, 2
        %v1323 = vsel %vm1293, %v1320, %v1322
        %v1324 = vrot.slane %v857, 2
        %v1325 = vrot.slane %v858, 2
        %v1326 = vsel %vm1293, %v1324, %v1325
        %v1327 = vrot.slane %v859, 2
        %v1328 = vsel %vm1293, %v1325, %v1327
        %v1329 = vrot.slane %v860, 2
        %v1330 = vrot.slane %v861, 2
        %v1331 = vsel %vm1293, %v1329, %v1330
        %v1332 = vrot.slane %v862, 2
        %v1333 = vsel %vm1293, %v1330, %v1332
        %s1334 = scalar_lea.vmem %s3, 8
        %v1335 = vld [vmem:[%s1334] sm:$0xf]
        %v1336 = vsel %vm931, %v1296, 0
        %v1338 = vsel %vm931, %v1298, 0
        %v1340 = vsel %vm931, %v1301, 0
        %v1342 = vsel %vm931, %v1303, 0
        %v1344 = vsel %vm931, %v1306, 0
        %v1346 = vsel %vm931, %v1308, 0
        %v1348 = vsel %vm931, %v1311, 0
        %v1350 = vsel %vm931, %v1313, 0
        %v1352 = vsel %vm931, %v1316, 0
        %v1354 = vsel %vm931, %v1318, 0
        %v1356 = vsel %vm931, %v1321, 0
        %v1358 = vsel %vm931, %v1323, 0
        %v1360 = vsel %vm931, %v1326, 0
        %v1362 = vsel %vm931, %v1328, 0
        %v1364 = vsel %vm931, %v1331, 0
        %v1366 = vsel %vm931, %v1333, 0
        %v1369 = vsel %vm964, %v1335, 0
        %1371 = vmatprep.subr.mxu0 0.0
        %1372 = vmatpush1.msra.mxu0 %v1369
        %1373 = vmatprep.subr.mxu0 0.0
        %1374 = vmatpush1.msra.mxu0 0.0
        %1375 = vmatprep.subr.mxu0 0.0
        %1376 = vmatpush1.msra.mxu0 0.0
        %1377 = vmatprep.subr.mxu0 0.0
        %1378 = vmatpush1.msra.mxu0 0.0
        %1379 = vmatprep.subr.mxu0 0.0
        %1380 = vmatpush1.msra.mxu0 0.0
        %1381 = vmatprep.subr.mxu0 0.0
        %1382 = vmatpush1.msra.mxu0 0.0
        %1383 = vmatprep.subr.mxu0 0.0
        %1384 = vmatpush1.msra.mxu0 0.0
        %1385 = vmatprep.subr.mxu0 0.0
        %1386 = vmatpush1.msra.mxu0 0.0
        %1387 = vmatprep.subr.mxu0 0.0
        %1388 = vmatpush1.msra.mxu0 0.0
        %1389 = vmatprep.subr.mxu0 0.0
        %1390 = vmatpush1.msra.mxu0 0.0
        %1391 = vmatprep.subr.mxu0 0.0
        %1392 = vmatpush1.msra.mxu0 0.0
        %1393 = vmatprep.subr.mxu0 0.0
        %1394 = vmatpush1.msra.mxu0 0.0
        %1395 = vmatprep.subr.mxu0 0.0
        %1396 = vmatpush1.msra.mxu0 0.0
        %1397 = vmatprep.subr.mxu0 0.0
        %1398 = vmatpush1.msra.mxu0 0.0
        %1399 = vmatprep.subr.mxu0 0.0
        %1400 = vmatpush1.msra.mxu0 0.0
        %1401 = vmatprep.subr.mxu0 0.0
        %1402 = vmatpush1.msra.mxu0 0.0
        %1403 = vmatprep.subr.mxu0 0.0
        %1404 = vmatpush1.msra.mxu0 0.0
        %1405 = vmatprep.subr.mxu0 0.0
        %1406 = vmatpush1.msra.mxu0 0.0
        %1407 = vmatprep.subr.mxu0 0.0
        %1408 = vmatpush1.msra.mxu0 0.0
        %1409 = vmatprep.subr.mxu0 0.0
        %1410 = vmatpush1.msra.mxu0 0.0
        %1411 = vmatprep.subr.mxu0 0.0
        %1412 = vmatpush1.msra.mxu0 0.0
        %1413 = vmatprep.subr.mxu0 0.0
        %1414 = vmatpush1.msra.mxu0 0.0
        %1415 = vmatprep.subr.mxu0 0.0
        %1416 = vmatpush1.msra.mxu0 0.0
        %1417 = vmatprep.subr.mxu0 0.0
        %1418 = vmatpush1.msra.mxu0 0.0
        %1419 = vmatprep.subr.mxu0 0.0
        %1420 = vmatpush1.msra.mxu0 0.0
        %1421 = vmatprep.subr.mxu0 0.0
        %1422 = vmatpush1.msra.mxu0 0.0
        %1423 = vmatprep.subr.mxu0 0.0
        %1424 = vmatpush1.msra.mxu0 0.0
        %1425 = vmatprep.subr.mxu0 0.0
        %1426 = vmatpush1.msra.mxu0 0.0
        %1427 = vmatprep.subr.mxu0 0.0
        %1428 = vmatpush1.msra.mxu0 0.0
        %1429 = vmatprep.subr.mxu0 0.0
        %1430 = vmatpush1.msra.mxu0 0.0
        %1431 = vmatprep.subr.mxu0 0.0
        %1432 = vmatpush1.msra.mxu0 0.0
        %1433 = vmatprep.subr.mxu0 0.0
        %1434 = vmatpush1.msra.mxu0 0.0
        %1435 = vmatprep.mubr.f32.mxu0 0.0
        %1436 = vmatmul.mubr.f32.gmra.mrb[0].mxu0 %v1336
        %v1437 = vpop.f32.mrb[0].mxu0
        %v1438 = vadd.f32 0.0, %v1437
        %v1439 = vpop.f32.mrb[0].mxu0
        %1440 = vmatprep.mubr.f32.mxu0 0.0
        %1441 = vmatmul.mubr.f32.gmra.mrb[0].mxu0 %v1338
        %v1442 = vpop.f32.mrb[0].mxu0
        %v1443 = vadd.f32 0.0, %v1442
        %v1444 = vpop.f32.mrb[0].mxu0
        %1445 = vmatprep.mubr.f32.mxu0 0.0
        %1446 = vmatmul.mubr.f32.gmra.mrb[0].mxu0 %v1340
        %v1447 = vpop.f32.mrb[0].mxu0
        %v1448 = vadd.f32 0.0, %v1447
        %v1449 = vpop.f32.mrb[0].mxu0
        %1450 = vmatprep.mubr.f32.mxu0 0.0
        %1451 = vmatmul.mubr.f32.gmra.mrb[0].mxu0 %v1342
        %v1452 = vpop.f32.mrb[0].mxu0
        %v1453 = vadd.f32 0.0, %v1452
        %v1454 = vpop.f32.mrb[0].mxu0
        %1455 = vmatprep.mubr.f32.mxu0 0.0
        %1456 = vmatmul.mubr.f32.gmra.mrb[0].mxu0 %v1344
        %v1457 = vpop.f32.mrb[0].mxu0
        %v1458 = vadd.f32 0.0, %v1457
        %v1459 = vpop.f32.mrb[0].mxu0
        %1460 = vmatprep.mubr.f32.mxu0 0.0
        %1461 = vmatmul.mubr.f32.gmra.mrb[0].mxu0 %v1346
        %v1462 = vpop.f32.mrb[0].mxu0
        %v1463 = vadd.f32 0.0, %v1462
        %v1464 = vpop.f32.mrb[0].mxu0
        %1465 = vmatprep.mubr.f32.mxu0 0.0
        %1466 = vmatmul.mubr.f32.gmra.mrb[0].mxu0 %v1348
        %v1467 = vpop.f32.mrb[0].mxu0
        %v1468 = vadd.f32 0.0, %v1467
        %v1469 = vpop.f32.mrb[0].mxu0
        %1470 = vmatprep.mubr.f32.mxu0 0.0
        %1471 = vmatmul.mubr.f32.gmra.mrb[0].mxu0 %v1350
        %v1472 = vpop.f32.mrb[0].mxu0
        %v1473 = vadd.f32 0.0, %v1472
        %v1474 = vpop.f32.mrb[0].mxu0
        %1475 = vmatprep.mubr.f32.mxu0 0.0
        %1476 = vmatmul.mubr.f32.gmra.mrb[0].mxu0 %v1352
        %v1477 = vpop.f32.mrb[0].mxu0
        %v1478 = vadd.f32 0.0, %v1477
        %v1479 = vpop.f32.mrb[0].mxu0
        %1480 = vmatprep.mubr.f32.mxu0 0.0
        %1481 = vmatmul.mubr.f32.gmra.mrb[0].mxu0 %v1354
        %v1482 = vpop.f32.mrb[0].mxu0
        %v1483 = vadd.f32 0.0, %v1482
        %v1484 = vpop.f32.mrb[0].mxu0
        %1485 = vmatprep.mubr.f32.mxu0 0.0
        %1486 = vmatmul.mubr.f32.gmra.mrb[0].mxu0 %v1356
        %v1487 = vpop.f32.mrb[0].mxu0
        %v1488 = vadd.f32 0.0, %v1487
        %v1489 = vpop.f32.mrb[0].mxu0
        %1490 = vmatprep.mubr.f32.mxu0 0.0
        %1491 = vmatmul.mubr.f32.gmra.mrb[0].mxu0 %v1358
        %v1492 = vpop.f32.mrb[0].mxu0
        %v1493 = vadd.f32 0.0, %v1492
        %v1494 = vpop.f32.mrb[0].mxu0
        %1495 = vmatprep.mubr.f32.mxu0 0.0
        %1496 = vmatmul.mubr.f32.gmra.mrb[0].mxu0 %v1360
        %v1497 = vpop.f32.mrb[0].mxu0
        %v1498 = vadd.f32 0.0, %v1497
        %v1499 = vpop.f32.mrb[0].mxu0
        %1500 = vmatprep.mubr.f32.mxu0 0.0
        %1501 = vmatmul.mubr.f32.gmra.mrb[0].mxu0 %v1362
        %v1502 = vpop.f32.mrb[0].mxu0
        %v1503 = vadd.f32 0.0, %v1502
        %v1504 = vpop.f32.mrb[0].mxu0
        %1505 = vmatprep.mubr.f32.mxu0 0.0
        %1506 = vmatmul.mubr.f32.gmra.mrb[0].mxu0 %v1364
        %v1507 = vpop.f32.mrb[0].mxu0
        %v1508 = vadd.f32 0.0, %v1507
        %v1509 = vpop.f32.mrb[0].mxu0
        %1510 = vmatprep.mubr.f32.mxu0 0.0
        %1511 = vmatmul.mubr.f32.gmra.mrb[0].mxu0 %v1366
        %v1512 = vpop.f32.mrb[0].mxu0
        %v1513 = vadd.f32 0.0, %v1512
        %v1514 = vpop.f32.mrb[0].mxu0
        %1515 = vdwg.mxu0
        %v1516 = vadd.f32 %v1215, %v1438
        %v1517 = vadd.f32 %v1220, %v1443
        %v1518 = vadd.f32 %v1225, %v1448
        %v1519 = vadd.f32 %v1230, %v1453
        %v1520 = vadd.f32 %v1235, %v1458
        %v1521 = vadd.f32 %v1240, %v1463
        %v1522 = vadd.f32 %v1245, %v1468
        %v1523 = vadd.f32 %v1250, %v1473
        %v1524 = vadd.f32 %v1255, %v1478
        %v1525 = vadd.f32 %v1260, %v1483
        %v1526 = vadd.f32 %v1265, %v1488
        %v1527 = vadd.f32 %v1270, %v1493
        %v1528 = vadd.f32 %v1275, %v1498
        %v1529 = vadd.f32 %v1280, %v1503
        %v1530 = vadd.f32 %v1285, %v1508
        %v1531 = vadd.f32 %v1290, %v1513
        %s1532 = sadd.s32 %s836, 1
        %s1533 = smul.u32 %s1532, 24
        %s1534 = scalar_lea.vmem [#allocation2], %s1533
        %v1535 = vld [vmem:[%s1534] sm:$0xff]
        %v1536 = vld [vmem:[%s1534 + $0x8] sm:$0xff]
        %v1537 = vld [vmem:[%s1534 + $0x10] sm:$0x3]
        %v1538 = vld [vmem:[%s1534 + $0x18] sm:$0xff]
        %v1539 = vld [vmem:[%s1534 + $0x20] sm:$0xff]
        %v1540 = vld [vmem:[%s1534 + $0x28] sm:$0x3]
        %v1541 = vld [vmem:[%s1534 + $0x30] sm:$0xff]
        %v1542 = vld [vmem:[%s1534 + $0x38] sm:$0xff]
        %v1543 = vld [vmem:[%s1534 + $0x40] sm:$0x3]
        %v1544 = vld [vmem:[%s1534 + $0x48] sm:$0xff]
        %v1545 = vld [vmem:[%s1534 + $0x50] sm:$0xff]
        %v1546 = vld [vmem:[%s1534 + $0x58] sm:$0x3]
        %v1547 = vld [vmem:[%s1534 + $0x60] sm:$0xff]
        %v1548 = vld [vmem:[%s1534 + $0x68] sm:$0xff]
        %v1549 = vld [vmem:[%s1534 + $0x70] sm:$0x3]
        %v1550 = vld [vmem:[%s1534 + $0x78] sm:$0xff]
        %v1551 = vld [vmem:[%s1534 + $0x80] sm:$0xff]
        %v1552 = vld [vmem:[%s1534 + $0x88] sm:$0x3]
        %v1553 = vld [vmem:[%s1534 + $0x90] sm:$0xff]
        %v1554 = vld [vmem:[%s1534 + $0x98] sm:$0xff]
        %v1555 = vld [vmem:[%s1534 + $0xa0] sm:$0x3]
        %v1556 = vld [vmem:[%s1534 + $0xa8] sm:$0xff]
        %v1557 = vld [vmem:[%s1534 + $0xb0] sm:$0xff]
        %v1558 = vld [vmem:[%s1534 + $0xb8] sm:$0x3]
        %s1559 = scalar_lea.vmem %s3, 12
        %v1560 = vld [vmem:[%s1559] sm:$0xf]
        %v1562 = vsel %vm931, %v1535, 0
        %v1565 = vsel %vm931, %v1536, 0
        %v1568 = vsel %vm931, %v1538, 0
        %v1571 = vsel %vm931, %v1539, 0
        %v1574 = vsel %vm931, %v1541, 0
        %v1577 = vsel %vm931, %v1542, 0
        %v1580 = vsel %vm931, %v1544, 0
        %v1583 = vsel %vm931, %v1545, 0
        %v1586 = vsel %vm931, %v1547, 0
        %v1589 = vsel %vm931, %v1548, 0
        %v1592 = vsel %vm931, %v1550, 0
        %v1595 = vsel %vm931, %v1551, 0
        %v1598 = vsel %vm931, %v1553, 0
        %v1601 = vsel %vm931, %v1554, 0
        %v1604 = vsel %vm931, %v1556, 0
        %v1607 = vsel %vm931, %v1557, 0
        %v1610 = vsel %vm964, %v1560, 0
        %1612 = vmatprep.subr.mxu0 0.0
        %1613 = vmatpush1.msra.mxu0 %v1610
        %1614 = vmatprep.subr.mxu0 0.0
        %1615 = vmatpush1.msra.mxu0 0.0
        %1616 = vmatprep.subr.mxu0 0.0
        %1617 = vmatpush1.msra.mxu0 0.0
        %1618 = vmatprep.subr.mxu0 0.0
        %1619 = vmatpush1.msra.mxu0 0.0
        %1620 = vmatprep.subr.mxu0 0.0
        %1621 = vmatpush1.msra.mxu0 0.0
        %1622 = vmatprep.subr.mxu0 0.0
        %1623 = vmatpush1.msra.mxu0 0.0
        %1624 = vmatprep.subr.mxu0 0.0
        %1625 = vmatpush1.msra.mxu0 0.0
        %1626 = vmatprep.subr.mxu0 0.0
        %1627 = vmatpush1.msra.mxu0 0.0
        %1628 = vmatprep.subr.mxu0 0.0
        %1629 = vmatpush1.msra.mxu0 0.0
        %1630 = vmatprep.subr.mxu0 0.0
        %1631 = vmatpush1.msra.mxu0 0.0
        %1632 = vmatprep.subr.mxu0 0.0
        %1633 = vmatpush1.msra.mxu0 0.0
        %1634 = vmatprep.subr.mxu0 0.0
        %1635 = vmatpush1.msra.mxu0 0.0
        %1636 = vmatprep.subr.mxu0 0.0
        %1637 = vmatpush1.msra.mxu0 0.0
        %1638 = vmatprep.subr.mxu0 0.0
        %1639 = vmatpush1.msra.mxu0 0.0
        %1640 = vmatprep.subr.mxu0 0.0
        %1641 = vmatpush1.msra.mxu0 0.0
        %1642 = vmatprep.subr.mxu0 0.0
        %1643 = vmatpush1.msra.mxu0 0.0
        %1644 = vmatprep.subr.mxu0 0.0
        %1645 = vmatpush1.msra.mxu0 0.0
        %1646 = vmatprep.subr.mxu0 0.0
        %1647 = vmatpush1.msra.mxu0 0.0
        %1648 = vmatprep.subr.mxu0 0.0
        %1649 = vmatpush1.msra.mxu0 0.0
        %1650 = vmatprep.subr.mxu0 0.0
        %1651 = vmatpush1.msra.mxu0 0.0
        %1652 = vmatprep.subr.mxu0 0.0
        %1653 = vmatpush1.msra.mxu0 0.0
        %1654 = vmatprep.subr.mxu0 0.0
        %1655 = vmatpush1.msra.mxu0 0.0
        %1656 = vmatprep.subr.mxu0 0.0
        %1657 = vmatpush1.msra.mxu0 0.0
        %1658 = vmatprep.subr.mxu0 0.0
        %1659 = vmatpush1.msra.mxu0 0.0
        %1660 = vmatprep.subr.mxu0 0.0
        %1661 = vmatpush1.msra.mxu0 0.0
        %1662 = vmatprep.subr.mxu0 0.0
        %1663 = vmatpush1.msra.mxu0 0.0
        %1664 = vmatprep.subr.mxu0 0.0
        %1665 = vmatpush1.msra.mxu0 0.0
        %1666 = vmatprep.subr.mxu0 0.0
        %1667 = vmatpush1.msra.mxu0 0.0
        %1668 = vmatprep.subr.mxu0 0.0
        %1669 = vmatpush1.msra.mxu0 0.0
        %1670 = vmatprep.subr.mxu0 0.0
        %1671 = vmatpush1.msra.mxu0 0.0
        %1672 = vmatprep.subr.mxu0 0.0
        %1673 = vmatpush1.msra.mxu0 0.0
        %1674 = vmatprep.subr.mxu0 0.0
        %1675 = vmatpush1.msra.mxu0 0.0
        %1676 = vmatprep.mubr.f32.mxu0 0.0
        %1677 = vmatmul.mubr.f32.gmra.mrb[0].mxu0 %v1562
        %v1678 = vpop.f32.mrb[0].mxu0
        %v1679 = vadd.f32 0.0, %v1678
        %v1680 = vpop.f32.mrb[0].mxu0
        %1681 = vmatprep.mubr.f32.mxu0 0.0
        %1682 = vmatmul.mubr.f32.gmra.mrb[0].mxu0 %v1565
        %v1683 = vpop.f32.mrb[0].mxu0
        %v1684 = vadd.f32 0.0, %v1683
        %v1685 = vpop.f32.mrb[0].mxu0
        %1686 = vmatprep.mubr.f32.mxu0 0.0
        %1687 = vmatmul.mubr.f32.gmra.mrb[0].mxu0 %v1568
        %v1688 = vpop.f32.mrb[0].mxu0
        %v1689 = vadd.f32 0.0, %v1688
        %v1690 = vpop.f32.mrb[0].mxu0
        %1691 = vmatprep.mubr.f32.mxu0 0.0
        %1692 = vmatmul.mubr.f32.gmra.mrb[0].mxu0 %v1571
        %v1693 = vpop.f32.mrb[0].mxu0
        %v1694 = vadd.f32 0.0, %v1693
        %v1695 = vpop.f32.mrb[0].mxu0
        %1696 = vmatprep.mubr.f32.mxu0 0.0
        %1697 = vmatmul.mubr.f32.gmra.mrb[0].mxu0 %v1574
        %v1698 = vpop.f32.mrb[0].mxu0
        %v1699 = vadd.f32 0.0, %v1698
        %v1700 = vpop.f32.mrb[0].mxu0
        %1701 = vmatprep.mubr.f32.mxu0 0.0
        %1702 = vmatmul.mubr.f32.gmra.mrb[0].mxu0 %v1577
        %v1703 = vpop.f32.mrb[0].mxu0
        %v1704 = vadd.f32 0.0, %v1703
        %v1705 = vpop.f32.mrb[0].mxu0
        %1706 = vmatprep.mubr.f32.mxu0 0.0
        %1707 = vmatmul.mubr.f32.gmra.mrb[0].mxu0 %v1580
        %v1708 = vpop.f32.mrb[0].mxu0
        %v1709 = vadd.f32 0.0, %v1708
        %v1710 = vpop.f32.mrb[0].mxu0
        %1711 = vmatprep.mubr.f32.mxu0 0.0
        %1712 = vmatmul.mubr.f32.gmra.mrb[0].mxu0 %v1583
        %v1713 = vpop.f32.mrb[0].mxu0
        %v1714 = vadd.f32 0.0, %v1713
        %v1715 = vpop.f32.mrb[0].mxu0
        %1716 = vmatprep.mubr.f32.mxu0 0.0
        %1717 = vmatmul.mubr.f32.gmra.mrb[0].mxu0 %v1586
        %v1718 = vpop.f32.mrb[0].mxu0
        %v1719 = vadd.f32 0.0, %v1718
        %v1720 = vpop.f32.mrb[0].mxu0
        %1721 = vmatprep.mubr.f32.mxu0 0.0
        %1722 = vmatmul.mubr.f32.gmra.mrb[0].mxu0 %v1589
        %v1723 = vpop.f32.mrb[0].mxu0
        %v1724 = vadd.f32 0.0, %v1723
        %v1725 = vpop.f32.mrb[0].mxu0
        %1726 = vmatprep.mubr.f32.mxu0 0.0
        %1727 = vmatmul.mubr.f32.gmra.mrb[0].mxu0 %v1592
        %v1728 = vpop.f32.mrb[0].mxu0
        %v1729 = vadd.f32 0.0, %v1728
        %v1730 = vpop.f32.mrb[0].mxu0
        %1731 = vmatprep.mubr.f32.mxu0 0.0
        %1732 = vmatmul.mubr.f32.gmra.mrb[0].mxu0 %v1595
        %v1733 = vpop.f32.mrb[0].mxu0
        %v1734 = vadd.f32 0.0, %v1733
        %v1735 = vpop.f32.mrb[0].mxu0
        %1736 = vmatprep.mubr.f32.mxu0 0.0
        %1737 = vmatmul.mubr.f32.gmra.mrb[0].mxu0 %v1598
        %v1738 = vpop.f32.mrb[0].mxu0
        %v1739 = vadd.f32 0.0, %v1738
        %v1740 = vpop.f32.mrb[0].mxu0
        %1741 = vmatprep.mubr.f32.mxu0 0.0
        %1742 = vmatmul.mubr.f32.gmra.mrb[0].mxu0 %v1601
        %v1743 = vpop.f32.mrb[0].mxu0
        %v1744 = vadd.f32 0.0, %v1743
        %v1745 = vpop.f32.mrb[0].mxu0
        %1746 = vmatprep.mubr.f32.mxu0 0.0
        %1747 = vmatmul.mubr.f32.gmra.mrb[0].mxu0 %v1604
        %v1748 = vpop.f32.mrb[0].mxu0
        %v1749 = vadd.f32 0.0, %v1748
        %v1750 = vpop.f32.mrb[0].mxu0
        %1751 = vmatprep.mubr.f32.mxu0 0.0
        %1752 = vmatmul.mubr.f32.gmra.mrb[0].mxu0 %v1607
        %v1753 = vpop.f32.mrb[0].mxu0
        %v1754 = vadd.f32 0.0, %v1753
        %v1755 = vpop.f32.mrb[0].mxu0
        %1756 = vdwg.mxu0
        %v1757 = vadd.f32 %v1516, %v1679
        %v1758 = vadd.f32 %v1517, %v1684
        %v1759 = vadd.f32 %v1518, %v1689
        %v1760 = vadd.f32 %v1519, %v1694
        %v1761 = vadd.f32 %v1520, %v1699
        %v1762 = vadd.f32 %v1521, %v1704
        %v1763 = vadd.f32 %v1522, %v1709
        %v1764 = vadd.f32 %v1523, %v1714
        %v1765 = vadd.f32 %v1524, %v1719
        %v1766 = vadd.f32 %v1525, %v1724
        %v1767 = vadd.f32 %v1526, %v1729
        %v1768 = vadd.f32 %v1527, %v1734
        %v1769 = vadd.f32 %v1528, %v1739
        %v1770 = vadd.f32 %v1529, %v1744
        %v1771 = vadd.f32 %v1530, %v1749
        %v1772 = vadd.f32 %v1531, %v1754
        %v1781 = vrot.slane %v1535, 1
        %v1782 = vrot.slane %v1536, 1
        %v1783 = vsel %vm888, %v1781, %v1782
        %v1784 = vrot.slane %v1537, 1
        %v1785 = vsel %vm888, %v1782, %v1784
        %v1786 = vrot.slane %v1538, 1
        %v1787 = vrot.slane %v1539, 1
        %v1788 = vsel %vm888, %v1786, %v1787
        %v1789 = vrot.slane %v1540, 1
        %v1790 = vsel %vm888, %v1787, %v1789
        %v1791 = vrot.slane %v1541, 1
        %v1792 = vrot.slane %v1542, 1
        %v1793 = vsel %vm888, %v1791, %v1792
        %v1794 = vrot.slane %v1543, 1
        %v1795 = vsel %vm888, %v1792, %v1794
        %v1796 = vrot.slane %v1544, 1
        %v1797 = vrot.slane %v1545, 1
        %v1798 = vsel %vm888, %v1796, %v1797
        %v1799 = vrot.slane %v1546, 1
        %v1800 = vsel %vm888, %v1797, %v1799
        %v1801 = vrot.slane %v1547, 1
        %v1802 = vrot.slane %v1548, 1
        %v1803 = vsel %vm888, %v1801, %v1802
        %v1804 = vrot.slane %v1549, 1
        %v1805 = vsel %vm888, %v1802, %v1804
        %v1806 = vrot.slane %v1550, 1
        %v1807 = vrot.slane %v1551, 1
        %v1808 = vsel %vm888, %v1806, %v1807
        %v1809 = vrot.slane %v1552, 1
        %v1810 = vsel %vm888, %v1807, %v1809
        %v1811 = vrot.slane %v1553, 1
        %v1812 = vrot.slane %v1554, 1
        %v1813 = vsel %vm888, %v1811, %v1812
        %v1814 = vrot.slane %v1555, 1
        %v1815 = vsel %vm888, %v1812, %v1814
        %v1816 = vrot.slane %v1556, 1
        %v1817 = vrot.slane %v1557, 1
        %v1818 = vsel %vm888, %v1816, %v1817
        %v1819 = vrot.slane %v1558, 1
        %v1820 = vsel %vm888, %v1817, %v1819
        %s1821 = scalar_lea.vmem %s3, 16
        %v1822 = vld [vmem:[%s1821] sm:$0xf]
        %v1823 = vsel %vm931, %v1783, 0
        %v1825 = vsel %vm931, %v1785, 0
        %v1827 = vsel %vm931, %v1788, 0
        %v1829 = vsel %vm931, %v1790, 0
        %v1831 = vsel %vm931, %v1793, 0
        %v1833 = vsel %vm931, %v1795, 0
        %v1835 = vsel %vm931, %v1798, 0
        %v1837 = vsel %vm931, %v1800, 0
        %v1839 = vsel %vm931, %v1803, 0
        %v1841 = vsel %vm931, %v1805, 0
        %v1843 = vsel %vm931, %v1808, 0
        %v1845 = vsel %vm931, %v1810, 0
        %v1847 = vsel %vm931, %v1813, 0
        %v1849 = vsel %vm931, %v1815, 0
        %v1851 = vsel %vm931, %v1818, 0
        %v1853 = vsel %vm931, %v1820, 0
        %v1856 = vsel %vm964, %v1822, 0
        %1858 = vmatprep.subr.mxu0 0.0
        %1859 = vmatpush1.msra.mxu0 %v1856
        %1860 = vmatprep.subr.mxu0 0.0
        %1861 = vmatpush1.msra.mxu0 0.0
        %1862 = vmatprep.subr.mxu0 0.0
        %1863 = vmatpush1.msra.mxu0 0.0
        %1864 = vmatprep.subr.mxu0 0.0
        %1865 = vmatpush1.msra.mxu0 0.0
        %1866 = vmatprep.subr.mxu0 0.0
        %1867 = vmatpush1.msra.mxu0 0.0
        %1868 = vmatprep.subr.mxu0 0.0
        %1869 = vmatpush1.msra.mxu0 0.0
        %1870 = vmatprep.subr.mxu0 0.0
        %1871 = vmatpush1.msra.mxu0 0.0
        %1872 = vmatprep.subr.mxu0 0.0
        %1873 = vmatpush1.msra.mxu0 0.0
        %1874 = vmatprep.subr.mxu0 0.0
        %1875 = vmatpush1.msra.mxu0 0.0
        %1876 = vmatprep.subr.mxu0 0.0
        %1877 = vmatpush1.msra.mxu0 0.0
        %1878 = vmatprep.subr.mxu0 0.0
        %1879 = vmatpush1.msra.mxu0 0.0
        %1880 = vmatprep.subr.mxu0 0.0
        %1881 = vmatpush1.msra.mxu0 0.0
        %1882 = vmatprep.subr.mxu0 0.0
        %1883 = vmatpush1.msra.mxu0 0.0
        %1884 = vmatprep.subr.mxu0 0.0
        %1885 = vmatpush1.msra.mxu0 0.0
        %1886 = vmatprep.subr.mxu0 0.0
        %1887 = vmatpush1.msra.mxu0 0.0
        %1888 = vmatprep.subr.mxu0 0.0
        %1889 = vmatpush1.msra.mxu0 0.0
        %1890 = vmatprep.subr.mxu0 0.0
        %1891 = vmatpush1.msra.mxu0 0.0
        %1892 = vmatprep.subr.mxu0 0.0
        %1893 = vmatpush1.msra.mxu0 0.0
        %1894 = vmatprep.subr.mxu0 0.0
        %1895 = vmatpush1.msra.mxu0 0.0
        %1896 = vmatprep.subr.mxu0 0.0
        %1897 = vmatpush1.msra.mxu0 0.0
        %1898 = vmatprep.subr.mxu0 0.0
        %1899 = vmatpush1.msra.mxu0 0.0
        %1900 = vmatprep.subr.mxu0 0.0
        %1901 = vmatpush1.msra.mxu0 0.0
        %1902 = vmatprep.subr.mxu0 0.0
        %1903 = vmatpush1.msra.mxu0 0.0
        %1904 = vmatprep.subr.mxu0 0.0
        %1905 = vmatpush1.msra.mxu0 0.0
        %1906 = vmatprep.subr.mxu0 0.0
        %1907 = vmatpush1.msra.mxu0 0.0
        %1908 = vmatprep.subr.mxu0 0.0
        %1909 = vmatpush1.msra.mxu0 0.0
        %1910 = vmatprep.subr.mxu0 0.0
        %1911 = vmatpush1.msra.mxu0 0.0
        %1912 = vmatprep.subr.mxu0 0.0
        %1913 = vmatpush1.msra.mxu0 0.0
        %1914 = vmatprep.subr.mxu0 0.0
        %1915 = vmatpush1.msra.mxu0 0.0
        %1916 = vmatprep.subr.mxu0 0.0
        %1917 = vmatpush1.msra.mxu0 0.0
        %1918 = vmatprep.subr.mxu0 0.0
        %1919 = vmatpush1.msra.mxu0 0.0
        %1920 = vmatprep.subr.mxu0 0.0
        %1921 = vmatpush1.msra.mxu0 0.0
        %1922 = vmatprep.mubr.f32.mxu0 0.0
        %1923 = vmatmul.mubr.f32.gmra.mrb[0].mxu0 %v1823
        %v1924 = vpop.f32.mrb[0].mxu0
        %v1925 = vadd.f32 0.0, %v1924
        %v1926 = vpop.f32.mrb[0].mxu0
        %1927 = vmatprep.mubr.f32.mxu0 0.0
        %1928 = vmatmul.mubr.f32.gmra.mrb[0].mxu0 %v1825
        %v1929 = vpop.f32.mrb[0].mxu0
        %v1930 = vadd.f32 0.0, %v1929
        %v1931 = vpop.f32.mrb[0].mxu0
        %1932 = vmatprep.mubr.f32.mxu0 0.0
        %1933 = vmatmul.mubr.f32.gmra.mrb[0].mxu0 %v1827
        %v1934 = vpop.f32.mrb[0].mxu0
        %v1935 = vadd.f32 0.0, %v1934
        %v1936 = vpop.f32.mrb[0].mxu0
        %1937 = vmatprep.mubr.f32.mxu0 0.0
        %1938 = vmatmul.mubr.f32.gmra.mrb[0].mxu0 %v1829
        %v1939 = vpop.f32.mrb[0].mxu0
        %v1940 = vadd.f32 0.0, %v1939
        %v1941 = vpop.f32.mrb[0].mxu0
        %1942 = vmatprep.mubr.f32.mxu0 0.0
        %1943 = vmatmul.mubr.f32.gmra.mrb[0].mxu0 %v1831
        %v1944 = vpop.f32.mrb[0].mxu0
        %v1945 = vadd.f32 0.0, %v1944
        %v1946 = vpop.f32.mrb[0].mxu0
        %1947 = vmatprep.mubr.f32.mxu0 0.0
        %1948 = vmatmul.mubr.f32.gmra.mrb[0].mxu0 %v1833
        %v1949 = vpop.f32.mrb[0].mxu0
        %v1950 = vadd.f32 0.0, %v1949
        %v1951 = vpop.f32.mrb[0].mxu0
        %1952 = vmatprep.mubr.f32.mxu0 0.0
        %1953 = vmatmul.mubr.f32.gmra.mrb[0].mxu0 %v1835
        %v1954 = vpop.f32.mrb[0].mxu0
        %v1955 = vadd.f32 0.0, %v1954
        %v1956 = vpop.f32.mrb[0].mxu0
        %1957 = vmatprep.mubr.f32.mxu0 0.0
        %1958 = vmatmul.mubr.f32.gmra.mrb[0].mxu0 %v1837
        %v1959 = vpop.f32.mrb[0].mxu0
        %v1960 = vadd.f32 0.0, %v1959
        %v1961 = vpop.f32.mrb[0].mxu0
        %1962 = vmatprep.mubr.f32.mxu0 0.0
        %1963 = vmatmul.mubr.f32.gmra.mrb[0].mxu0 %v1839
        %v1964 = vpop.f32.mrb[0].mxu0
        %v1965 = vadd.f32 0.0, %v1964
        %v1966 = vpop.f32.mrb[0].mxu0
        %1967 = vmatprep.mubr.f32.mxu0 0.0
        %1968 = vmatmul.mubr.f32.gmra.mrb[0].mxu0 %v1841
        %v1969 = vpop.f32.mrb[0].mxu0
        %v1970 = vadd.f32 0.0, %v1969
        %v1971 = vpop.f32.mrb[0].mxu0
        %1972 = vmatprep.mubr.f32.mxu0 0.0
        %1973 = vmatmul.mubr.f32.gmra.mrb[0].mxu0 %v1843
        %v1974 = vpop.f32.mrb[0].mxu0
        %v1975 = vadd.f32 0.0, %v1974
        %v1976 = vpop.f32.mrb[0].mxu0
        %1977 = vmatprep.mubr.f32.mxu0 0.0
        %1978 = vmatmul.mubr.f32.gmra.mrb[0].mxu0 %v1845
        %v1979 = vpop.f32.mrb[0].mxu0
        %v1980 = vadd.f32 0.0, %v1979
        %v1981 = vpop.f32.mrb[0].mxu0
        %1982 = vmatprep.mubr.f32.mxu0 0.0
        %1983 = vmatmul.mubr.f32.gmra.mrb[0].mxu0 %v1847
        %v1984 = vpop.f32.mrb[0].mxu0
        %v1985 = vadd.f32 0.0, %v1984
        %v1986 = vpop.f32.mrb[0].mxu0
        %1987 = vmatprep.mubr.f32.mxu0 0.0
        %1988 = vmatmul.mubr.f32.gmra.mrb[0].mxu0 %v1849
        %v1989 = vpop.f32.mrb[0].mxu0
        %v1990 = vadd.f32 0.0, %v1989
        %v1991 = vpop.f32.mrb[0].mxu0
        %1992 = vmatprep.mubr.f32.mxu0 0.0
        %1993 = vmatmul.mubr.f32.gmra.mrb[0].mxu0 %v1851
        %v1994 = vpop.f32.mrb[0].mxu0
        %v1995 = vadd.f32 0.0, %v1994
        %v1996 = vpop.f32.mrb[0].mxu0
        %1997 = vmatprep.mubr.f32.mxu0 0.0
        %1998 = vmatmul.mubr.f32.gmra.mrb[0].mxu0 %v1853
        %v1999 = vpop.f32.mrb[0].mxu0
        %v2000 = vadd.f32 0.0, %v1999
        %v2001 = vpop.f32.mrb[0].mxu0
        %2002 = vdwg.mxu0
        %v2003 = vadd.f32 %v1757, %v1925
        %v2004 = vadd.f32 %v1758, %v1930
        %v2005 = vadd.f32 %v1759, %v1935
        %v2006 = vadd.f32 %v1760, %v1940
        %v2007 = vadd.f32 %v1761, %v1945
        %v2008 = vadd.f32 %v1762, %v1950
        %v2009 = vadd.f32 %v1763, %v1955
        %v2010 = vadd.f32 %v1764, %v1960
        %v2011 = vadd.f32 %v1765, %v1965
        %v2012 = vadd.f32 %v1766, %v1970
        %v2013 = vadd.f32 %v1767, %v1975
        %v2014 = vadd.f32 %v1768, %v1980
        %v2015 = vadd.f32 %v1769, %v1985
        %v2016 = vadd.f32 %v1770, %v1990
        %v2017 = vadd.f32 %v1771, %v1995
        %v2018 = vadd.f32 %v1772, %v2000
        %v2019 = vrot.slane %v1535, 2
        %v2020 = vrot.slane %v1536, 2
        %v2021 = vsel %vm1293, %v2019, %v2020
        %v2022 = vrot.slane %v1537, 2
        %v2023 = vsel %vm1293, %v2020, %v2022
        %v2024 = vrot.slane %v1538, 2
        %v2025 = vrot.slane %v1539, 2
        %v2026 = vsel %vm1293, %v2024, %v2025
        %v2027 = vrot.slane %v1540, 2
        %v2028 = vsel %vm1293, %v2025, %v2027
        %v2029 = vrot.slane %v1541, 2
        %v2030 = vrot.slane %v1542, 2
        %v2031 = vsel %vm1293, %v2029, %v2030
        %v2032 = vrot.slane %v1543, 2
        %v2033 = vsel %vm1293, %v2030, %v2032
        %v2034 = vrot.slane %v1544, 2
        %v2035 = vrot.slane %v1545, 2
        %v2036 = vsel %vm1293, %v2034, %v2035
        %v2037 = vrot.slane %v1546, 2
        %v2038 = vsel %vm1293, %v2035, %v2037
        %v2039 = vrot.slane %v1547, 2
        %v2040 = vrot.slane %v1548, 2
        %v2041 = vsel %vm1293, %v2039, %v2040
        %v2042 = vrot.slane %v1549, 2
        %v2043 = vsel %vm1293, %v2040, %v2042
        %v2044 = vrot.slane %v1550, 2
        %v2045 = vrot.slane %v1551, 2
        %v2046 = vsel %vm1293, %v2044, %v2045
        %v2047 = vrot.slane %v1552, 2
        %v2048 = vsel %vm1293, %v2045, %v2047
        %v2049 = vrot.slane %v1553, 2
        %v2050 = vrot.slane %v1554, 2
        %v2051 = vsel %vm1293, %v2049, %v2050
        %v2052 = vrot.slane %v1555, 2
        %v2053 = vsel %vm1293, %v2050, %v2052
        %v2054 = vrot.slane %v1556, 2
        %v2055 = vrot.slane %v1557, 2
        %v2056 = vsel %vm1293, %v2054, %v2055
        %v2057 = vrot.slane %v1558, 2
        %v2058 = vsel %vm1293, %v2055, %v2057
        %s2059 = scalar_lea.vmem %s3, 20
        %v2060 = vld [vmem:[%s2059] sm:$0xf]
        %v2061 = vsel %vm931, %v2021, 0
        %v2063 = vsel %vm931, %v2023, 0
        %v2065 = vsel %vm931, %v2026, 0
        %v2067 = vsel %vm931, %v2028, 0
        %v2069 = vsel %vm931, %v2031, 0
        %v2071 = vsel %vm931, %v2033, 0
        %v2073 = vsel %vm931, %v2036, 0
        %v2075 = vsel %vm931, %v2038, 0
        %v2077 = vsel %vm931, %v2041, 0
        %v2079 = vsel %vm931, %v2043, 0
        %v2081 = vsel %vm931, %v2046, 0
        %v2083 = vsel %vm931, %v2048, 0
        %v2085 = vsel %vm931, %v2051, 0
        %v2087 = vsel %vm931, %v2053, 0
        %v2089 = vsel %vm931, %v2056, 0
        %v2091 = vsel %vm931, %v2058, 0
        %v2094 = vsel %vm964, %v2060, 0
        %2096 = vmatprep.subr.mxu0 0.0
        %2097 = vmatpush1.msra.mxu0 %v2094
        %2098 = vmatprep.subr.mxu0 0.0
        %2099 = vmatpush1.msra.mxu0 0.0
        %2100 = vmatprep.subr.mxu0 0.0
        %2101 = vmatpush1.msra.mxu0 0.0
        %2102 = vmatprep.subr.mxu0 0.0
        %2103 = vmatpush1.msra.mxu0 0.0
        %2104 = vmatprep.subr.mxu0 0.0
        %2105 = vmatpush1.msra.mxu0 0.0
        %2106 = vmatprep.subr.mxu0 0.0
        %2107 = vmatpush1.msra.mxu0 0.0
        %2108 = vmatprep.subr.mxu0 0.0
        %2109 = vmatpush1.msra.mxu0 0.0
        %2110 = vmatprep.subr.mxu0 0.0
        %2111 = vmatpush1.msra.mxu0 0.0
        %2112 = vmatprep.subr.mxu0 0.0
        %2113 = vmatpush1.msra.mxu0 0.0
        %2114 = vmatprep.subr.mxu0 0.0
        %2115 = vmatpush1.msra.mxu0 0.0
        %2116 = vmatprep.subr.mxu0 0.0
        %2117 = vmatpush1.msra.mxu0 0.0
        %2118 = vmatprep.subr.mxu0 0.0
        %2119 = vmatpush1.msra.mxu0 0.0
        %2120 = vmatprep.subr.mxu0 0.0
        %2121 = vmatpush1.msra.mxu0 0.0
        %2122 = vmatprep.subr.mxu0 0.0
        %2123 = vmatpush1.msra.mxu0 0.0
        %2124 = vmatprep.subr.mxu0 0.0
        %2125 = vmatpush1.msra.mxu0 0.0
        %2126 = vmatprep.subr.mxu0 0.0
        %2127 = vmatpush1.msra.mxu0 0.0
        %2128 = vmatprep.subr.mxu0 0.0
        %2129 = vmatpush1.msra.mxu0 0.0
        %2130 = vmatprep.subr.mxu0 0.0
        %2131 = vmatpush1.msra.mxu0 0.0
        %2132 = vmatprep.subr.mxu0 0.0
        %2133 = vmatpush1.msra.mxu0 0.0
        %2134 = vmatprep.subr.mxu0 0.0
        %2135 = vmatpush1.msra.mxu0 0.0
        %2136 = vmatprep.subr.mxu0 0.0
        %2137 = vmatpush1.msra.mxu0 0.0
        %2138 = vmatprep.subr.mxu0 0.0
        %2139 = vmatpush1.msra.mxu0 0.0
        %2140 = vmatprep.subr.mxu0 0.0
        %2141 = vmatpush1.msra.mxu0 0.0
        %2142 = vmatprep.subr.mxu0 0.0
        %2143 = vmatpush1.msra.mxu0 0.0
        %2144 = vmatprep.subr.mxu0 0.0
        %2145 = vmatpush1.msra.mxu0 0.0
        %2146 = vmatprep.subr.mxu0 0.0
        %2147 = vmatpush1.msra.mxu0 0.0
        %2148 = vmatprep.subr.mxu0 0.0
        %2149 = vmatpush1.msra.mxu0 0.0
        %2150 = vmatprep.subr.mxu0 0.0
        %2151 = vmatpush1.msra.mxu0 0.0
        %2152 = vmatprep.subr.mxu0 0.0
        %2153 = vmatpush1.msra.mxu0 0.0
        %2154 = vmatprep.subr.mxu0 0.0
        %2155 = vmatpush1.msra.mxu0 0.0
        %2156 = vmatprep.subr.mxu0 0.0
        %2157 = vmatpush1.msra.mxu0 0.0
        %2158 = vmatprep.subr.mxu0 0.0
        %2159 = vmatpush1.msra.mxu0 0.0
        %2160 = vmatprep.mubr.f32.mxu0 0.0
        %2161 = vmatmul.mubr.f32.gmra.mrb[0].mxu0 %v2061
        %v2162 = vpop.f32.mrb[0].mxu0
        %v2163 = vadd.f32 0.0, %v2162
        %v2164 = vpop.f32.mrb[0].mxu0
        %2165 = vmatprep.mubr.f32.mxu0 0.0
        %2166 = vmatmul.mubr.f32.gmra.mrb[0].mxu0 %v2063
        %v2167 = vpop.f32.mrb[0].mxu0
        %v2168 = vadd.f32 0.0, %v2167
        %v2169 = vpop.f32.mrb[0].mxu0
        %2170 = vmatprep.mubr.f32.mxu0 0.0
        %2171 = vmatmul.mubr.f32.gmra.mrb[0].mxu0 %v2065
        %v2172 = vpop.f32.mrb[0].mxu0
        %v2173 = vadd.f32 0.0, %v2172
        %v2174 = vpop.f32.mrb[0].mxu0
        %2175 = vmatprep.mubr.f32.mxu0 0.0
        %2176 = vmatmul.mubr.f32.gmra.mrb[0].mxu0 %v2067
        %v2177 = vpop.f32.mrb[0].mxu0
        %v2178 = vadd.f32 0.0, %v2177
        %v2179 = vpop.f32.mrb[0].mxu0
        %2180 = vmatprep.mubr.f32.mxu0 0.0
        %2181 = vmatmul.mubr.f32.gmra.mrb[0].mxu0 %v2069
        %v2182 = vpop.f32.mrb[0].mxu0
        %v2183 = vadd.f32 0.0, %v2182
        %v2184 = vpop.f32.mrb[0].mxu0
        %2185 = vmatprep.mubr.f32.mxu0 0.0
        %2186 = vmatmul.mubr.f32.gmra.mrb[0].mxu0 %v2071
        %v2187 = vpop.f32.mrb[0].mxu0
        %v2188 = vadd.f32 0.0, %v2187
        %v2189 = vpop.f32.mrb[0].mxu0
        %2190 = vmatprep.mubr.f32.mxu0 0.0
        %2191 = vmatmul.mubr.f32.gmra.mrb[0].mxu0 %v2073
        %v2192 = vpop.f32.mrb[0].mxu0
        %v2193 = vadd.f32 0.0, %v2192
        %v2194 = vpop.f32.mrb[0].mxu0
        %2195 = vmatprep.mubr.f32.mxu0 0.0
        %2196 = vmatmul.mubr.f32.gmra.mrb[0].mxu0 %v2075
        %v2197 = vpop.f32.mrb[0].mxu0
        %v2198 = vadd.f32 0.0, %v2197
        %v2199 = vpop.f32.mrb[0].mxu0
        %2200 = vmatprep.mubr.f32.mxu0 0.0
        %2201 = vmatmul.mubr.f32.gmra.mrb[0].mxu0 %v2077
        %v2202 = vpop.f32.mrb[0].mxu0
        %v2203 = vadd.f32 0.0, %v2202
        %v2204 = vpop.f32.mrb[0].mxu0
        %2205 = vmatprep.mubr.f32.mxu0 0.0
        %2206 = vmatmul.mubr.f32.gmra.mrb[0].mxu0 %v2079
        %v2207 = vpop.f32.mrb[0].mxu0
        %v2208 = vadd.f32 0.0, %v2207
        %v2209 = vpop.f32.mrb[0].mxu0
        %2210 = vmatprep.mubr.f32.mxu0 0.0
        %2211 = vmatmul.mubr.f32.gmra.mrb[0].mxu0 %v2081
        %v2212 = vpop.f32.mrb[0].mxu0
        %v2213 = vadd.f32 0.0, %v2212
        %v2214 = vpop.f32.mrb[0].mxu0
        %2215 = vmatprep.mubr.f32.mxu0 0.0
        %2216 = vmatmul.mubr.f32.gmra.mrb[0].mxu0 %v2083
        %v2217 = vpop.f32.mrb[0].mxu0
        %v2218 = vadd.f32 0.0, %v2217
        %v2219 = vpop.f32.mrb[0].mxu0
        %2220 = vmatprep.mubr.f32.mxu0 0.0
        %2221 = vmatmul.mubr.f32.gmra.mrb[0].mxu0 %v2085
        %v2222 = vpop.f32.mrb[0].mxu0
        %v2223 = vadd.f32 0.0, %v2222
        %v2224 = vpop.f32.mrb[0].mxu0
        %2225 = vmatprep.mubr.f32.mxu0 0.0
        %2226 = vmatmul.mubr.f32.gmra.mrb[0].mxu0 %v2087
        %v2227 = vpop.f32.mrb[0].mxu0
        %v2228 = vadd.f32 0.0, %v2227
        %v2229 = vpop.f32.mrb[0].mxu0
        %2230 = vmatprep.mubr.f32.mxu0 0.0
        %2231 = vmatmul.mubr.f32.gmra.mrb[0].mxu0 %v2089
        %v2232 = vpop.f32.mrb[0].mxu0
        %v2233 = vadd.f32 0.0, %v2232
        %v2234 = vpop.f32.mrb[0].mxu0
        %2235 = vmatprep.mubr.f32.mxu0 0.0
        %2236 = vmatmul.mubr.f32.gmra.mrb[0].mxu0 %v2091
        %v2237 = vpop.f32.mrb[0].mxu0
        %v2238 = vadd.f32 0.0, %v2237
        %v2239 = vpop.f32.mrb[0].mxu0
        %2240 = vdwg.mxu0
        %v2241 = vadd.f32 %v2003, %v2163
        %v2242 = vadd.f32 %v2004, %v2168
        %v2243 = vadd.f32 %v2005, %v2173
        %v2244 = vadd.f32 %v2006, %v2178
        %v2245 = vadd.f32 %v2007, %v2183
        %v2246 = vadd.f32 %v2008, %v2188
        %v2247 = vadd.f32 %v2009, %v2193
        %v2248 = vadd.f32 %v2010, %v2198
        %v2249 = vadd.f32 %v2011, %v2203
        %v2250 = vadd.f32 %v2012, %v2208
        %v2251 = vadd.f32 %v2013, %v2213
        %v2252 = vadd.f32 %v2014, %v2218
        %v2253 = vadd.f32 %v2015, %v2223
        %v2254 = vadd.f32 %v2016, %v2228
        %v2255 = vadd.f32 %v2017, %v2233
        %v2256 = vadd.f32 %v2018, %v2238
        %s2257 = sadd.s32 %s836, 2
        %s2258 = smul.u32 %s2257, 24
        %s2259 = scalar_lea.vmem [#allocation2], %s2258
        %v2260 = vld [vmem:[%s2259] sm:$0xff]
        %v2261 = vld [vmem:[%s2259 + $0x8] sm:$0xff]
        %v2262 = vld [vmem:[%s2259 + $0x10] sm:$0x3]
        %v2263 = vld [vmem:[%s2259 + $0x18] sm:$0xff]
        %v2264 = vld [vmem:[%s2259 + $0x20] sm:$0xff]
        %v2265 = vld [vmem:[%s2259 + $0x28] sm:$0x3]
        %v2266 = vld [vmem:[%s2259 + $0x30] sm:$0xff]
        %v2267 = vld [vmem:[%s2259 + $0x38] sm:$0xff]
        %v2268 = vld [vmem:[%s2259 + $0x40] sm:$0x3]
        %v2269 = vld [vmem:[%s2259 + $0x48] sm:$0xff]
        %v2270 = vld [vmem:[%s2259 + $0x50] sm:$0xff]
        %v2271 = vld [vmem:[%s2259 + $0x58] sm:$0x3]
        %v2272 = vld [vmem:[%s2259 + $0x60] sm:$0xff]
        %v2273 = vld [vmem:[%s2259 + $0x68] sm:$0xff]
        %v2274 = vld [vmem:[%s2259 + $0x70] sm:$0x3]
        %v2275 = vld [vmem:[%s2259 + $0x78] sm:$0xff]
        %v2276 = vld [vmem:[%s2259 + $0x80] sm:$0xff]
        %v2277 = vld [vmem:[%s2259 + $0x88] sm:$0x3]
        %v2278 = vld [vmem:[%s2259 + $0x90] sm:$0xff]
        %v2279 = vld [vmem:[%s2259 + $0x98] sm:$0xff]
        %v2280 = vld [vmem:[%s2259 + $0xa0] sm:$0x3]
        %v2281 = vld [vmem:[%s2259 + $0xa8] sm:$0xff]
        %v2282 = vld [vmem:[%s2259 + $0xb0] sm:$0xff]
        %v2283 = vld [vmem:[%s2259 + $0xb8] sm:$0x3]
        %s2284 = scalar_lea.vmem %s3, 24
        %v2285 = vld [vmem:[%s2284] sm:$0xf]
        %v2287 = vsel %vm931, %v2260, 0
        %v2290 = vsel %vm931, %v2261, 0
        %v2293 = vsel %vm931, %v2263, 0
        %v2296 = vsel %vm931, %v2264, 0
        %v2299 = vsel %vm931, %v2266, 0
        %v2302 = vsel %vm931, %v2267, 0
        %v2305 = vsel %vm931, %v2269, 0
        %v2308 = vsel %vm931, %v2270, 0
        %v2311 = vsel %vm931, %v2272, 0
        %v2314 = vsel %vm931, %v2273, 0
        %v2317 = vsel %vm931, %v2275, 0
        %v2320 = vsel %vm931, %v2276, 0
        %v2323 = vsel %vm931, %v2278, 0
        %v2326 = vsel %vm931, %v2279, 0
        %v2329 = vsel %vm931, %v2281, 0
        %v2332 = vsel %vm931, %v2282, 0
        %v2335 = vsel %vm964, %v2285, 0
        %2337 = vmatprep.subr.mxu0 0.0
        %2338 = vmatpush1.msra.mxu0 %v2335
        %2339 = vmatprep.subr.mxu0 0.0
        %2340 = vmatpush1.msra.mxu0 0.0
        %2341 = vmatprep.subr.mxu0 0.0
        %2342 = vmatpush1.msra.mxu0 0.0
        %2343 = vmatprep.subr.mxu0 0.0
        %2344 = vmatpush1.msra.mxu0 0.0
        %2345 = vmatprep.subr.mxu0 0.0
        %2346 = vmatpush1.msra.mxu0 0.0
        %2347 = vmatprep.subr.mxu0 0.0
        %2348 = vmatpush1.msra.mxu0 0.0
        %2349 = vmatprep.subr.mxu0 0.0
        %2350 = vmatpush1.msra.mxu0 0.0
        %2351 = vmatprep.subr.mxu0 0.0
        %2352 = vmatpush1.msra.mxu0 0.0
        %2353 = vmatprep.subr.mxu0 0.0
        %2354 = vmatpush1.msra.mxu0 0.0
        %2355 = vmatprep.subr.mxu0 0.0
        %2356 = vmatpush1.msra.mxu0 0.0
        %2357 = vmatprep.subr.mxu0 0.0
        %2358 = vmatpush1.msra.mxu0 0.0
        %2359 = vmatprep.subr.mxu0 0.0
        %2360 = vmatpush1.msra.mxu0 0.0
        %2361 = vmatprep.subr.mxu0 0.0
        %2362 = vmatpush1.msra.mxu0 0.0
        %2363 = vmatprep.subr.mxu0 0.0
        %2364 = vmatpush1.msra.mxu0 0.0
        %2365 = vmatprep.subr.mxu0 0.0
        %2366 = vmatpush1.msra.mxu0 0.0
        %2367 = vmatprep.subr.mxu0 0.0
        %2368 = vmatpush1.msra.mxu0 0.0
        %2369 = vmatprep.subr.mxu0 0.0
        %2370 = vmatpush1.msra.mxu0 0.0
        %2371 = vmatprep.subr.mxu0 0.0
        %2372 = vmatpush1.msra.mxu0 0.0
        %2373 = vmatprep.subr.mxu0 0.0
        %2374 = vmatpush1.msra.mxu0 0.0
        %2375 = vmatprep.subr.mxu0 0.0
        %2376 = vmatpush1.msra.mxu0 0.0
        %2377 = vmatprep.subr.mxu0 0.0
        %2378 = vmatpush1.msra.mxu0 0.0
        %2379 = vmatprep.subr.mxu0 0.0
        %2380 = vmatpush1.msra.mxu0 0.0
        %2381 = vmatprep.subr.mxu0 0.0
        %2382 = vmatpush1.msra.mxu0 0.0
        %2383 = vmatprep.subr.mxu0 0.0
        %2384 = vmatpush1.msra.mxu0 0.0
        %2385 = vmatprep.subr.mxu0 0.0
        %2386 = vmatpush1.msra.mxu0 0.0
        %2387 = vmatprep.subr.mxu0 0.0
        %2388 = vmatpush1.msra.mxu0 0.0
        %2389 = vmatprep.subr.mxu0 0.0
        %2390 = vmatpush1.msra.mxu0 0.0
        %2391 = vmatprep.subr.mxu0 0.0
        %2392 = vmatpush1.msra.mxu0 0.0
        %2393 = vmatprep.subr.mxu0 0.0
        %2394 = vmatpush1.msra.mxu0 0.0
        %2395 = vmatprep.subr.mxu0 0.0
        %2396 = vmatpush1.msra.mxu0 0.0
        %2397 = vmatprep.subr.mxu0 0.0
        %2398 = vmatpush1.msra.mxu0 0.0
        %2399 = vmatprep.subr.mxu0 0.0
        %2400 = vmatpush1.msra.mxu0 0.0
        %2401 = vmatprep.mubr.f32.mxu0 0.0
        %2402 = vmatmul.mubr.f32.gmra.mrb[0].mxu0 %v2287
        %v2403 = vpop.f32.mrb[0].mxu0
        %v2404 = vadd.f32 0.0, %v2403
        %v2405 = vpop.f32.mrb[0].mxu0
        %2406 = vmatprep.mubr.f32.mxu0 0.0
        %2407 = vmatmul.mubr.f32.gmra.mrb[0].mxu0 %v2290
        %v2408 = vpop.f32.mrb[0].mxu0
        %v2409 = vadd.f32 0.0, %v2408
        %v2410 = vpop.f32.mrb[0].mxu0
        %2411 = vmatprep.mubr.f32.mxu0 0.0
        %2412 = vmatmul.mubr.f32.gmra.mrb[0].mxu0 %v2293
        %v2413 = vpop.f32.mrb[0].mxu0
        %v2414 = vadd.f32 0.0, %v2413
        %v2415 = vpop.f32.mrb[0].mxu0
        %2416 = vmatprep.mubr.f32.mxu0 0.0
        %2417 = vmatmul.mubr.f32.gmra.mrb[0].mxu0 %v2296
        %v2418 = vpop.f32.mrb[0].mxu0
        %v2419 = vadd.f32 0.0, %v2418
        %v2420 = vpop.f32.mrb[0].mxu0
        %2421 = vmatprep.mubr.f32.mxu0 0.0
        %2422 = vmatmul.mubr.f32.gmra.mrb[0].mxu0 %v2299
        %v2423 = vpop.f32.mrb[0].mxu0
        %v2424 = vadd.f32 0.0, %v2423
        %v2425 = vpop.f32.mrb[0].mxu0
        %2426 = vmatprep.mubr.f32.mxu0 0.0
        %2427 = vmatmul.mubr.f32.gmra.mrb[0].mxu0 %v2302
        %v2428 = vpop.f32.mrb[0].mxu0
        %v2429 = vadd.f32 0.0, %v2428
        %v2430 = vpop.f32.mrb[0].mxu0
        %2431 = vmatprep.mubr.f32.mxu0 0.0
        %2432 = vmatmul.mubr.f32.gmra.mrb[0].mxu0 %v2305
        %v2433 = vpop.f32.mrb[0].mxu0
        %v2434 = vadd.f32 0.0, %v2433
        %v2435 = vpop.f32.mrb[0].mxu0
        %2436 = vmatprep.mubr.f32.mxu0 0.0
        %2437 = vmatmul.mubr.f32.gmra.mrb[0].mxu0 %v2308
        %v2438 = vpop.f32.mrb[0].mxu0
        %v2439 = vadd.f32 0.0, %v2438
        %v2440 = vpop.f32.mrb[0].mxu0
        %2441 = vmatprep.mubr.f32.mxu0 0.0
        %2442 = vmatmul.mubr.f32.gmra.mrb[0].mxu0 %v2311
        %v2443 = vpop.f32.mrb[0].mxu0
        %v2444 = vadd.f32 0.0, %v2443
        %v2445 = vpop.f32.mrb[0].mxu0
        %2446 = vmatprep.mubr.f32.mxu0 0.0
        %2447 = vmatmul.mubr.f32.gmra.mrb[0].mxu0 %v2314
        %v2448 = vpop.f32.mrb[0].mxu0
        %v2449 = vadd.f32 0.0, %v2448
        %v2450 = vpop.f32.mrb[0].mxu0
        %2451 = vmatprep.mubr.f32.mxu0 0.0
        %2452 = vmatmul.mubr.f32.gmra.mrb[0].mxu0 %v2317
        %v2453 = vpop.f32.mrb[0].mxu0
        %v2454 = vadd.f32 0.0, %v2453
        %v2455 = vpop.f32.mrb[0].mxu0
        %2456 = vmatprep.mubr.f32.mxu0 0.0
        %2457 = vmatmul.mubr.f32.gmra.mrb[0].mxu0 %v2320
        %v2458 = vpop.f32.mrb[0].mxu0
        %v2459 = vadd.f32 0.0, %v2458
        %v2460 = vpop.f32.mrb[0].mxu0
        %2461 = vmatprep.mubr.f32.mxu0 0.0
        %2462 = vmatmul.mubr.f32.gmra.mrb[0].mxu0 %v2323
        %v2463 = vpop.f32.mrb[0].mxu0
        %v2464 = vadd.f32 0.0, %v2463
        %v2465 = vpop.f32.mrb[0].mxu0
        %2466 = vmatprep.mubr.f32.mxu0 0.0
        %2467 = vmatmul.mubr.f32.gmra.mrb[0].mxu0 %v2326
        %v2468 = vpop.f32.mrb[0].mxu0
        %v2469 = vadd.f32 0.0, %v2468
        %v2470 = vpop.f32.mrb[0].mxu0
        %2471 = vmatprep.mubr.f32.mxu0 0.0
        %2472 = vmatmul.mubr.f32.gmra.mrb[0].mxu0 %v2329
        %v2473 = vpop.f32.mrb[0].mxu0
        %v2474 = vadd.f32 0.0, %v2473
        %v2475 = vpop.f32.mrb[0].mxu0
        %2476 = vmatprep.mubr.f32.mxu0 0.0
        %2477 = vmatmul.mubr.f32.gmra.mrb[0].mxu0 %v2332
        %v2478 = vpop.f32.mrb[0].mxu0
        %v2479 = vadd.f32 0.0, %v2478
        %v2480 = vpop.f32.mrb[0].mxu0
        %2481 = vdwg.mxu0
        %v2482 = vadd.f32 %v2241, %v2404
        %v2483 = vadd.f32 %v2242, %v2409
        %v2484 = vadd.f32 %v2243, %v2414
        %v2485 = vadd.f32 %v2244, %v2419
        %v2486 = vadd.f32 %v2245, %v2424
        %v2487 = vadd.f32 %v2246, %v2429
        %v2488 = vadd.f32 %v2247, %v2434
        %v2489 = vadd.f32 %v2248, %v2439
        %v2490 = vadd.f32 %v2249, %v2444
        %v2491 = vadd.f32 %v2250, %v2449
        %v2492 = vadd.f32 %v2251, %v2454
        %v2493 = vadd.f32 %v2252, %v2459
        %v2494 = vadd.f32 %v2253, %v2464
        %v2495 = vadd.f32 %v2254, %v2469
        %v2496 = vadd.f32 %v2255, %v2474
        %v2497 = vadd.f32 %v2256, %v2479
        %v2506 = vrot.slane %v2260, 1
        %v2507 = vrot.slane %v2261, 1
        %v2508 = vsel %vm888, %v2506, %v2507
        %v2509 = vrot.slane %v2262, 1
        %v2510 = vsel %vm888, %v2507, %v2509
        %v2511 = vrot.slane %v2263, 1
        %v2512 = vrot.slane %v2264, 1
        %v2513 = vsel %vm888, %v2511, %v2512
        %v2514 = vrot.slane %v2265, 1
        %v2515 = vsel %vm888, %v2512, %v2514
        %v2516 = vrot.slane %v2266, 1
        %v2517 = vrot.slane %v2267, 1
        %v2518 = vsel %vm888, %v2516, %v2517
        %v2519 = vrot.slane %v2268, 1
        %v2520 = vsel %vm888, %v2517, %v2519
        %v2521 = vrot.slane %v2269, 1
        %v2522 = vrot.slane %v2270, 1
        %v2523 = vsel %vm888, %v2521, %v2522
        %v2524 = vrot.slane %v2271, 1
        %v2525 = vsel %vm888, %v2522, %v2524
        %v2526 = vrot.slane %v2272, 1
        %v2527 = vrot.slane %v2273, 1
        %v2528 = vsel %vm888, %v2526, %v2527
        %v2529 = vrot.slane %v2274, 1
        %v2530 = vsel %vm888, %v2527, %v2529
        %v2531 = vrot.slane %v2275, 1
        %v2532 = vrot.slane %v2276, 1
        %v2533 = vsel %vm888, %v2531, %v2532
        %v2534 = vrot.slane %v2277, 1
        %v2535 = vsel %vm888, %v2532, %v2534
        %v2536 = vrot.slane %v2278, 1
        %v2537 = vrot.slane %v2279, 1
        %v2538 = vsel %vm888, %v2536, %v2537
        %v2539 = vrot.slane %v2280, 1
        %v2540 = vsel %vm888, %v2537, %v2539
        %v2541 = vrot.slane %v2281, 1
        %v2542 = vrot.slane %v2282, 1
        %v2543 = vsel %vm888, %v2541, %v2542
        %v2544 = vrot.slane %v2283, 1
        %v2545 = vsel %vm888, %v2542, %v2544
        %s2546 = scalar_lea.vmem %s3, 28
        %v2547 = vld [vmem:[%s2546] sm:$0xf]
        %v2548 = vsel %vm931, %v2508, 0
        %v2550 = vsel %vm931, %v2510, 0
        %v2552 = vsel %vm931, %v2513, 0
        %v2554 = vsel %vm931, %v2515, 0
        %v2556 = vsel %vm931, %v2518, 0
        %v2558 = vsel %vm931, %v2520, 0
        %v2560 = vsel %vm931, %v2523, 0
        %v2562 = vsel %vm931, %v2525, 0
        %v2564 = vsel %vm931, %v2528, 0
        %v2566 = vsel %vm931, %v2530, 0
        %v2568 = vsel %vm931, %v2533, 0
        %v2570 = vsel %vm931, %v2535, 0
        %v2572 = vsel %vm931, %v2538, 0
        %v2574 = vsel %vm931, %v2540, 0
        %v2576 = vsel %vm931, %v2543, 0
        %v2578 = vsel %vm931, %v2545, 0
        %v2581 = vsel %vm964, %v2547, 0
        %2583 = vmatprep.subr.mxu0 0.0
        %2584 = vmatpush1.msra.mxu0 %v2581
        %2585 = vmatprep.subr.mxu0 0.0
        %2586 = vmatpush1.msra.mxu0 0.0
        %2587 = vmatprep.subr.mxu0 0.0
        %2588 = vmatpush1.msra.mxu0 0.0
        %2589 = vmatprep.subr.mxu0 0.0
        %2590 = vmatpush1.msra.mxu0 0.0
        %2591 = vmatprep.subr.mxu0 0.0
        %2592 = vmatpush1.msra.mxu0 0.0
        %2593 = vmatprep.subr.mxu0 0.0
        %2594 = vmatpush1.msra.mxu0 0.0
        %2595 = vmatprep.subr.mxu0 0.0
        %2596 = vmatpush1.msra.mxu0 0.0
        %2597 = vmatprep.subr.mxu0 0.0
        %2598 = vmatpush1.msra.mxu0 0.0
        %2599 = vmatprep.subr.mxu0 0.0
        %2600 = vmatpush1.msra.mxu0 0.0
        %2601 = vmatprep.subr.mxu0 0.0
        %2602 = vmatpush1.msra.mxu0 0.0
        %2603 = vmatprep.subr.mxu0 0.0
        %2604 = vmatpush1.msra.mxu0 0.0
        %2605 = vmatprep.subr.mxu0 0.0
        %2606 = vmatpush1.msra.mxu0 0.0
        %2607 = vmatprep.subr.mxu0 0.0
        %2608 = vmatpush1.msra.mxu0 0.0
        %2609 = vmatprep.subr.mxu0 0.0
        %2610 = vmatpush1.msra.mxu0 0.0
        %2611 = vmatprep.subr.mxu0 0.0
        %2612 = vmatpush1.msra.mxu0 0.0
        %2613 = vmatprep.subr.mxu0 0.0
        %2614 = vmatpush1.msra.mxu0 0.0
        %2615 = vmatprep.subr.mxu0 0.0
        %2616 = vmatpush1.msra.mxu0 0.0
        %2617 = vmatprep.subr.mxu0 0.0
        %2618 = vmatpush1.msra.mxu0 0.0
        %2619 = vmatprep.subr.mxu0 0.0
        %2620 = vmatpush1.msra.mxu0 0.0
        %2621 = vmatprep.subr.mxu0 0.0
        %2622 = vmatpush1.msra.mxu0 0.0
        %2623 = vmatprep.subr.mxu0 0.0
        %2624 = vmatpush1.msra.mxu0 0.0
        %2625 = vmatprep.subr.mxu0 0.0
        %2626 = vmatpush1.msra.mxu0 0.0
        %2627 = vmatprep.subr.mxu0 0.0
        %2628 = vmatpush1.msra.mxu0 0.0
        %2629 = vmatprep.subr.mxu0 0.0
        %2630 = vmatpush1.msra.mxu0 0.0
        %2631 = vmatprep.subr.mxu0 0.0
        %2632 = vmatpush1.msra.mxu0 0.0
        %2633 = vmatprep.subr.mxu0 0.0
        %2634 = vmatpush1.msra.mxu0 0.0
        %2635 = vmatprep.subr.mxu0 0.0
        %2636 = vmatpush1.msra.mxu0 0.0
        %2637 = vmatprep.subr.mxu0 0.0
        %2638 = vmatpush1.msra.mxu0 0.0
        %2639 = vmatprep.subr.mxu0 0.0
        %2640 = vmatpush1.msra.mxu0 0.0
        %2641 = vmatprep.subr.mxu0 0.0
        %2642 = vmatpush1.msra.mxu0 0.0
        %2643 = vmatprep.subr.mxu0 0.0
        %2644 = vmatpush1.msra.mxu0 0.0
        %2645 = vmatprep.subr.mxu0 0.0
        %2646 = vmatpush1.msra.mxu0 0.0
        %2647 = vmatprep.mubr.f32.mxu0 0.0
        %2648 = vmatmul.mubr.f32.gmra.mrb[0].mxu0 %v2548
        %v2649 = vpop.f32.mrb[0].mxu0
        %v2650 = vadd.f32 0.0, %v2649
        %v2651 = vpop.f32.mrb[0].mxu0
        %2652 = vmatprep.mubr.f32.mxu0 0.0
        %2653 = vmatmul.mubr.f32.gmra.mrb[0].mxu0 %v2550
        %v2654 = vpop.f32.mrb[0].mxu0
        %v2655 = vadd.f32 0.0, %v2654
        %v2656 = vpop.f32.mrb[0].mxu0
        %2657 = vmatprep.mubr.f32.mxu0 0.0
        %2658 = vmatmul.mubr.f32.gmra.mrb[0].mxu0 %v2552
        %v2659 = vpop.f32.mrb[0].mxu0
        %v2660 = vadd.f32 0.0, %v2659
        %v2661 = vpop.f32.mrb[0].mxu0
        %2662 = vmatprep.mubr.f32.mxu0 0.0
        %2663 = vmatmul.mubr.f32.gmra.mrb[0].mxu0 %v2554
        %v2664 = vpop.f32.mrb[0].mxu0
        %v2665 = vadd.f32 0.0, %v2664
        %v2666 = vpop.f32.mrb[0].mxu0
        %2667 = vmatprep.mubr.f32.mxu0 0.0
        %2668 = vmatmul.mubr.f32.gmra.mrb[0].mxu0 %v2556
        %v2669 = vpop.f32.mrb[0].mxu0
        %v2670 = vadd.f32 0.0, %v2669
        %v2671 = vpop.f32.mrb[0].mxu0
        %2672 = vmatprep.mubr.f32.mxu0 0.0
        %2673 = vmatmul.mubr.f32.gmra.mrb[0].mxu0 %v2558
        %v2674 = vpop.f32.mrb[0].mxu0
        %v2675 = vadd.f32 0.0, %v2674
        %v2676 = vpop.f32.mrb[0].mxu0
        %2677 = vmatprep.mubr.f32.mxu0 0.0
        %2678 = vmatmul.mubr.f32.gmra.mrb[0].mxu0 %v2560
        %v2679 = vpop.f32.mrb[0].mxu0
        %v2680 = vadd.f32 0.0, %v2679
        %v2681 = vpop.f32.mrb[0].mxu0
        %2682 = vmatprep.mubr.f32.mxu0 0.0
        %2683 = vmatmul.mubr.f32.gmra.mrb[0].mxu0 %v2562
        %v2684 = vpop.f32.mrb[0].mxu0
        %v2685 = vadd.f32 0.0, %v2684
        %v2686 = vpop.f32.mrb[0].mxu0
        %2687 = vmatprep.mubr.f32.mxu0 0.0
        %2688 = vmatmul.mubr.f32.gmra.mrb[0].mxu0 %v2564
        %v2689 = vpop.f32.mrb[0].mxu0
        %v2690 = vadd.f32 0.0, %v2689
        %v2691 = vpop.f32.mrb[0].mxu0
        %2692 = vmatprep.mubr.f32.mxu0 0.0
        %2693 = vmatmul.mubr.f32.gmra.mrb[0].mxu0 %v2566
        %v2694 = vpop.f32.mrb[0].mxu0
        %v2695 = vadd.f32 0.0, %v2694
        %v2696 = vpop.f32.mrb[0].mxu0
        %2697 = vmatprep.mubr.f32.mxu0 0.0
        %2698 = vmatmul.mubr.f32.gmra.mrb[0].mxu0 %v2568
        %v2699 = vpop.f32.mrb[0].mxu0
        %v2700 = vadd.f32 0.0, %v2699
        %v2701 = vpop.f32.mrb[0].mxu0
        %2702 = vmatprep.mubr.f32.mxu0 0.0
        %2703 = vmatmul.mubr.f32.gmra.mrb[0].mxu0 %v2570
        %v2704 = vpop.f32.mrb[0].mxu0
        %v2705 = vadd.f32 0.0, %v2704
        %v2706 = vpop.f32.mrb[0].mxu0
        %2707 = vmatprep.mubr.f32.mxu0 0.0
        %2708 = vmatmul.mubr.f32.gmra.mrb[0].mxu0 %v2572
        %v2709 = vpop.f32.mrb[0].mxu0
        %v2710 = vadd.f32 0.0, %v2709
        %v2711 = vpop.f32.mrb[0].mxu0
        %2712 = vmatprep.mubr.f32.mxu0 0.0
        %2713 = vmatmul.mubr.f32.gmra.mrb[0].mxu0 %v2574
        %v2714 = vpop.f32.mrb[0].mxu0
        %v2715 = vadd.f32 0.0, %v2714
        %v2716 = vpop.f32.mrb[0].mxu0
        %2717 = vmatprep.mubr.f32.mxu0 0.0
        %2718 = vmatmul.mubr.f32.gmra.mrb[0].mxu0 %v2576
        %v2719 = vpop.f32.mrb[0].mxu0
        %v2720 = vadd.f32 0.0, %v2719
        %v2721 = vpop.f32.mrb[0].mxu0
        %2722 = vmatprep.mubr.f32.mxu0 0.0
        %2723 = vmatmul.mubr.f32.gmra.mrb[0].mxu0 %v2578
        %v2724 = vpop.f32.mrb[0].mxu0
        %v2725 = vadd.f32 0.0, %v2724
        %v2726 = vpop.f32.mrb[0].mxu0
        %2727 = vdwg.mxu0
        %v2728 = vadd.f32 %v2482, %v2650
        %v2729 = vadd.f32 %v2483, %v2655
        %v2730 = vadd.f32 %v2484, %v2660
        %v2731 = vadd.f32 %v2485, %v2665
        %v2732 = vadd.f32 %v2486, %v2670
        %v2733 = vadd.f32 %v2487, %v2675
        %v2734 = vadd.f32 %v2488, %v2680
        %v2735 = vadd.f32 %v2489, %v2685
        %v2736 = vadd.f32 %v2490, %v2690
        %v2737 = vadd.f32 %v2491, %v2695
        %v2738 = vadd.f32 %v2492, %v2700
        %v2739 = vadd.f32 %v2493, %v2705
        %v2740 = vadd.f32 %v2494, %v2710
        %v2741 = vadd.f32 %v2495, %v2715
        %v2742 = vadd.f32 %v2496, %v2720
        %v2743 = vadd.f32 %v2497, %v2725
        %v2744 = vrot.slane %v2260, 2
        %v2745 = vrot.slane %v2261, 2
        %v2746 = vsel %vm1293, %v2744, %v2745
        %v2747 = vrot.slane %v2262, 2
        %v2748 = vsel %vm1293, %v2745, %v2747
        %v2749 = vrot.slane %v2263, 2
        %v2750 = vrot.slane %v2264, 2
        %v2751 = vsel %vm1293, %v2749, %v2750
        %v2752 = vrot.slane %v2265, 2
        %v2753 = vsel %vm1293, %v2750, %v2752
        %v2754 = vrot.slane %v2266, 2
        %v2755 = vrot.slane %v2267, 2
        %v2756 = vsel %vm1293, %v2754, %v2755
        %v2757 = vrot.slane %v2268, 2
        %v2758 = vsel %vm1293, %v2755, %v2757
        %v2759 = vrot.slane %v2269, 2
        %v2760 = vrot.slane %v2270, 2
        %v2761 = vsel %vm1293, %v2759, %v2760
        %v2762 = vrot.slane %v2271, 2
        %v2763 = vsel %vm1293, %v2760, %v2762
        %v2764 = vrot.slane %v2272, 2
        %v2765 = vrot.slane %v2273, 2
        %v2766 = vsel %vm1293, %v2764, %v2765
        %v2767 = vrot.slane %v2274, 2
        %v2768 = vsel %vm1293, %v2765, %v2767
        %v2769 = vrot.slane %v2275, 2
        %v2770 = vrot.slane %v2276, 2
        %v2771 = vsel %vm1293, %v2769, %v2770
        %v2772 = vrot.slane %v2277, 2
        %v2773 = vsel %vm1293, %v2770, %v2772
        %v2774 = vrot.slane %v2278, 2
        %v2775 = vrot.slane %v2279, 2
        %v2776 = vsel %vm1293, %v2774, %v2775
        %v2777 = vrot.slane %v2280, 2
        %v2778 = vsel %vm1293, %v2775, %v2777
        %v2779 = vrot.slane %v2281, 2
        %v2780 = vrot.slane %v2282, 2
        %v2781 = vsel %vm1293, %v2779, %v2780
        %v2782 = vrot.slane %v2283, 2
        %v2783 = vsel %vm1293, %v2780, %v2782
        %s2784 = scalar_lea.vmem %s3, 32
        %v2785 = vld [vmem:[%s2784] sm:$0xf]
        %v2786 = vsel %vm931, %v2746, 0
        %v2788 = vsel %vm931, %v2748, 0
        %v2790 = vsel %vm931, %v2751, 0
        %v2792 = vsel %vm931, %v2753, 0
        %v2794 = vsel %vm931, %v2756, 0
        %v2796 = vsel %vm931, %v2758, 0
        %v2798 = vsel %vm931, %v2761, 0
        %v2800 = vsel %vm931, %v2763, 0
        %v2802 = vsel %vm931, %v2766, 0
        %v2804 = vsel %vm931, %v2768, 0
        %v2806 = vsel %vm931, %v2771, 0
        %v2808 = vsel %vm931, %v2773, 0
        %v2810 = vsel %vm931, %v2776, 0
        %v2812 = vsel %vm931, %v2778, 0
        %v2814 = vsel %vm931, %v2781, 0
        %v2816 = vsel %vm931, %v2783, 0
        %v2819 = vsel %vm964, %v2785, 0
        %2821 = vmatprep.subr.mxu0 0.0
        %2822 = vmatpush1.msra.mxu0 %v2819
        %2823 = vmatprep.subr.mxu0 0.0
        %2824 = vmatpush1.msra.mxu0 0.0
        %2825 = vmatprep.subr.mxu0 0.0
        %2826 = vmatpush1.msra.mxu0 0.0
        %2827 = vmatprep.subr.mxu0 0.0
        %2828 = vmatpush1.msra.mxu0 0.0
        %2829 = vmatprep.subr.mxu0 0.0
        %2830 = vmatpush1.msra.mxu0 0.0
        %2831 = vmatprep.subr.mxu0 0.0
        %2832 = vmatpush1.msra.mxu0 0.0
        %2833 = vmatprep.subr.mxu0 0.0
        %2834 = vmatpush1.msra.mxu0 0.0
        %2835 = vmatprep.subr.mxu0 0.0
        %2836 = vmatpush1.msra.mxu0 0.0
        %2837 = vmatprep.subr.mxu0 0.0
        %2838 = vmatpush1.msra.mxu0 0.0
        %2839 = vmatprep.subr.mxu0 0.0
        %2840 = vmatpush1.msra.mxu0 0.0
        %2841 = vmatprep.subr.mxu0 0.0
        %2842 = vmatpush1.msra.mxu0 0.0
        %2843 = vmatprep.subr.mxu0 0.0
        %2844 = vmatpush1.msra.mxu0 0.0
        %2845 = vmatprep.subr.mxu0 0.0
        %2846 = vmatpush1.msra.mxu0 0.0
        %2847 = vmatprep.subr.mxu0 0.0
        %2848 = vmatpush1.msra.mxu0 0.0
        %2849 = vmatprep.subr.mxu0 0.0
        %2850 = vmatpush1.msra.mxu0 0.0
        %2851 = vmatprep.subr.mxu0 0.0
        %2852 = vmatpush1.msra.mxu0 0.0
        %2853 = vmatprep.subr.mxu0 0.0
        %2854 = vmatpush1.msra.mxu0 0.0
        %2855 = vmatprep.subr.mxu0 0.0
        %2856 = vmatpush1.msra.mxu0 0.0
        %2857 = vmatprep.subr.mxu0 0.0
        %2858 = vmatpush1.msra.mxu0 0.0
        %2859 = vmatprep.subr.mxu0 0.0
        %2860 = vmatpush1.msra.mxu0 0.0
        %2861 = vmatprep.subr.mxu0 0.0
        %2862 = vmatpush1.msra.mxu0 0.0
        %2863 = vmatprep.subr.mxu0 0.0
        %2864 = vmatpush1.msra.mxu0 0.0
        %2865 = vmatprep.subr.mxu0 0.0
        %2866 = vmatpush1.msra.mxu0 0.0
        %2867 = vmatprep.subr.mxu0 0.0
        %2868 = vmatpush1.msra.mxu0 0.0
        %2869 = vmatprep.subr.mxu0 0.0
        %2870 = vmatpush1.msra.mxu0 0.0
        %2871 = vmatprep.subr.mxu0 0.0
        %2872 = vmatpush1.msra.mxu0 0.0
        %2873 = vmatprep.subr.mxu0 0.0
        %2874 = vmatpush1.msra.mxu0 0.0
        %2875 = vmatprep.subr.mxu0 0.0
        %2876 = vmatpush1.msra.mxu0 0.0
        %2877 = vmatprep.subr.mxu0 0.0
        %2878 = vmatpush1.msra.mxu0 0.0
        %2879 = vmatprep.subr.mxu0 0.0
        %2880 = vmatpush1.msra.mxu0 0.0
        %2881 = vmatprep.subr.mxu0 0.0
        %2882 = vmatpush1.msra.mxu0 0.0
        %2883 = vmatprep.subr.mxu0 0.0
        %2884 = vmatpush1.msra.mxu0 0.0
        %2885 = vmatprep.mubr.f32.mxu0 0.0
        %2886 = vmatmul.mubr.f32.gmra.mrb[0].mxu0 %v2786
        %v2887 = vpop.f32.mrb[0].mxu0
        %v2888 = vadd.f32 0.0, %v2887
        %v2889 = vpop.f32.mrb[0].mxu0
        %2890 = vmatprep.mubr.f32.mxu0 0.0
        %2891 = vmatmul.mubr.f32.gmra.mrb[0].mxu0 %v2788
        %v2892 = vpop.f32.mrb[0].mxu0
        %v2893 = vadd.f32 0.0, %v2892
        %v2894 = vpop.f32.mrb[0].mxu0
        %2895 = vmatprep.mubr.f32.mxu0 0.0
        %2896 = vmatmul.mubr.f32.gmra.mrb[0].mxu0 %v2790
        %v2897 = vpop.f32.mrb[0].mxu0
        %v2898 = vadd.f32 0.0, %v2897
        %v2899 = vpop.f32.mrb[0].mxu0
        %2900 = vmatprep.mubr.f32.mxu0 0.0
        %2901 = vmatmul.mubr.f32.gmra.mrb[0].mxu0 %v2792
        %v2902 = vpop.f32.mrb[0].mxu0
        %v2903 = vadd.f32 0.0, %v2902
        %v2904 = vpop.f32.mrb[0].mxu0
        %2905 = vmatprep.mubr.f32.mxu0 0.0
        %2906 = vmatmul.mubr.f32.gmra.mrb[0].mxu0 %v2794
        %v2907 = vpop.f32.mrb[0].mxu0
        %v2908 = vadd.f32 0.0, %v2907
        %v2909 = vpop.f32.mrb[0].mxu0
        %2910 = vmatprep.mubr.f32.mxu0 0.0
        %2911 = vmatmul.mubr.f32.gmra.mrb[0].mxu0 %v2796
        %v2912 = vpop.f32.mrb[0].mxu0
        %v2913 = vadd.f32 0.0, %v2912
        %v2914 = vpop.f32.mrb[0].mxu0
        %2915 = vmatprep.mubr.f32.mxu0 0.0
        %2916 = vmatmul.mubr.f32.gmra.mrb[0].mxu0 %v2798
        %v2917 = vpop.f32.mrb[0].mxu0
        %v2918 = vadd.f32 0.0, %v2917
        %v2919 = vpop.f32.mrb[0].mxu0
        %2920 = vmatprep.mubr.f32.mxu0 0.0
        %2921 = vmatmul.mubr.f32.gmra.mrb[0].mxu0 %v2800
        %v2922 = vpop.f32.mrb[0].mxu0
        %v2923 = vadd.f32 0.0, %v2922
        %v2924 = vpop.f32.mrb[0].mxu0
        %2925 = vmatprep.mubr.f32.mxu0 0.0
        %2926 = vmatmul.mubr.f32.gmra.mrb[0].mxu0 %v2802
        %v2927 = vpop.f32.mrb[0].mxu0
        %v2928 = vadd.f32 0.0, %v2927
        %v2929 = vpop.f32.mrb[0].mxu0
        %2930 = vmatprep.mubr.f32.mxu0 0.0
        %2931 = vmatmul.mubr.f32.gmra.mrb[0].mxu0 %v2804
        %v2932 = vpop.f32.mrb[0].mxu0
        %v2933 = vadd.f32 0.0, %v2932
        %v2934 = vpop.f32.mrb[0].mxu0
        %2935 = vmatprep.mubr.f32.mxu0 0.0
        %2936 = vmatmul.mubr.f32.gmra.mrb[0].mxu0 %v2806
        %v2937 = vpop.f32.mrb[0].mxu0
        %v2938 = vadd.f32 0.0, %v2937
        %v2939 = vpop.f32.mrb[0].mxu0
        %2940 = vmatprep.mubr.f32.mxu0 0.0
        %2941 = vmatmul.mubr.f32.gmra.mrb[0].mxu0 %v2808
        %v2942 = vpop.f32.mrb[0].mxu0
        %v2943 = vadd.f32 0.0, %v2942
        %v2944 = vpop.f32.mrb[0].mxu0
        %2945 = vmatprep.mubr.f32.mxu0 0.0
        %2946 = vmatmul.mubr.f32.gmra.mrb[0].mxu0 %v2810
        %v2947 = vpop.f32.mrb[0].mxu0
        %v2948 = vadd.f32 0.0, %v2947
        %v2949 = vpop.f32.mrb[0].mxu0
        %2950 = vmatprep.mubr.f32.mxu0 0.0
        %2951 = vmatmul.mubr.f32.gmra.mrb[0].mxu0 %v2812
        %v2952 = vpop.f32.mrb[0].mxu0
        %v2953 = vadd.f32 0.0, %v2952
        %v2954 = vpop.f32.mrb[0].mxu0
        %2955 = vmatprep.mubr.f32.mxu0 0.0
        %2956 = vmatmul.mubr.f32.gmra.mrb[0].mxu0 %v2814
        %v2957 = vpop.f32.mrb[0].mxu0
        %v2958 = vadd.f32 0.0, %v2957
        %v2959 = vpop.f32.mrb[0].mxu0
        %2960 = vmatprep.mubr.f32.mxu0 0.0
        %2961 = vmatmul.mubr.f32.gmra.mrb[0].mxu0 %v2816
        %v2962 = vpop.f32.mrb[0].mxu0
        %v2963 = vadd.f32 0.0, %v2962
        %v2964 = vpop.f32.mrb[0].mxu0
        %2965 = vdwg.mxu0
        %v2966 = vadd.f32 %v2728, %v2888
        %v2967 = vadd.f32 %v2729, %v2893
        %v2968 = vadd.f32 %v2730, %v2898
        %v2969 = vadd.f32 %v2731, %v2903
        %v2970 = vadd.f32 %v2732, %v2908
        %v2971 = vadd.f32 %v2733, %v2913
        %v2972 = vadd.f32 %v2734, %v2918
        %v2973 = vadd.f32 %v2735, %v2923
        %v2974 = vadd.f32 %v2736, %v2928
        %v2975 = vadd.f32 %v2737, %v2933
        %v2976 = vadd.f32 %v2738, %v2938
        %v2977 = vadd.f32 %v2739, %v2943
        %v2978 = vadd.f32 %v2740, %v2948
        %v2979 = vadd.f32 %v2741, %v2953
        %v2980 = vadd.f32 %v2742, %v2958
        %v2981 = vadd.f32 %v2743, %v2963
        %v2982 = vld [vmem:[%s4] sm:$0x1]
        %v2984 = vlaneseq
        %v2985 = vshrl.u32 %v2984, 7
        %v2986 = vsub.s32 0, %v2985
        %v2987 = vrot.slane %v2982, %v2986
        %v2989 = vadd.f32 %v2966, %v2987
        %v2990 = vadd.f32 %v2967, %v2987
        %v2991 = vadd.f32 %v2968, %v2987
        %v2992 = vadd.f32 %v2969, %v2987
        %v2993 = vadd.f32 %v2970, %v2987
        %v2994 = vadd.f32 %v2971, %v2987
        %v2995 = vadd.f32 %v2972, %v2987
        %v2996 = vadd.f32 %v2973, %v2987
        %v2997 = vadd.f32 %v2974, %v2987
        %v2998 = vadd.f32 %v2975, %v2987
        %v2999 = vadd.f32 %v2976, %v2987
        %v3000 = vadd.f32 %v2977, %v2987
        %v3001 = vadd.f32 %v2978, %v2987
        %v3002 = vadd.f32 %v2979, %v2987
        %v3003 = vadd.f32 %v2980, %v2987
        %v3004 = vadd.f32 %v2981, %v2987
        %v3005 = vmax.f32 %v2989, 0.0
        %v3006 = vmax.f32 %v2990, 0.0
        %v3007 = vmax.f32 %v2991, 0.0
        %v3008 = vmax.f32 %v2992, 0.0
        %v3009 = vmax.f32 %v2993, 0.0
        %v3010 = vmax.f32 %v2994, 0.0
        %v3011 = vmax.f32 %v2995, 0.0
        %v3012 = vmax.f32 %v2996, 0.0
        %v3013 = vmax.f32 %v2997, 0.0
        %v3014 = vmax.f32 %v2998, 0.0
        %v3015 = vmax.f32 %v2999, 0.0
        %v3016 = vmax.f32 %v3000, 0.0
        %v3017 = vmax.f32 %v3001, 0.0
        %v3018 = vmax.f32 %v3002, 0.0
        %v3019 = vmax.f32 %v3003, 0.0
        %v3020 = vmax.f32 %v3004, 0.0
        %v3021 = vld [vmem:[%s5] sm:$0xf]
        %v3022 = vld [vmem:[%s6] sm:$0x1]
        %v3024 = vlaneseq
        %v3025 = vshrl.u32 %v3024, 7
        %v3026 = vsub.s32 0, %v3025
        %v3027 = vrot.slane %v3022, %v3026
        %v3030 = vsel %vm931, %v3005, 0
        %v3033 = vsel %vm931, %v3006, 0
        %v3036 = vsel %vm931, %v3007, 0
        %v3039 = vsel %vm931, %v3008, 0
        %v3042 = vsel %vm931, %v3009, 0
        %v3045 = vsel %vm931, %v3010, 0
        %v3048 = vsel %vm931, %v3011, 0
        %v3051 = vsel %vm931, %v3012, 0
        %v3054 = vsel %vm931, %v3013, 0
        %v3057 = vsel %vm931, %v3014, 0
        %v3060 = vsel %vm931, %v3015, 0
        %v3063 = vsel %vm931, %v3016, 0
        %v3066 = vsel %vm931, %v3017, 0
        %v3069 = vsel %vm931, %v3018, 0
        %v3072 = vsel %vm931, %v3019, 0
        %v3075 = vsel %vm931, %v3020, 0
        %v3078 = vsel %vm964, %v3021, 0
        %3080 = vmatprep.subr.mxu0 0.0
        %3081 = vmatpush1.msra.mxu0 %v3078
        %3082 = vmatprep.subr.mxu0 0.0
        %3083 = vmatpush1.msra.mxu0 0.0
        %3084 = vmatprep.subr.mxu0 0.0
        %3085 = vmatpush1.msra.mxu0 0.0
        %3086 = vmatprep.subr.mxu0 0.0
        %3087 = vmatpush1.msra.mxu0 0.0
        %3088 = vmatprep.subr.mxu0 0.0
        %3089 = vmatpush1.msra.mxu0 0.0
        %3090 = vmatprep.subr.mxu0 0.0
        %3091 = vmatpush1.msra.mxu0 0.0
        %3092 = vmatprep.subr.mxu0 0.0
        %3093 = vmatpush1.msra.mxu0 0.0
        %3094 = vmatprep.subr.mxu0 0.0
        %3095 = vmatpush1.msra.mxu0 0.0
        %3096 = vmatprep.subr.mxu0 0.0
        %3097 = vmatpush1.msra.mxu0 0.0
        %3098 = vmatprep.subr.mxu0 0.0
        %3099 = vmatpush1.msra.mxu0 0.0
        %3100 = vmatprep.subr.mxu0 0.0
        %3101 = vmatpush1.msra.mxu0 0.0
        %3102 = vmatprep.subr.mxu0 0.0
        %3103 = vmatpush1.msra.mxu0 0.0
        %3104 = vmatprep.subr.mxu0 0.0
        %3105 = vmatpush1.msra.mxu0 0.0
        %3106 = vmatprep.subr.mxu0 0.0
        %3107 = vmatpush1.msra.mxu0 0.0
        %3108 = vmatprep.subr.mxu0 0.0
        %3109 = vmatpush1.msra.mxu0 0.0
        %3110 = vmatprep.subr.mxu0 0.0
        %3111 = vmatpush1.msra.mxu0 0.0
        %3112 = vmatprep.subr.mxu0 0.0
        %3113 = vmatpush1.msra.mxu0 0.0
        %3114 = vmatprep.subr.mxu0 0.0
        %3115 = vmatpush1.msra.mxu0 0.0
        %3116 = vmatprep.subr.mxu0 0.0
        %3117 = vmatpush1.msra.mxu0 0.0
        %3118 = vmatprep.subr.mxu0 0.0
        %3119 = vmatpush1.msra.mxu0 0.0
        %3120 = vmatprep.subr.mxu0 0.0
        %3121 = vmatpush1.msra.mxu0 0.0
        %3122 = vmatprep.subr.mxu0 0.0
        %3123 = vmatpush1.msra.mxu0 0.0
        %3124 = vmatprep.subr.mxu0 0.0
        %3125 = vmatpush1.msra.mxu0 0.0
        %3126 = vmatprep.subr.mxu0 0.0
        %3127 = vmatpush1.msra.mxu0 0.0
        %3128 = vmatprep.subr.mxu0 0.0
        %3129 = vmatpush1.msra.mxu0 0.0
        %3130 = vmatprep.subr.mxu0 0.0
        %3131 = vmatpush1.msra.mxu0 0.0
        %3132 = vmatprep.subr.mxu0 0.0
        %3133 = vmatpush1.msra.mxu0 0.0
        %3134 = vmatprep.subr.mxu0 0.0
        %3135 = vmatpush1.msra.mxu0 0.0
        %3136 = vmatprep.subr.mxu0 0.0
        %3137 = vmatpush1.msra.mxu0 0.0
        %3138 = vmatprep.subr.mxu0 0.0
        %3139 = vmatpush1.msra.mxu0 0.0
        %3140 = vmatprep.subr.mxu0 0.0
        %3141 = vmatpush1.msra.mxu0 0.0
        %3142 = vmatprep.subr.mxu0 0.0
        %3143 = vmatpush1.msra.mxu0 0.0
        %3144 = vmatprep.mubr.f32.mxu0 0.0
        %3145 = vmatmul.mubr.f32.gmra.mrb[0].mxu0 %v3030
        %v3146 = vpop.f32.mrb[0].mxu0
        %v3147 = vadd.f32 %v3027, %v3146
        %v3148 = vpop.f32.mrb[0].mxu0
        %3149 = vmatprep.mubr.f32.mxu0 0.0
        %3150 = vmatmul.mubr.f32.gmra.mrb[0].mxu0 %v3033
        %v3151 = vpop.f32.mrb[0].mxu0
        %v3152 = vadd.f32 %v3027, %v3151
        %v3153 = vpop.f32.mrb[0].mxu0
        %3154 = vmatprep.mubr.f32.mxu0 0.0
        %3155 = vmatmul.mubr.f32.gmra.mrb[0].mxu0 %v3036
        %v3156 = vpop.f32.mrb[0].mxu0
        %v3157 = vadd.f32 %v3027, %v3156
        %v3158 = vpop.f32.mrb[0].mxu0
        %3159 = vmatprep.mubr.f32.mxu0 0.0
        %3160 = vmatmul.mubr.f32.gmra.mrb[0].mxu0 %v3039
        %v3161 = vpop.f32.mrb[0].mxu0
        %v3162 = vadd.f32 %v3027, %v3161
        %v3163 = vpop.f32.mrb[0].mxu0
        %3164 = vmatprep.mubr.f32.mxu0 0.0
        %3165 = vmatmul.mubr.f32.gmra.mrb[0].mxu0 %v3042
        %v3166 = vpop.f32.mrb[0].mxu0
        %v3167 = vadd.f32 %v3027, %v3166
        %v3168 = vpop.f32.mrb[0].mxu0
        %3169 = vmatprep.mubr.f32.mxu0 0.0
        %3170 = vmatmul.mubr.f32.gmra.mrb[0].mxu0 %v3045
        %v3171 = vpop.f32.mrb[0].mxu0
        %v3172 = vadd.f32 %v3027, %v3171
        %v3173 = vpop.f32.mrb[0].mxu0
        %3174 = vmatprep.mubr.f32.mxu0 0.0
        %3175 = vmatmul.mubr.f32.gmra.mrb[0].mxu0 %v3048
        %v3176 = vpop.f32.mrb[0].mxu0
        %v3177 = vadd.f32 %v3027, %v3176
        %v3178 = vpop.f32.mrb[0].mxu0
        %3179 = vmatprep.mubr.f32.mxu0 0.0
        %3180 = vmatmul.mubr.f32.gmra.mrb[0].mxu0 %v3051
        %v3181 = vpop.f32.mrb[0].mxu0
        %v3182 = vadd.f32 %v3027, %v3181
        %v3183 = vpop.f32.mrb[0].mxu0
        %3184 = vmatprep.mubr.f32.mxu0 0.0
        %3185 = vmatmul.mubr.f32.gmra.mrb[0].mxu0 %v3054
        %v3186 = vpop.f32.mrb[0].mxu0
        %v3187 = vadd.f32 %v3027, %v3186
        %v3188 = vpop.f32.mrb[0].mxu0
        %3189 = vmatprep.mubr.f32.mxu0 0.0
        %3190 = vmatmul.mubr.f32.gmra.mrb[0].mxu0 %v3057
        %v3191 = vpop.f32.mrb[0].mxu0
        %v3192 = vadd.f32 %v3027, %v3191
        %v3193 = vpop.f32.mrb[0].mxu0
        %3194 = vmatprep.mubr.f32.mxu0 0.0
        %3195 = vmatmul.mubr.f32.gmra.mrb[0].mxu0 %v3060
        %v3196 = vpop.f32.mrb[0].mxu0
        %v3197 = vadd.f32 %v3027, %v3196
        %v3198 = vpop.f32.mrb[0].mxu0
        %3199 = vmatprep.mubr.f32.mxu0 0.0
        %3200 = vmatmul.mubr.f32.gmra.mrb[0].mxu0 %v3063
        %v3201 = vpop.f32.mrb[0].mxu0
        %v3202 = vadd.f32 %v3027, %v3201
        %v3203 = vpop.f32.mrb[0].mxu0
        %3204 = vmatprep.mubr.f32.mxu0 0.0
        %3205 = vmatmul.mubr.f32.gmra.mrb[0].mxu0 %v3066
        %v3206 = vpop.f32.mrb[0].mxu0
        %v3207 = vadd.f32 %v3027, %v3206
        %v3208 = vpop.f32.mrb[0].mxu0
        %3209 = vmatprep.mubr.f32.mxu0 0.0
        %3210 = vmatmul.mubr.f32.gmra.mrb[0].mxu0 %v3069
        %v3211 = vpop.f32.mrb[0].mxu0
        %v3212 = vadd.f32 %v3027, %v3211
        %v3213 = vpop.f32.mrb[0].mxu0
        %3214 = vmatprep.mubr.f32.mxu0 0.0
        %3215 = vmatmul.mubr.f32.gmra.mrb[0].mxu0 %v3072
        %v3216 = vpop.f32.mrb[0].mxu0
        %v3217 = vadd.f32 %v3027, %v3216
        %v3218 = vpop.f32.mrb[0].mxu0
        %3219 = vmatprep.mubr.f32.mxu0 0.0
        %3220 = vmatmul.mubr.f32.gmra.mrb[0].mxu0 %v3075
        %v3221 = vpop.f32.mrb[0].mxu0
        %v3222 = vadd.f32 %v3027, %v3221
        %v3223 = vpop.f32.mrb[0].mxu0
        %3224 = vdwg.mxu0
        %s3225 = smul.u32 %s836, 16
        %s3226 = scalar_lea.vmem %s344, %s3225
        %v3227 = vld [vmem:[%s3226] sm:$0xff]
        %v3228 = vld [vmem:[%s3226 + $0x8] sm:$0xff]
        %v3229 = vld [vmem:[%s3226 + $0x10] sm:$0xff]
        %v3230 = vld [vmem:[%s3226 + $0x18] sm:$0xff]
        %v3231 = vld [vmem:[%s3226 + $0x20] sm:$0xff]
        %v3232 = vld [vmem:[%s3226 + $0x28] sm:$0xff]
        %v3233 = vld [vmem:[%s3226 + $0x30] sm:$0xff]
        %v3234 = vld [vmem:[%s3226 + $0x38] sm:$0xff]
        %v3235 = vld [vmem:[%s3226 + $0x40] sm:$0xff]
        %v3236 = vld [vmem:[%s3226 + $0x48] sm:$0xff]
        %v3237 = vld [vmem:[%s3226 + $0x50] sm:$0xff]
        %v3238 = vld [vmem:[%s3226 + $0x58] sm:$0xff]
        %v3239 = vld [vmem:[%s3226 + $0x60] sm:$0xff]
        %v3240 = vld [vmem:[%s3226 + $0x68] sm:$0xff]
        %v3241 = vld [vmem:[%s3226 + $0x70] sm:$0xff]
        %v3242 = vld [vmem:[%s3226 + $0x78] sm:$0xff]
        %v3243 = vld [vmem:[%s7] sm:$0xf]
        %v3244 = vld [vmem:[%s8] sm:$0x1]
        %v3246 = vlaneseq
        %v3247 = vshrl.u32 %v3246, 7
        %v3248 = vsub.s32 0, %v3247
        %v3249 = vrot.slane %v3244, %v3248
        %v3252 = vsel %vm931, %v3227, 0
        %v3255 = vsel %vm931, %v3228, 0
        %v3258 = vsel %vm931, %v3229, 0
        %v3261 = vsel %vm931, %v3230, 0
        %v3264 = vsel %vm931, %v3231, 0
        %v3267 = vsel %vm931, %v3232, 0
        %v3270 = vsel %vm931, %v3233, 0
        %v3273 = vsel %vm931, %v3234, 0
        %v3276 = vsel %vm931, %v3235, 0
        %v3279 = vsel %vm931, %v3236, 0
        %v3282 = vsel %vm931, %v3237, 0
        %v3285 = vsel %vm931, %v3238, 0
        %v3288 = vsel %vm931, %v3239, 0
        %v3291 = vsel %vm931, %v3240, 0
        %v3294 = vsel %vm931, %v3241, 0
        %v3297 = vsel %vm931, %v3242, 0
        %v3300 = vsel %vm964, %v3243, 0
        %3302 = vmatprep.subr.mxu0 0.0
        %3303 = vmatpush1.msra.mxu0 %v3300
        %3304 = vmatprep.subr.mxu0 0.0
        %3305 = vmatpush1.msra.mxu0 0.0
        %3306 = vmatprep.subr.mxu0 0.0
        %3307 = vmatpush1.msra.mxu0 0.0
        %3308 = vmatprep.subr.mxu0 0.0
        %3309 = vmatpush1.msra.mxu0 0.0
        %3310 = vmatprep.subr.mxu0 0.0
        %3311 = vmatpush1.msra.mxu0 0.0
        %3312 = vmatprep.subr.mxu0 0.0
        %3313 = vmatpush1.msra.mxu0 0.0
        %3314 = vmatprep.subr.mxu0 0.0
        %3315 = vmatpush1.msra.mxu0 0.0
        %3316 = vmatprep.subr.mxu0 0.0
        %3317 = vmatpush1.msra.mxu0 0.0
        %3318 = vmatprep.subr.mxu0 0.0
        %3319 = vmatpush1.msra.mxu0 0.0
        %3320 = vmatprep.subr.mxu0 0.0
        %3321 = vmatpush1.msra.mxu0 0.0
        %3322 = vmatprep.subr.mxu0 0.0
        %3323 = vmatpush1.msra.mxu0 0.0
        %3324 = vmatprep.subr.mxu0 0.0
        %3325 = vmatpush1.msra.mxu0 0.0
        %3326 = vmatprep.subr.mxu0 0.0
        %3327 = vmatpush1.msra.mxu0 0.0
        %3328 = vmatprep.subr.mxu0 0.0
        %3329 = vmatpush1.msra.mxu0 0.0
        %3330 = vmatprep.subr.mxu0 0.0
        %3331 = vmatpush1.msra.mxu0 0.0
        %3332 = vmatprep.subr.mxu0 0.0
        %3333 = vmatpush1.msra.mxu0 0.0
        %3334 = vmatprep.subr.mxu0 0.0
        %3335 = vmatpush1.msra.mxu0 0.0
        %3336 = vmatprep.subr.mxu0 0.0
        %3337 = vmatpush1.msra.mxu0 0.0
        %3338 = vmatprep.subr.mxu0 0.0
        %3339 = vmatpush1.msra.mxu0 0.0
        %3340 = vmatprep.subr.mxu0 0.0
        %3341 = vmatpush1.msra.mxu0 0.0
        %3342 = vmatprep.subr.mxu0 0.0
        %3343 = vmatpush1.msra.mxu0 0.0
        %3344 = vmatprep.subr.mxu0 0.0
        %3345 = vmatpush1.msra.mxu0 0.0
        %3346 = vmatprep.subr.mxu0 0.0
        %3347 = vmatpush1.msra.mxu0 0.0
        %3348 = vmatprep.subr.mxu0 0.0
        %3349 = vmatpush1.msra.mxu0 0.0
        %3350 = vmatprep.subr.mxu0 0.0
        %3351 = vmatpush1.msra.mxu0 0.0
        %3352 = vmatprep.subr.mxu0 0.0
        %3353 = vmatpush1.msra.mxu0 0.0
        %3354 = vmatprep.subr.mxu0 0.0
        %3355 = vmatpush1.msra.mxu0 0.0
        %3356 = vmatprep.subr.mxu0 0.0
        %3357 = vmatpush1.msra.mxu0 0.0
        %3358 = vmatprep.subr.mxu0 0.0
        %3359 = vmatpush1.msra.mxu0 0.0
        %3360 = vmatprep.subr.mxu0 0.0
        %3361 = vmatpush1.msra.mxu0 0.0
        %3362 = vmatprep.subr.mxu0 0.0
        %3363 = vmatpush1.msra.mxu0 0.0
        %3364 = vmatprep.subr.mxu0 0.0
        %3365 = vmatpush1.msra.mxu0 0.0
        %3366 = vmatprep.mubr.f32.mxu0 0.0
        %3367 = vmatmul.mubr.f32.gmra.mrb[0].mxu0 %v3252
        %v3368 = vpop.f32.mrb[0].mxu0
        %v3369 = vadd.f32 %v3249, %v3368
        %v3370 = vpop.f32.mrb[0].mxu0
        %3371 = vmatprep.mubr.f32.mxu0 0.0
        %3372 = vmatmul.mubr.f32.gmra.mrb[0].mxu0 %v3255
        %v3373 = vpop.f32.mrb[0].mxu0
        %v3374 = vadd.f32 %v3249, %v3373
        %v3375 = vpop.f32.mrb[0].mxu0
        %3376 = vmatprep.mubr.f32.mxu0 0.0
        %3377 = vmatmul.mubr.f32.gmra.mrb[0].mxu0 %v3258
        %v3378 = vpop.f32.mrb[0].mxu0
        %v3379 = vadd.f32 %v3249, %v3378
        %v3380 = vpop.f32.mrb[0].mxu0
        %3381 = vmatprep.mubr.f32.mxu0 0.0
        %3382 = vmatmul.mubr.f32.gmra.mrb[0].mxu0 %v3261
        %v3383 = vpop.f32.mrb[0].mxu0
        %v3384 = vadd.f32 %v3249, %v3383
        %v3385 = vpop.f32.mrb[0].mxu0
        %3386 = vmatprep.mubr.f32.mxu0 0.0
        %3387 = vmatmul.mubr.f32.gmra.mrb[0].mxu0 %v3264
        %v3388 = vpop.f32.mrb[0].mxu0
        %v3389 = vadd.f32 %v3249, %v3388
        %v3390 = vpop.f32.mrb[0].mxu0
        %3391 = vmatprep.mubr.f32.mxu0 0.0
        %3392 = vmatmul.mubr.f32.gmra.mrb[0].mxu0 %v3267
        %v3393 = vpop.f32.mrb[0].mxu0
        %v3394 = vadd.f32 %v3249, %v3393
        %v3395 = vpop.f32.mrb[0].mxu0
        %3396 = vmatprep.mubr.f32.mxu0 0.0
        %3397 = vmatmul.mubr.f32.gmra.mrb[0].mxu0 %v3270
        %v3398 = vpop.f32.mrb[0].mxu0
        %v3399 = vadd.f32 %v3249, %v3398
        %v3400 = vpop.f32.mrb[0].mxu0
        %3401 = vmatprep.mubr.f32.mxu0 0.0
        %3402 = vmatmul.mubr.f32.gmra.mrb[0].mxu0 %v3273
        %v3403 = vpop.f32.mrb[0].mxu0
        %v3404 = vadd.f32 %v3249, %v3403
        %v3405 = vpop.f32.mrb[0].mxu0
        %3406 = vmatprep.mubr.f32.mxu0 0.0
        %3407 = vmatmul.mubr.f32.gmra.mrb[0].mxu0 %v3276
        %v3408 = vpop.f32.mrb[0].mxu0
        %v3409 = vadd.f32 %v3249, %v3408
        %v3410 = vpop.f32.mrb[0].mxu0
        %3411 = vmatprep.mubr.f32.mxu0 0.0
        %3412 = vmatmul.mubr.f32.gmra.mrb[0].mxu0 %v3279
        %v3413 = vpop.f32.mrb[0].mxu0
        %v3414 = vadd.f32 %v3249, %v3413
        %v3415 = vpop.f32.mrb[0].mxu0
        %3416 = vmatprep.mubr.f32.mxu0 0.0
        %3417 = vmatmul.mubr.f32.gmra.mrb[0].mxu0 %v3282
        %v3418 = vpop.f32.mrb[0].mxu0
        %v3419 = vadd.f32 %v3249, %v3418
        %v3420 = vpop.f32.mrb[0].mxu0
        %3421 = vmatprep.mubr.f32.mxu0 0.0
        %3422 = vmatmul.mubr.f32.gmra.mrb[0].mxu0 %v3285
        %v3423 = vpop.f32.mrb[0].mxu0
        %v3424 = vadd.f32 %v3249, %v3423
        %v3425 = vpop.f32.mrb[0].mxu0
        %3426 = vmatprep.mubr.f32.mxu0 0.0
        %3427 = vmatmul.mubr.f32.gmra.mrb[0].mxu0 %v3288
        %v3428 = vpop.f32.mrb[0].mxu0
        %v3429 = vadd.f32 %v3249, %v3428
        %v3430 = vpop.f32.mrb[0].mxu0
        %3431 = vmatprep.mubr.f32.mxu0 0.0
        %3432 = vmatmul.mubr.f32.gmra.mrb[0].mxu0 %v3291
        %v3433 = vpop.f32.mrb[0].mxu0
        %v3434 = vadd.f32 %v3249, %v3433
        %v3435 = vpop.f32.mrb[0].mxu0
        %3436 = vmatprep.mubr.f32.mxu0 0.0
        %3437 = vmatmul.mubr.f32.gmra.mrb[0].mxu0 %v3294
        %v3438 = vpop.f32.mrb[0].mxu0
        %v3439 = vadd.f32 %v3249, %v3438
        %v3440 = vpop.f32.mrb[0].mxu0
        %3441 = vmatprep.mubr.f32.mxu0 0.0
        %3442 = vmatmul.mubr.f32.gmra.mrb[0].mxu0 %v3297
        %v3443 = vpop.f32.mrb[0].mxu0
        %v3444 = vadd.f32 %v3249, %v3443
        %v3445 = vpop.f32.mrb[0].mxu0
        %3446 = vdwg.mxu0
        %v3447 = vadd.f32 %v3147, %v3369
        %v3448 = vadd.f32 %v3152, %v3374
        %v3449 = vadd.f32 %v3157, %v3379
        %v3450 = vadd.f32 %v3162, %v3384
        %v3451 = vadd.f32 %v3167, %v3389
        %v3452 = vadd.f32 %v3172, %v3394
        %v3453 = vadd.f32 %v3177, %v3399
        %v3454 = vadd.f32 %v3182, %v3404
        %v3455 = vadd.f32 %v3187, %v3409
        %v3456 = vadd.f32 %v3192, %v3414
        %v3457 = vadd.f32 %v3197, %v3419
        %v3458 = vadd.f32 %v3202, %v3424
        %v3459 = vadd.f32 %v3207, %v3429
        %v3460 = vadd.f32 %v3212, %v3434
        %v3461 = vadd.f32 %v3217, %v3439
        %v3462 = vadd.f32 %v3222, %v3444
        %v3463 = vmax.f32 %v3447, 0.0
        %v3464 = vmax.f32 %v3448, 0.0
        %v3465 = vmax.f32 %v3449, 0.0
        %v3466 = vmax.f32 %v3450, 0.0
        %v3467 = vmax.f32 %v3451, 0.0
        %v3468 = vmax.f32 %v3452, 0.0
        %v3469 = vmax.f32 %v3453, 0.0
        %v3470 = vmax.f32 %v3454, 0.0
        %v3471 = vmax.f32 %v3455, 0.0
        %v3472 = vmax.f32 %v3456, 0.0
        %v3473 = vmax.f32 %v3457, 0.0
        %v3474 = vmax.f32 %v3458, 0.0
        %v3475 = vmax.f32 %v3459, 0.0
        %v3476 = vmax.f32 %v3460, 0.0
        %v3477 = vmax.f32 %v3461, 0.0
        %v3478 = vmax.f32 %v3462, 0.0
        %vm3479 = vcmask 130048
        %3480 = vst.msk [vmem:[%s339] sm:$0xff] %vm3479, %v3463
        %3481 = vst.msk [vmem:[%s339 + $0x8] sm:$0xff] %vm3479, %v3464
        %3482 = vst.msk [vmem:[%s339 + $0x10] sm:$0xff] %vm3479, %v3465
        %3483 = vst.msk [vmem:[%s339 + $0x18] sm:$0xff] %vm3479, %v3466
        %3484 = vst.msk [vmem:[%s339 + $0x20] sm:$0xff] %vm3479, %v3467
        %3485 = vst.msk [vmem:[%s339 + $0x28] sm:$0xff] %vm3479, %v3468
        %3486 = vst.msk [vmem:[%s339 + $0x30] sm:$0xff] %vm3479, %v3469
        %3487 = vst.msk [vmem:[%s339 + $0x38] sm:$0xff] %vm3479, %v3470
        %3488 = vst.msk [vmem:[%s339 + $0x40] sm:$0xff] %vm3479, %v3471
        %3489 = vst.msk [vmem:[%s339 + $0x48] sm:$0xff] %vm3479, %v3472
        %3490 = vst.msk [vmem:[%s339 + $0x50] sm:$0xff] %vm3479, %v3473
        %3491 = vst.msk [vmem:[%s339 + $0x58] sm:$0xff] %vm3479, %v3474
        %3492 = vst.msk [vmem:[%s339 + $0x60] sm:$0xff] %vm3479, %v3475
        %3493 = vst.msk [vmem:[%s339 + $0x68] sm:$0xff] %vm3479, %v3476
        %3494 = vst.msk [vmem:[%s339 + $0x70] sm:$0xff] %vm3479, %v3477
        %3495 = vst.msk [vmem:[%s339 + $0x78] sm:$0xff] %vm3479, %v3478
        %s3496 = sand.u32 %s239, 1
        %s3497 = scalar_lea.sflag [#allocation4], %s3496
        %s3498 = sand.u32 %s239, 1
        %s3499 = smul.addr %s3498, 128
        %s3500 = scalar_lea.vmem [#allocation3], %s3499
        // Predicated region
        $region61: #{tpu_custom_call.1} parent=55 // pred_check
          %p3501 = pneg %p249
        $region62: #{tpu_custom_call.1} parent=55 // pred_check_branch
          %3503 = sbr.rel (%p3501) target = $region64
        $region63: #{tpu_custom_call.1} parent=55 // pred_region
          %s3504 = smul.u32 8, %s28
          %s3506 = ssub.s32 2048, 2048
          %3507 = vsyncadd %s3497, %s3506
          %s3508 = smul.addr %s3504, 2
          %s3509 = smul.addr %s27, 32
          %s3510 = sadd.s32 %s3508, %s3509
          %s3511 = smul.addr %s3510, 128
          %s3512 = scalar_lea.hbm %s9, %s3511
          %s3513 = sshll.u32 %s3500, 4
          %s3514 = int_to_ptr.vmem [resolvable:$true] %s3513
          %3519 = dma.vmem_to_hbm [thread:$0]  %s3514, 2048, %s3512, %s3497, 128, 128, 8
        $region64: #{tpu_custom_call.1} parent=55 // pred_fallthru
          _
      $region56: #{tpu_custom_call.1} parent=5 // pred_fallthru
        _
      %p3520 = scmp.le.s32.totalorder 2, %s18
      // Predicated region
      $region65: #{tpu_custom_call.1} parent=5 // pred_check
        %p3521 = pneg %p3520
      $region66: #{tpu_custom_call.1} parent=5 // pred_check_branch
        %3523 = sbr.rel (%p3521) target = $region68
      $region67: #{tpu_custom_call.1} parent=5 // pred_region
        %s3524 = ssub.s32 %s18, 2
        // Predicated region
        $region69: #{tpu_custom_call.1} parent=67 // pred_check
          %p3525 = pneg %p255
        $region70: #{tpu_custom_call.1} parent=67 // pred_check_branch
          %3527 = sbr.rel (%p3525) target = $region72
        $region71: #{tpu_custom_call.1} parent=67 // pred_region
          %s3528 = sand.u32 %s240, 1
          %s3529 = scalar_lea.sflag [#allocation4], %s3528
          %s3530 = sand.u32 %s240, 1
          %s3531 = smul.addr %s3530, 128
          %s3532 = scalar_lea.vmem [#allocation3], %s3531
          %3533 = dma.done %s3529, 2048
        $region72: #{tpu_custom_call.1} parent=67 // pred_fallthru
          _
      $region68: #{tpu_custom_call.1} parent=5 // pred_fallthru
        _
    $region6: #{tpu_custom_call.1} parent=1 // loop_footer
      %s22 = sadd.s32 1, %s18
    $region7: #{tpu_custom_call.1} parent=1 // loop_footer_branch
      %17 = sbr.rel target = $region3
    $region8: #{tpu_custom_call.1} parent=1 // loop_exit
      _
    %3534 = vsyncpa [#allocation4], 1
    %s3535 = scalar_lea.sflag [#allocation4], 1
    %3536 = vsyncpa %s3535, 1

</llo_original>
